<compile_context>
chip_gen: v6e
topology: v6e:2x2x1
jax: 0.10.0
libtpu: 0.0.40
codegen_flags: <defaults>
</compile_context>

<pallas_src>
import functools

import numpy as np
import jax
import jax.numpy as jnp
from jax import lax
from jax.experimental import pallas as pl
from jax.experimental.pallas import tpu as pltpu

D_MODEL = 32
NUM_HEADS = 4
D_FF = 64
HEAD_DIM = D_MODEL // NUM_HEADS
LN_EPS = 1e-5

# Row-per-parameter layout of the (8, 128) vector slab (every vector starts at
# lane 0; widths <= 128).
_VEC_ROWS = ("b_qkv", "b_o", "b_1", "b_2", "g1", "be1", "g2", "be2")


def _layer_norm(h, gamma, beta):
    mu = jnp.mean(h, axis=-1, keepdims=True)
    c = h - mu
    var = jnp.mean(c * c, axis=-1, keepdims=True)
    return c * lax.rsqrt(var + LN_EPS) * gamma + beta


def encoder_layer_kernel(mask_ref, x_ref, wqkv_ref, wo_ref, w1_ref, w2_ref,
                         vec_ref, o_ref, *, batch, seq):
    d = D_MODEL

    # Layer 0: seed the residual stream.  The output block's index_map is
    # constant across the layer grid axis, so it stays resident in VMEM and
    # carries the activations from layer to layer.
    @pl.when(pl.program_id(0) == 0)
    def _():
        o_ref[...] = x_ref[...]

    x = o_ref[...]                       # (B*S, D) current residual stream
    hm = mask_ref[...]                   # (H, S, D) constant head-routing mask
    w_qkv = wqkv_ref[...]                # (D, 3D)   lane-aligned weights
    w_o = wo_ref[...]                    # (D, D)
    w_1 = w1_ref[...]                    # (D, D_FF)
    w_2 = w2_ref[...]                    # (D_FF, D)
    vec = vec_ref[...]                   # (8, 128)  one parameter vector / row

    b_qkv = vec[0:1, :3 * d]
    b_o = vec[1:2, :d]
    b_1 = vec[2:3, :D_FF]
    b_2 = vec[3:4, :d]
    g1 = vec[4:5, :d]
    be1 = vec[5:6, :d]
    g2 = vec[6:7, :d]
    be2 = vec[7:8, :d]

    # ---- fused Q/K/V projection: one MXU push --------------------------------
    qkv = jnp.dot(x, w_qkv, preferred_element_type=jnp.float32) + b_qkv
    q = qkv[:, 0:d].reshape(batch, seq, d)
    k = qkv[:, d:2 * d].reshape(batch, seq, d)
    v = qkv[:, 2 * d:3 * d].reshape(batch, seq, d)

    # ---- multi-head self-attention, head-batched (no per-head loop) ----------
    # hm[h, s, c] == 1 iff feature column c belongs to head h.  One broadcast
    # multiply builds the (B, H*S, D) masked-query batch (no concat chain, no
    # cross-lane shuffles); a single batched matmul then yields all heads'
    # (S, S) score blocks at once.
    n = NUM_HEADS * seq
    qm = (q[:, None, :, :] * hm).reshape(batch, n, d)
    scale = HEAD_DIM ** -0.5
    scores = jnp.einsum("bnd,bjd->bnj", qm, k,
                        preferred_element_type=jnp.float32) * scale  # (B,H*S,S)
    scores = scores - jnp.max(scores, axis=-1, keepdims=True)
    p = jnp.exp(scores)
    p = p / jnp.sum(p, axis=-1, keepdims=True)   # exact divide: f32 parity
    ctx = jnp.einsum("bnj,bjd->bnd", p, v,
                     preferred_element_type=jnp.float32)             # (B,H*S,D)
    # Keep each row's own head columns, fold the head axis away.
    ctx = jnp.sum(ctx.reshape(batch, NUM_HEADS, seq, d) * hm, axis=1)
    ctx = ctx.reshape(batch * seq, d)

    attn = jnp.dot(ctx, w_o, preferred_element_type=jnp.float32) + b_o

    # ---- residual + norm1 (dropout = identity in eval) ------------------------
    h1 = _layer_norm(x + attn, g1, be1)

    # ---- feed-forward ----------------------------------------------------------
    ff = jnp.maximum(jnp.dot(h1, w_1, preferred_element_type=jnp.float32) + b_1,
                     0.0)
    ff = jnp.dot(ff, w_2, preferred_element_type=jnp.float32) + b_2

    # ---- residual + norm2: write back into the resident residual stream -------
    o_ref[...] = _layer_norm(h1 + ff, g2, be2)


def pack_params(layer_params):
    """Pack a list of per-layer param dicts into stacked, lane-aligned slabs.

    Runs ONCE at param-load time (host-side numpy) -- nothing here is on the
    per-call path.
    """
    def vec_row(*parts):
        flat = np.concatenate([np.asarray(p, np.float32).reshape(-1)
                               for p in parts])
        return np.pad(flat, (0, 128 - flat.shape[0]))

    w_qkv, w_o, w_1, w_2, vec = [], [], [], [], []
    for p in layer_params:
        w_qkv.append(np.concatenate([np.asarray(p["wq"]), np.asarray(p["wk"]),
                                     np.asarray(p["wv"])], axis=1))
        w_o.append(np.asarray(p["wo"]))
        w_1.append(np.asarray(p["w1"]))
        w_2.append(np.asarray(p["w2"]))
        vec.append(np.stack([
            vec_row(p["bq"], p["bk"], p["bv"]),   # b_qkv (96 lanes used)
            vec_row(p["bo"]),
            vec_row(p["b1"]),
            vec_row(p["b2"]),
            vec_row(p["g1"]),
            vec_row(p["be1"]),
            vec_row(p["g2"]),
            vec_row(p["be2"]),
        ]))
    return {
        "w_qkv": jnp.asarray(np.stack(w_qkv), jnp.float32),  # (L, D, 3D)
        "w_o": jnp.asarray(np.stack(w_o), jnp.float32),      # (L, D, D)
        "w_1": jnp.asarray(np.stack(w_1), jnp.float32),      # (L, D, D_FF)
        "w_2": jnp.asarray(np.stack(w_2), jnp.float32),      # (L, D_FF, D)
        "vec": jnp.asarray(np.stack(vec), jnp.float32),      # (L, 8, 128)
    }


@jax.jit
def transformer_encoder_forward(x, packed):
    """x: (B, S, D) float32.  packed: output of pack_params (L stacked layers).

    Applies L encoder layers in ONE pallas_call (grid over layers, residual
    stream resident in the output block).  L=1 == the original module forward.
    """
    B, S, D = x.shape
    assert D == D_MODEL
    L = packed["w_qkv"].shape[0]
    BS = B * S
    n = NUM_HEADS * S

    # Head-routing mask: pure compile-time numpy constant (never recomputed on
    # the VPU).  mask[h, s, c] == 1 iff feature column c belongs to head h.
    col_head = np.arange(D) // HEAD_DIM
    head_mask = jnp.asarray(
        np.broadcast_to((np.arange(NUM_HEADS)[:, None, None] ==
                         col_head[None, None, :]), (NUM_HEADS, S, D))
        .astype(np.float32))

    x2 = x.reshape(BS, D)   # trivial metadata reshape inside the jit

    # Advisory cost hint so XLA schedules this custom call sensibly.
    flops_layer = (2 * BS * D * (3 * D)      # qkv projection
                   + 2 * B * n * S * D       # scores
                   + 2 * B * n * S * D       # p @ v
                   + 2 * BS * D * D          # output projection
                   + 2 * BS * D * D_FF       # ff1
                   + 2 * BS * D_FF * D)      # ff2
    trans_layer = B * n * S + 2 * BS         # exp + 2x rsqrt
    bytes_layer = 4 * (D * 3 * D + D * D + D * D_FF + D_FF * D + 8 * 128)
    cost = pl.CostEstimate(
        flops=L * flops_layer,
        transcendentals=L * trans_layer,
        bytes_accessed=2 * 4 * BS * D + 4 * NUM_HEADS * S * D + L * bytes_layer)

    out = pl.pallas_call(
        functools.partial(encoder_layer_kernel, batch=B, seq=S),
        out_shape=jax.ShapeDtypeStruct((BS, D), jnp.float32),
        grid=(L,),
        in_specs=[
            pl.BlockSpec((NUM_HEADS, S, D), lambda l: (0, 0, 0)),          # mask
            pl.BlockSpec((BS, D), lambda l: (0, 0)),                       # x
            pl.BlockSpec((pl.Squeezed(), D, 3 * D), lambda l: (l, 0, 0)),  # w_qkv
            pl.BlockSpec((pl.Squeezed(), D, D), lambda l: (l, 0, 0)),      # w_o
            pl.BlockSpec((pl.Squeezed(), D, D_FF), lambda l: (l, 0, 0)),   # w_1
            pl.BlockSpec((pl.Squeezed(), D_FF, D), lambda l: (l, 0, 0)),   # w_2
            pl.BlockSpec((pl.Squeezed(), 8, 128), lambda l: (l, 0, 0)),    # vec
        ],
        out_specs=pl.BlockSpec((BS, D), lambda l: (0, 0)),
        compiler_params=pltpu.CompilerParams(
            dimension_semantics=("arbitrary",)),   # carried residual -> serial
        cost_estimate=cost,
    )(head_mask, x2, packed["w_qkv"], packed["w_o"], packed["w_1"],
      packed["w_2"], packed["vec"])
    return out.reshape(B, S, D)


def init_params(key):
    """Deterministic synthetic parameters (PyTorch-Linear weights folded into
    matmul-friendly (in, out) layout)."""
    ks = jax.random.split(key, 12)
    s = 0.05
    return {
        "wq": s * jax.random.normal(ks[0], (D_MODEL, D_MODEL), jnp.float32),
        "bq": s * jax.random.normal(ks[1], (1, D_MODEL), jnp.float32),
        "wk": s * jax.random.normal(ks[2], (D_MODEL, D_MODEL), jnp.float32),
        "bk": s * jax.random.normal(ks[3], (1, D_MODEL), jnp.float32),
        "wv": s * jax.random.normal(ks[4], (D_MODEL, D_MODEL), jnp.float32),
        "bv": s * jax.random.normal(ks[5], (1, D_MODEL), jnp.float32),
        "wo": s * jax.random.normal(ks[6], (D_MODEL, D_MODEL), jnp.float32),
        "bo": s * jax.random.normal(ks[7], (1, D_MODEL), jnp.float32),
        "w1": s * jax.random.normal(ks[8], (D_MODEL, D_FF), jnp.float32),
        "b1": s * jax.random.normal(ks[9], (1, D_FF), jnp.float32),
        "w2": s * jax.random.normal(ks[10], (D_FF, D_MODEL), jnp.float32),
        "b2": s * jax.random.normal(ks[11], (1, D_MODEL), jnp.float32),
        # LayerNorm defaults (gamma=1, beta=0), as in nn.LayerNorm.__init__
        "g1": jnp.ones((1, D_MODEL), jnp.float32),
        "be1": jnp.zeros((1, D_MODEL), jnp.float32),
        "g2": jnp.ones((1, D_MODEL), jnp.float32),
        "be2": jnp.zeros((1, D_MODEL), jnp.float32),
    }


def reference_layer(x, p):
    """Pure-JAX reference mirroring the PyTorch forward (eval mode)."""
    B, S, D = x.shape
    q = x @ p["wq"] + p["bq"]
    k = x @ p["wk"] + p["bk"]
    v = x @ p["wv"] + p["bv"]

    def split_heads(t):  # (B, S, D) -> (B, H, S, hd)
        return t.reshape(B, S, NUM_HEADS, HEAD_DIM).transpose(0, 2, 1, 3)

    qh, kh, vh = split_heads(q), split_heads(k), split_heads(v)
    scores = jnp.einsum("bhqd,bhkd->bhqk", qh, kh) / jnp.sqrt(
        jnp.float32(HEAD_DIM))
    w = jax.nn.softmax(scores, axis=-1)
    attn = jnp.einsum("bhqk,bhkd->bhqd", w, vh)
    attn = attn.transpose(0, 2, 1, 3).reshape(B, S, D)
    attn = attn @ p["wo"] + p["bo"]

    def ln(h, g, b):
        mu = jnp.mean(h, axis=-1, keepdims=True)
        var = jnp.mean((h - mu) ** 2, axis=-1, keepdims=True)
        return (h - mu) * lax.rsqrt(var + LN_EPS) * g + b

    n1 = ln(x + attn, p["g1"], p["be1"])
    ff = jnp.maximum(n1 @ p["w1"] + p["b1"], 0.0) @ p["w2"] + p["b2"]
    return ln(n1 + ff, p["g2"], p["be2"])


def reference_stack(x, layer_params):
    for p in layer_params:
        x = reference_layer(x, p)
    return x


if __name__ == "__main__":
    # Full-precision reference matmuls so the exact-division kernel can be
    # checked at a tight tolerance.
    jax.config.update("jax_default_matmul_precision", "highest")

    key = jax.random.PRNGKey(0)
    k_x, k_p = jax.random.split(key)
    B, S = 2, 8
    x = jax.random.normal(k_x, (B, S, D_MODEL), jnp.float32)

    # --- single layer: matches the PyTorch TransformerEncoderLayer spec -------
    params1 = [init_params(k_p)]
    packed1 = pack_params(params1)               # one-time, outside the jit
    out1 = jax.block_until_ready(transformer_encoder_forward(x, packed1))
    ref1 = reference_stack(x, params1)
    if not jnp.allclose(out1, ref1, atol=1e-4, rtol=1e-4):
        raise AssertionError(
            "single-layer mismatch, max abs err "
            f"{jnp.max(jnp.abs(out1 - ref1))}")

    # --- stacked layers: ONE pallas_call amortizes dispatch over L layers -----
    keys = jax.random.split(k_p, 3)
    paramsL = [init_params(k) for k in keys]
    packedL = pack_params(paramsL)
    outL = jax.block_until_ready(transformer_encoder_forward(x, packedL))
    refL = reference_stack(x, paramsL)
    if not jnp.allclose(outL, refL, atol=1e-4, rtol=1e-4):
        raise AssertionError(
            "stacked-layer mismatch, max abs err "
            f"{jnp.max(jnp.abs(outL - refL))}")

    print("KERNEL_OK")
</pallas_src>

<mosaic_0001>
module attributes {stable_mosaic.version = 11 : i64} {
  func.func @encoder_layer_kernel(%arg0: i32, %arg1: memref<4x8x32xf32, #tpu.memory_space<vmem>>, %arg2: memref<16x32xf32, #tpu.memory_space<vmem>>, %arg3: memref<1x32x96xf32, #tpu.memory_space<vmem>>, %arg4: memref<1x32x32xf32, #tpu.memory_space<vmem>>, %arg5: memref<1x32x64xf32, #tpu.memory_space<vmem>>, %arg6: memref<1x64x32xf32, #tpu.memory_space<vmem>>, %arg7: memref<1x8x128xf32, #tpu.memory_space<vmem>>, %arg8: memref<16x32xf32, #tpu.memory_space<vmem>>) attributes {dimension_semantics = [#tpu.dimension_semantics<arbitrary>], iteration_bounds = array<i64: 1>, scalar_prefetch = 0 : i64, scratch_operands = 0 : i64, tpu.core_type = #tpu.core_type<tc>, window_params = [{pipeline_mode = #tpu.pipeline_mode<synchronous>, transform_indices = @transform_0, window_bounds = array<i64: 4, 8, 32>}, {pipeline_mode = #tpu.pipeline_mode<synchronous>, transform_indices = @transform_1, window_bounds = array<i64: 16, 32>}, {transform_indices = @transform_2, window_bounds = array<i64: 1, 32, 96>}, {transform_indices = @transform_3, window_bounds = array<i64: 1, 32, 32>}, {transform_indices = @transform_4, window_bounds = array<i64: 1, 32, 64>}, {transform_indices = @transform_5, window_bounds = array<i64: 1, 64, 32>}, {transform_indices = @transform_6, window_bounds = array<i64: 1, 8, 128>}, {pipeline_mode = #tpu.pipeline_mode<synchronous>, transform_indices = @transform_7, window_bounds = array<i64: 16, 32>}]} {
    %c0_i32 = arith.constant 0 : i32
    %0 = arith.cmpi eq, %arg0, %c0_i32 : i32
    %1 = arith.extui %0 : i1 to i32
    %c0_i32_0 = arith.constant 0 : i32
    %2 = arith.cmpi ne, %1, %c0_i32_0 : i32
    scf.if %2 {
      %c0_42 = arith.constant 0 : index
      %c0_43 = arith.constant 0 : index
      %111 = vector.load %arg2[%c0_42, %c0_43] : memref<16x32xf32, #tpu.memory_space<vmem>>, vector<16x32xf32>
      %c0_44 = arith.constant 0 : index
      %c0_45 = arith.constant 0 : index
      %112 = vector.load %arg8[%c0_44, %c0_45] : memref<16x32xf32, #tpu.memory_space<vmem>>, vector<16x32xf32>
      tpu.vector_store %arg8[%c0_44, %c0_45], %111 {strides = array<i32>} : memref<16x32xf32, #tpu.memory_space<vmem>>, vector<16x32xf32>,
    } else {
    }
    %c0 = arith.constant 0 : index
    %c0_1 = arith.constant 0 : index
    %3 = vector.load %arg8[%c0, %c0_1] : memref<16x32xf32, #tpu.memory_space<vmem>>, vector<16x32xf32>
    %c0_2 = arith.constant 0 : index
    %c0_3 = arith.constant 0 : index
    %c0_4 = arith.constant 0 : index
    %4 = vector.load %arg1[%c0_2, %c0_3, %c0_4] : memref<4x8x32xf32, #tpu.memory_space<vmem>>, vector<4x8x32xf32>
    %c0_5 = arith.constant 0 : index
    %c0_6 = arith.constant 0 : index
    %c0_7 = arith.constant 0 : index
    %5 = vector.load %arg3[%c0_5, %c0_6, %c0_7] : memref<1x32x96xf32, #tpu.memory_space<vmem>>, vector<1x32x96xf32>
    %6 = vector.shape_cast %5 : vector<1x32x96xf32> to vector<32x96xf32>
    %c0_8 = arith.constant 0 : index
    %c0_9 = arith.constant 0 : index
    %c0_10 = arith.constant 0 : index
    %7 = vector.load %arg4[%c0_8, %c0_9, %c0_10] : memref<1x32x32xf32, #tpu.memory_space<vmem>>, vector<1x32x32xf32>
    %8 = vector.shape_cast %7 : vector<1x32x32xf32> to vector<32x32xf32>
    %c0_11 = arith.constant 0 : index
    %c0_12 = arith.constant 0 : index
    %c0_13 = arith.constant 0 : index
    %9 = vector.load %arg5[%c0_11, %c0_12, %c0_13] : memref<1x32x64xf32, #tpu.memory_space<vmem>>, vector<1x32x64xf32>
    %10 = vector.shape_cast %9 : vector<1x32x64xf32> to vector<32x64xf32>
    %c0_14 = arith.constant 0 : index
    %c0_15 = arith.constant 0 : index
    %c0_16 = arith.constant 0 : index
    %11 = vector.load %arg6[%c0_14, %c0_15, %c0_16] : memref<1x64x32xf32, #tpu.memory_space<vmem>>, vector<1x64x32xf32>
    %12 = vector.shape_cast %11 : vector<1x64x32xf32> to vector<64x32xf32>
    %c0_17 = arith.constant 0 : index
    %c0_18 = arith.constant 0 : index
    %c0_19 = arith.constant 0 : index
    %13 = vector.load %arg7[%c0_17, %c0_18, %c0_19] : memref<1x8x128xf32, #tpu.memory_space<vmem>>, vector<1x8x128xf32>
    %14 = vector.shape_cast %13 : vector<1x8x128xf32> to vector<8x128xf32>
    %15 = vector.extract_strided_slice %14 {offsets = [0, 0], sizes = [1, 96], strides = [1, 1]} : vector<8x128xf32> to vector<1x96xf32>
    %16 = vector.extract_strided_slice %14 {offsets = [1, 0], sizes = [1, 32], strides = [1, 1]} : vector<8x128xf32> to vector<1x32xf32>
    %17 = vector.extract_strided_slice %14 {offsets = [2, 0], sizes = [1, 64], strides = [1, 1]} : vector<8x128xf32> to vector<1x64xf32>
    %18 = vector.extract_strided_slice %14 {offsets = [3, 0], sizes = [1, 32], strides = [1, 1]} : vector<8x128xf32> to vector<1x32xf32>
    %19 = vector.extract_strided_slice %14 {offsets = [4, 0], sizes = [1, 32], strides = [1, 1]} : vector<8x128xf32> to vector<1x32xf32>
    %20 = vector.extract_strided_slice %14 {offsets = [5, 0], sizes = [1, 32], strides = [1, 1]} : vector<8x128xf32> to vector<1x32xf32>
    %21 = vector.extract_strided_slice %14 {offsets = [6, 0], sizes = [1, 32], strides = [1, 1]} : vector<8x128xf32> to vector<1x32xf32>
    %22 = vector.extract_strided_slice %14 {offsets = [7, 0], sizes = [1, 32], strides = [1, 1]} : vector<8x128xf32> to vector<1x32xf32>
    %cst = arith.constant dense<0.000000e+00> : vector<16x96xf32>
    %23 = tpu.matmul %3, %6, %cst {dimension_numbers = #tpu.dot_dimension_numbers<[1], [0], [0], [1], [0, 0, 1, 1], [], []>, precision = #tpu.contract_precision<fp32>} : vector<16x32xf32>, vector<32x96xf32>, vector<16x96xf32> -> vector<16x96xf32>
    %24 = vector.broadcast %15 : vector<1x96xf32> to vector<16x96xf32>
    %25 = arith.addf %23, %24 : vector<16x96xf32>
    %26 = vector.extract_strided_slice %25 {offsets = [0, 0], sizes = [16, 32], strides = [1, 1]} : vector<16x96xf32> to vector<16x32xf32>
    %27 = vector.shape_cast %26 : vector<16x32xf32> to vector<2x8x32xf32>
    %28 = vector.extract_strided_slice %25 {offsets = [0, 32], sizes = [16, 32], strides = [1, 1]} : vector<16x96xf32> to vector<16x32xf32>
    %29 = vector.shape_cast %28 : vector<16x32xf32> to vector<2x8x32xf32>
    %30 = vector.extract_strided_slice %25 {offsets = [0, 64], sizes = [16, 32], strides = [1, 1]} : vector<16x96xf32> to vector<16x32xf32>
    %31 = vector.shape_cast %30 : vector<16x32xf32> to vector<2x8x32xf32>
    %32 = vector.shape_cast %27 : vector<2x8x32xf32> to vector<2x1x8x32xf32>
    %33 = vector.shape_cast %4 : vector<4x8x32xf32> to vector<1x4x8x32xf32>
    %34 = vector.broadcast %32 : vector<2x1x8x32xf32> to vector<2x4x8x32xf32>
    %35 = vector.broadcast %33 : vector<1x4x8x32xf32> to vector<2x4x8x32xf32>
    %36 = arith.mulf %34, %35 : vector<2x4x8x32xf32>
    %37 = vector.shape_cast %36 : vector<2x4x8x32xf32> to vector<2x32x32xf32>
    "tpu.trace_start"() <{level = 10 : i32, message = "bnd,bjd->bnj"}> : () -> ()
    %cst_20 = arith.constant dense<0.000000e+00> : vector<2x32x8xf32>
    %38 = tpu.matmul %37, %29, %cst_20 {dimension_numbers = #tpu.dot_dimension_numbers<[2], [2], [1], [1], [0, 0, 0, 1, 1, 1], [0], [0]>, precision = #tpu.contract_precision<fp32>} : vector<2x32x32xf32>, vector<2x8x32xf32>, vector<2x32x8xf32> -> vector<2x32x8xf32>
    "tpu.trace_stop"() : () -> ()
    %cst_21 = arith.constant 0.353553385 : f32
    %39 = vector.broadcast %cst_21 : f32 to vector<2x32x8xf32>
    %40 = arith.mulf %38, %39 : vector<2x32x8xf32>
    %cst_22 = arith.constant dense<0xFF800000> : vector<2x32xf32>
    %41 = vector.multi_reduction <maximumf>, %40, %cst_22 [2] : vector<2x32x8xf32> to vector<2x32xf32>
    %42 = vector.shape_cast %41 : vector<2x32xf32> to vector<2x32x1xf32>
    %43 = vector.broadcast %42 : vector<2x32x1xf32> to vector<2x32x8xf32>
    %44 = arith.subf %40, %43 : vector<2x32x8xf32>
    %45 = math.exp %44 : vector<2x32x8xf32>
    %cst_23 = arith.constant dense<0.000000e+00> : vector<2x32xf32>
    %46 = vector.multi_reduction <add>, %45, %cst_23 [2] : vector<2x32x8xf32> to vector<2x32xf32>
    %47 = vector.shape_cast %46 : vector<2x32xf32> to vector<2x32x1xf32>
    %48 = vector.broadcast %47 : vector<2x32x1xf32> to vector<2x32x8xf32>
    %49 = arith.divf %45, %48 : vector<2x32x8xf32>
    "tpu.trace_start"() <{level = 10 : i32, message = "bnj,bjd->bnd"}> : () -> ()
    %cst_24 = arith.constant dense<0.000000e+00> : vector<2x32x32xf32>
    %50 = tpu.matmul %49, %31, %cst_24 {dimension_numbers = #tpu.dot_dimension_numbers<[2], [1], [1], [2], [0, 0, 0, 1, 1, 2], [0], [0]>, precision = #tpu.contract_precision<fp32>} : vector<2x32x8xf32>, vector<2x8x32xf32>, vector<2x32x32xf32> -> vector<2x32x32xf32>
    "tpu.trace_stop"() : () -> ()
    %51 = vector.shape_cast %50 : vector<2x32x32xf32> to vector<2x4x8x32xf32>
    %52 = vector.shape_cast %4 : vector<4x8x32xf32> to vector<1x4x8x32xf32>
    %53 = vector.broadcast %52 : vector<1x4x8x32xf32> to vector<2x4x8x32xf32>
    %54 = arith.mulf %51, %53 : vector<2x4x8x32xf32>
    %cst_25 = arith.constant dense<0.000000e+00> : vector<2x8x32xf32>
    %55 = vector.multi_reduction <add>, %54, %cst_25 [1] : vector<2x4x8x32xf32> to vector<2x8x32xf32>
    %56 = vector.shape_cast %55 : vector<2x8x32xf32> to vector<16x32xf32>
    %cst_26 = arith.constant dense<0.000000e+00> : vector<16x32xf32>
    %57 = tpu.matmul %56, %8, %cst_26 {dimension_numbers = #tpu.dot_dimension_numbers<[1], [0], [0], [1], [0, 0, 1, 1], [], []>, precision = #tpu.contract_precision<fp32>} : vector<16x32xf32>, vector<32x32xf32>, vector<16x32xf32> -> vector<16x32xf32>
    %58 = vector.broadcast %16 : vector<1x32xf32> to vector<16x32xf32>
    %59 = arith.addf %57, %58 : vector<16x32xf32>
    %60 = arith.addf %3, %59 : vector<16x32xf32>
    %cst_27 = arith.constant dense<0.000000e+00> : vector<16xf32>
    %61 = vector.multi_reduction <add>, %60, %cst_27 [1] : vector<16x32xf32> to vector<16xf32>
    %62 = vector.shape_cast %61 : vector<16xf32> to vector<16x1xf32>
    %cst_28 = arith.constant 3.200000e+01 : f32
    %63 = vector.broadcast %cst_28 : f32 to vector<16x1xf32>
    %64 = arith.divf %62, %63 : vector<16x1xf32>
    %65 = vector.broadcast %64 : vector<16x1xf32> to vector<16x32xf32>
    %66 = arith.subf %60, %65 : vector<16x32xf32>
    %67 = arith.mulf %66, %66 : vector<16x32xf32>
    %cst_29 = arith.constant dense<0.000000e+00> : vector<16xf32>
    %68 = vector.multi_reduction <add>, %67, %cst_29 [1] : vector<16x32xf32> to vector<16xf32>
    %69 = vector.shape_cast %68 : vector<16xf32> to vector<16x1xf32>
    %cst_30 = arith.constant 3.200000e+01 : f32
    %70 = vector.broadcast %cst_30 : f32 to vector<16x1xf32>
    %71 = arith.divf %69, %70 : vector<16x1xf32>
    %cst_31 = arith.constant 9.99999974E-6 : f32
    %72 = vector.broadcast %cst_31 : f32 to vector<16x1xf32>
    %73 = arith.addf %71, %72 : vector<16x1xf32>
    %74 = math.rsqrt %73 : vector<16x1xf32>
    %75 = vector.broadcast %74 : vector<16x1xf32> to vector<16x32xf32>
    %76 = arith.mulf %66, %75 : vector<16x32xf32>
    %77 = vector.broadcast %19 : vector<1x32xf32> to vector<16x32xf32>
    %78 = arith.mulf %76, %77 : vector<16x32xf32>
    %79 = vector.broadcast %20 : vector<1x32xf32> to vector<16x32xf32>
    %80 = arith.addf %78, %79 : vector<16x32xf32>
    %cst_32 = arith.constant dense<0.000000e+00> : vector<16x64xf32>
    %81 = tpu.matmul %80, %10, %cst_32 {dimension_numbers = #tpu.dot_dimension_numbers<[1], [0], [0], [1], [0, 0, 1, 1], [], []>, precision = #tpu.contract_precision<fp32>} : vector<16x32xf32>, vector<32x64xf32>, vector<16x64xf32> -> vector<16x64xf32>
    %82 = vector.broadcast %17 : vector<1x64xf32> to vector<16x64xf32>
    %83 = arith.addf %81, %82 : vector<16x64xf32>
    %cst_33 = arith.constant 0.000000e+00 : f32
    %84 = vector.broadcast %cst_33 : f32 to vector<16x64xf32>
    %85 = arith.maximumf %83, %84 : vector<16x64xf32>
    %cst_34 = arith.constant dense<0.000000e+00> : vector<16x32xf32>
    %86 = tpu.matmul %85, %12, %cst_34 {dimension_numbers = #tpu.dot_dimension_numbers<[1], [0], [0], [1], [0, 0, 1, 1], [], []>, precision = #tpu.contract_precision<fp32>} : vector<16x64xf32>, vector<64x32xf32>, vector<16x32xf32> -> vector<16x32xf32>
    %87 = vector.broadcast %18 : vector<1x32xf32> to vector<16x32xf32>
    %88 = arith.addf %86, %87 : vector<16x32xf32>
    %89 = arith.addf %80, %88 : vector<16x32xf32>
    %cst_35 = arith.constant dense<0.000000e+00> : vector<16xf32>
    %90 = vector.multi_reduction <add>, %89, %cst_35 [1] : vector<16x32xf32> to vector<16xf32>
    %91 = vector.shape_cast %90 : vector<16xf32> to vector<16x1xf32>
    %cst_36 = arith.constant 3.200000e+01 : f32
    %92 = vector.broadcast %cst_36 : f32 to vector<16x1xf32>
    %93 = arith.divf %91, %92 : vector<16x1xf32>
    %94 = vector.broadcast %93 : vector<16x1xf32> to vector<16x32xf32>
    %95 = arith.subf %89, %94 : vector<16x32xf32>
    %96 = arith.mulf %95, %95 : vector<16x32xf32>
    %cst_37 = arith.constant dense<0.000000e+00> : vector<16xf32>
    %97 = vector.multi_reduction <add>, %96, %cst_37 [1] : vector<16x32xf32> to vector<16xf32>
    %98 = vector.shape_cast %97 : vector<16xf32> to vector<16x1xf32>
    %cst_38 = arith.constant 3.200000e+01 : f32
    %99 = vector.broadcast %cst_38 : f32 to vector<16x1xf32>
    %100 = arith.divf %98, %99 : vector<16x1xf32>
    %cst_39 = arith.constant 9.99999974E-6 : f32
    %101 = vector.broadcast %cst_39 : f32 to vector<16x1xf32>
    %102 = arith.addf %100, %101 : vector<16x1xf32>
    %103 = math.rsqrt %102 : vector<16x1xf32>
    %104 = vector.broadcast %103 : vector<16x1xf32> to vector<16x32xf32>
    %105 = arith.mulf %95, %104 : vector<16x32xf32>
    %106 = vector.broadcast %21 : vector<1x32xf32> to vector<16x32xf32>
    %107 = arith.mulf %105, %106 : vector<16x32xf32>
    %108 = vector.broadcast %22 : vector<1x32xf32> to vector<16x32xf32>
    %109 = arith.addf %107, %108 : vector<16x32xf32>
    %c0_40 = arith.constant 0 : index
    %c0_41 = arith.constant 0 : index
    %110 = vector.load %arg8[%c0_40, %c0_41] : memref<16x32xf32, #tpu.memory_space<vmem>>, vector<16x32xf32>
    tpu.vector_store %arg8[%c0_40, %c0_41], %109 {strides = array<i32>} : memref<16x32xf32, #tpu.memory_space<vmem>>, vector<16x32xf32>,
    return
  }
  func.func @transform_0(%arg0: i32) -> (i32, i32, i32) {
    %c0_i32 = arith.constant 0 : i32
    %c0_i32_0 = arith.constant 0 : i32
    %c0_i32_1 = arith.constant 0 : i32
    %c0_i32_2 = arith.constant 0 : i32
    return %c0_i32, %c0_i32_0, %c0_i32_1 : i32, i32, i32
  }
  func.func @transform_1(%arg0: i32) -> (i32, i32) {
    %c0_i32 = arith.constant 0 : i32
    %c0_i32_0 = arith.constant 0 : i32
    %c0_i32_1 = arith.constant 0 : i32
    return %c0_i32, %c0_i32_0 : i32, i32
  }
  func.func @transform_2(%arg0: i32) -> (i32, i32, i32) {
    %c0_i32 = arith.constant 0 : i32
    %c0_i32_0 = arith.constant 0 : i32
    %c0_i32_1 = arith.constant 0 : i32
    return %arg0, %c0_i32, %c0_i32_0 : i32, i32, i32
  }
  func.func @transform_3(%arg0: i32) -> (i32, i32, i32) {
    %c0_i32 = arith.constant 0 : i32
    %c0_i32_0 = arith.constant 0 : i32
    %c0_i32_1 = arith.constant 0 : i32
    return %arg0, %c0_i32, %c0_i32_0 : i32, i32, i32
  }
  func.func @transform_4(%arg0: i32) -> (i32, i32, i32) {
    %c0_i32 = arith.constant 0 : i32
    %c0_i32_0 = arith.constant 0 : i32
    %c0_i32_1 = arith.constant 0 : i32
    return %arg0, %c0_i32, %c0_i32_0 : i32, i32, i32
  }
  func.func @transform_5(%arg0: i32) -> (i32, i32, i32) {
    %c0_i32 = arith.constant 0 : i32
    %c0_i32_0 = arith.constant 0 : i32
    %c0_i32_1 = arith.constant 0 : i32
    return %arg0, %c0_i32, %c0_i32_0 : i32, i32, i32
  }
  func.func @transform_6(%arg0: i32) -> (i32, i32, i32) {
    %c0_i32 = arith.constant 0 : i32
    %c0_i32_0 = arith.constant 0 : i32
    %c0_i32_1 = arith.constant 0 : i32
    return %arg0, %c0_i32, %c0_i32_0 : i32, i32, i32
  }
  func.func @transform_7(%arg0: i32) -> (i32, i32) {
    %c0_i32 = arith.constant 0 : i32
    %c0_i32_0 = arith.constant 0 : i32
    %c0_i32_1 = arith.constant 0 : i32
    return %c0_i32, %c0_i32_0 : i32, i32
  }
}

</mosaic_0001>

<llo_original>
// kernel: transformer_encoder_forward.1
$region0: #{transformer_encoder_forward.1}
  #allocation0 [shape = 'u32[]', space=smem, size = 0x4, offset = 0x4, fixed_abs, tag = 'smem constant byte address 0x4 - core index']
  #allocation1 [shape = 'u32[144,128]{1,0:T(1,128)}', space=vmem, size = 0x12000, scoped, tag = 'internal scratch']
  %s0 = inlined_call_operand.hbm [shape: f32[4,8,32], index: 0, kind: input, shape index: {}]
  %s1 = inlined_call_operand.hbm [shape: f32[16,32], index: 1, kind: input, shape index: {}]
  %s2 = inlined_call_operand.vmem [shape: f32[1,32,96], index: 2, kind: input, shape index: {}]
  %s3 = inlined_call_operand.vmem [shape: f32[1,32,32], index: 3, kind: input, shape index: {}]
  %s4 = inlined_call_operand.vmem [shape: f32[1,32,64], index: 4, kind: input, shape index: {}]
  %s5 = inlined_call_operand.vmem [shape: f32[1,64,32], index: 5, kind: input, shape index: {}]
  %s6 = inlined_call_operand.hbm [shape: f32[1,8,128], index: 6, kind: input, shape index: {}]
  %s7 = inlined_call_operand.hbm [shape: f32[16,32], index: 7, kind: output, shape index: {}]
  %s8 = sld [smem:[#allocation0]]
  $region54: #{transformer_encoder_forward.1} parent=0
    _
  %s10 = ssub.s32 1, %s8
  %s11 = scalar_select 0, %s10, %s8
  $region1: #{transformer_encoder_forward.1} parent=0
    #allocation2 [shape = 'u8[16384]{0}', space=vmem, size = 0x4000, scoped, tag = 'input window, operand 0, single buffered']
    #allocation3 [shape = 's32[1]{0}', space=sflag, size = 0x4, scoped, tag = 'scoped memory for transformer_encoder_forward.1']
    #allocation4 [shape = 's32[1]{0}', space=sflag, size = 0x4, scoped, tag = 'scoped memory for transformer_encoder_forward.1']
    #allocation5 [shape = 'u8[8192]{0}', space=vmem, size = 0x2000, scoped, tag = 'input window, operand 1, single buffered']
    #allocation6 [shape = 's32[1]{0}', space=sflag, size = 0x4, scoped, tag = 'scoped memory for transformer_encoder_forward.1']
    #allocation7 [shape = 'u8[4096]{0}', space=vmem, size = 0x1000, scoped, tag = 'input window, operand 6, single buffered']
    #allocation8 [shape = 'u8[8192]{0}', space=vmem, size = 0x2000, scoped, tag = 'output window, operand 0, single buffered']
    %12 = vsyncpa [#allocation3], 0
    %13 = vsyncpa [#allocation6], 0
    %14 = vsyncpa [#allocation4], 0
    // Predicated region
    $region2: #{transformer_encoder_forward.1} parent=1 // pred_check
      _
    $region3: #{transformer_encoder_forward.1} parent=1 // pred_check_branch
      %16 = sbr.rel (0) target = $region5
    $region4: #{transformer_encoder_forward.1} parent=1 // pred_region
      %s18 = ssub.s32 512, 512
      %19 = vsyncadd [#allocation3], %s18
      %s20 = sshll.u32 [#allocation2], 4
      %s21 = int_to_ptr.vmem [resolvable:$true] %s20
      %26 = dma.hbm_to_vmem [thread:$0]  %s0, 512, %s21, [#allocation3], 128, 128, 8
    $region5: #{transformer_encoder_forward.1} parent=1 // pred_fallthru
      _
    // Predicated region
    $region6: #{transformer_encoder_forward.1} parent=1 // pred_check
      _
    $region7: #{transformer_encoder_forward.1} parent=1 // pred_check_branch
      %28 = sbr.rel (0) target = $region9
    $region8: #{transformer_encoder_forward.1} parent=1 // pred_region
      %s30 = ssub.s32 256, 256
      %31 = vsyncadd [#allocation6], %s30
      %s32 = sshll.u32 [#allocation5], 4
      %s33 = int_to_ptr.vmem [resolvable:$true] %s32
      %38 = dma.hbm_to_vmem [thread:$0]  %s1, 256, %s33, [#allocation6], 128, 128, 8
    $region9: #{transformer_encoder_forward.1} parent=1 // pred_fallthru
      _
    // Predicated region
    $region10: #{transformer_encoder_forward.1} parent=1 // pred_check
      _
    $region11: #{transformer_encoder_forward.1} parent=1 // pred_check_branch
      %40 = sbr.rel (0) target = $region13
    $region12: #{transformer_encoder_forward.1} parent=1 // pred_region
      _
    $region13: #{transformer_encoder_forward.1} parent=1 // pred_fallthru
      _
    // Predicated region
    $region14: #{transformer_encoder_forward.1} parent=1 // pred_check
      _
    $region15: #{transformer_encoder_forward.1} parent=1 // pred_check_branch
      %42 = sbr.rel (0) target = $region17
    $region16: #{transformer_encoder_forward.1} parent=1 // pred_region
      _
    $region17: #{transformer_encoder_forward.1} parent=1 // pred_fallthru
      _
    // Predicated region
    $region18: #{transformer_encoder_forward.1} parent=1 // pred_check
      _
    $region19: #{transformer_encoder_forward.1} parent=1 // pred_check_branch
      %44 = sbr.rel (0) target = $region21
    $region20: #{transformer_encoder_forward.1} parent=1 // pred_region
      _
    $region21: #{transformer_encoder_forward.1} parent=1 // pred_fallthru
      _
    // Predicated region
    $region22: #{transformer_encoder_forward.1} parent=1 // pred_check
      _
    $region23: #{transformer_encoder_forward.1} parent=1 // pred_check_branch
      %46 = sbr.rel (0) target = $region25
    $region24: #{transformer_encoder_forward.1} parent=1 // pred_region
      _
    $region25: #{transformer_encoder_forward.1} parent=1 // pred_fallthru
      _
    // Predicated region
    $region26: #{transformer_encoder_forward.1} parent=1 // pred_check
      _
    $region27: #{transformer_encoder_forward.1} parent=1 // pred_check_branch
      %48 = sbr.rel (0) target = $region29
    $region28: #{transformer_encoder_forward.1} parent=1 // pred_region
      %s50 = ssub.s32 128, 128
      %51 = vsyncadd [#allocation6], %s50
      %s53 = sshll.u32 [#allocation7], 4
      %s54 = int_to_ptr.vmem [resolvable:$true] %s53
      %56 = dma.hbm_to_vmem [thread:$0]  %s6, 128, %s54, [#allocation6]
    $region29: #{transformer_encoder_forward.1} parent=1 // pred_fallthru
      _
    // Predicated region
    $region30: #{transformer_encoder_forward.1} parent=1 // pred_check
      _
    $region31: #{transformer_encoder_forward.1} parent=1 // pred_check_branch
      %58 = sbr.rel (0) target = $region33
    $region32: #{transformer_encoder_forward.1} parent=1 // pred_region
      %59 = dma.done [#allocation3], 512
    $region33: #{transformer_encoder_forward.1} parent=1 // pred_fallthru
      _
    // Predicated region
    $region34: #{transformer_encoder_forward.1} parent=1 // pred_check
      _
    $region35: #{transformer_encoder_forward.1} parent=1 // pred_check_branch
      %61 = sbr.rel (0) target = $region37
    $region36: #{transformer_encoder_forward.1} parent=1 // pred_region
      %62 = dma.done [#allocation6], 256
    $region37: #{transformer_encoder_forward.1} parent=1 // pred_fallthru
      _
    // Predicated region
    $region38: #{transformer_encoder_forward.1} parent=1 // pred_check
      _
    $region39: #{transformer_encoder_forward.1} parent=1 // pred_check_branch
      %64 = sbr.rel (0) target = $region41
    $region40: #{transformer_encoder_forward.1} parent=1 // pred_region
      %65 = dma.done [#allocation6], 128
    $region41: #{transformer_encoder_forward.1} parent=1 // pred_fallthru
      _
    %p66 = scmp.eq.s32.totalorder 0, 0
    // Predicated region
    $region42: #{transformer_encoder_forward.1} parent=1 // pred_check
      %p67 = pneg %p66
    $region43: #{transformer_encoder_forward.1} parent=1 // pred_check_branch
      %69 = sbr.rel (%p67) target = $region45
    $region44: #{transformer_encoder_forward.1} parent=1 // pred_region
      %v70 = vld [vmem:[#allocation5] sm:$0xff]
      %v71 = vld [vmem:[#allocation5 + $0x8] sm:$0xff]
      %vm72 = vcmask 261120
      %73 = vst.msk [vmem:[#allocation8] sm:$0xff] %vm72, %v70
      %74 = vst.msk [vmem:[#allocation8 + $0x8] sm:$0xff] %vm72, %v71
    $region45: #{transformer_encoder_forward.1} parent=1 // pred_fallthru
      _
    %v75 = vld [vmem:[#allocation8] sm:$0xff]
    %v76 = vld [vmem:[#allocation8 + $0x8] sm:$0xff]
    %v77 = vld [vmem:[#allocation2] sm:$0xff]
    %v78 = vld [vmem:[#allocation2 + $0x8] sm:$0xff]
    %v79 = vld [vmem:[#allocation2 + $0x10] sm:$0xff]
    %v80 = vld [vmem:[#allocation2 + $0x18] sm:$0xff]
    %v81 = vld [vmem:[%s2] sm:$0xff]
    %v82 = vld [vmem:[%s2 + $0x8] sm:$0xff]
    %v83 = vld [vmem:[%s2 + $0x10] sm:$0xff]
    %v84 = vld [vmem:[%s2 + $0x18] sm:$0xff]
    %v85 = vld [vmem:[%s3] sm:$0xff]
    %v86 = vld [vmem:[%s3 + $0x8] sm:$0xff]
    %v87 = vld [vmem:[%s3 + $0x10] sm:$0xff]
    %v88 = vld [vmem:[%s3 + $0x18] sm:$0xff]
    %v89 = vld [vmem:[%s4] sm:$0xff]
    %v90 = vld [vmem:[%s4 + $0x8] sm:$0xff]
    %v91 = vld [vmem:[%s4 + $0x10] sm:$0xff]
    %v92 = vld [vmem:[%s4 + $0x18] sm:$0xff]
    %v93 = vld [vmem:[%s5] sm:$0xff]
    %v94 = vld [vmem:[%s5 + $0x8] sm:$0xff]
    %v95 = vld [vmem:[%s5 + $0x10] sm:$0xff]
    %v96 = vld [vmem:[%s5 + $0x18] sm:$0xff]
    %v97 = vld [vmem:[%s5 + $0x20] sm:$0xff]
    %v98 = vld [vmem:[%s5 + $0x28] sm:$0xff]
    %v99 = vld [vmem:[%s5 + $0x30] sm:$0xff]
    %v100 = vld [vmem:[%s5 + $0x38] sm:$0xff]
    %v101 = vld [vmem:[#allocation7] sm:$0xff]
    %v102 = vlaneseq
    %v103 = vshrl.u32 %v102, 7
    %v104 = vsub.s32 0, %v103
    %v105 = vrot.slane %v101, %v104
    %vm106 = vcmask 261120
    %v108 = vsel %vm106, %v75, 0
    %v111 = vsel %vm106, %v76, 0
    %113 = vmatprep.subr.mxu0 0.0
    %114 = vmatpush1.msra.mxu0 0.0
    %115 = vmatprep.subr.mxu0 0.0
    %116 = vmatpush1.msra.mxu0 0.0
    %117 = vmatprep.subr.mxu0 0.0
    %118 = vmatpush1.msra.mxu0 0.0
    %119 = vmatprep.subr.mxu0 0.0
    %120 = vmatpush1.msra.mxu0 0.0
    %121 = vmatprep.subr.mxu0 0.0
    %122 = vmatpush1.msra.mxu0 0.0
    %123 = vmatprep.subr.mxu0 0.0
    %124 = vmatpush1.msra.mxu0 0.0
    %125 = vmatprep.subr.mxu0 0.0
    %126 = vmatpush1.msra.mxu0 0.0
    %127 = vmatprep.subr.mxu0 0.0
    %128 = vmatpush1.msra.mxu0 0.0
    %129 = vmatprep.subr.mxu0 0.0
    %130 = vmatpush1.msra.mxu0 0.0
    %131 = vmatprep.subr.mxu0 0.0
    %132 = vmatpush1.msra.mxu0 0.0
    %133 = vmatprep.subr.mxu0 0.0
    %134 = vmatpush1.msra.mxu0 0.0
    %135 = vmatprep.subr.mxu0 0.0
    %136 = vmatpush1.msra.mxu0 0.0
    %137 = vmatprep.subr.mxu0 0.0
    %v138 = vand.u32 %v84, 4294901760
    %139 = vmatpush1.msra.mxu0 %v138
    %140 = vmatprep.subr.mxu0 0.0
    %v141 = vand.u32 %v83, 4294901760
    %142 = vmatpush1.msra.mxu0 %v141
    %143 = vmatprep.subr.mxu0 0.0
    %v144 = vand.u32 %v82, 4294901760
    %145 = vmatpush1.msra.mxu0 %v144
    %146 = vmatprep.subr.mxu0 0.0
    %v147 = vand.u32 %v81, 4294901760
    %148 = vmatpush1.msra.mxu0 %v147
    %149 = vmatprep.subr.mxu0 0.0
    %150 = vmatpush2.msra.mxu0 0.0
    %151 = vmatprep.subr.mxu0 0.0
    %152 = vmatpush2.msra.mxu0 0.0
    %153 = vmatprep.subr.mxu0 0.0
    %154 = vmatpush2.msra.mxu0 0.0
    %155 = vmatprep.subr.mxu0 0.0
    %156 = vmatpush2.msra.mxu0 0.0
    %157 = vmatprep.subr.mxu0 0.0
    %158 = vmatpush2.msra.mxu0 0.0
    %159 = vmatprep.subr.mxu0 0.0
    %160 = vmatpush2.msra.mxu0 0.0
    %161 = vmatprep.subr.mxu0 0.0
    %162 = vmatpush2.msra.mxu0 0.0
    %163 = vmatprep.subr.mxu0 0.0
    %164 = vmatpush2.msra.mxu0 0.0
    %165 = vmatprep.subr.mxu0 0.0
    %166 = vmatpush2.msra.mxu0 0.0
    %167 = vmatprep.subr.mxu0 0.0
    %168 = vmatpush2.msra.mxu0 0.0
    %169 = vmatprep.subr.mxu0 0.0
    %170 = vmatpush2.msra.mxu0 0.0
    %171 = vmatprep.subr.mxu0 0.0
    %172 = vmatpush2.msra.mxu0 0.0
    %173 = vmatprep.subr.mxu0 0.0
    %174 = vmatpush2.msra.mxu0 0.0
    %175 = vmatprep.subr.mxu0 0.0
    %176 = vmatpush2.msra.mxu0 0.0
    %177 = vmatprep.subr.mxu0 0.0
    %178 = vmatpush2.msra.mxu0 0.0
    %179 = vmatprep.subr.mxu0 0.0
    %180 = vmatpush2.msra.mxu0 0.0
    %181 = vmatprep.mubr.f32.mxu0 0.0
    %v182 = vand.u32 %v108, 4294901760
    %v183 = vsub.f32 %v108, %v182
    %v184 = vand.u32 %v183, 4294901760
    %v185 = vsub.f32 %v183, %v184
    %v186 = vand.u32 %v185, 4294901760
    %187 = vmatmul.mubr.f32.gmra.mxu0 %v186
    %v188 = vpop.f32.mrf.mxu0
    %v189 = vadd.f32 %v105, %v188
    %v190 = vpop.f32.mrf.mxu0
    %191 = vmatprep.mubr.f32.mxu0 0.0
    %v192 = vand.u32 %v111, 4294901760
    %v193 = vsub.f32 %v111, %v192
    %v194 = vand.u32 %v193, 4294901760
    %v195 = vsub.f32 %v193, %v194
    %v196 = vand.u32 %v195, 4294901760
    %197 = vmatmul.mubr.f32.gmra.mxu0 %v196
    %v198 = vpop.f32.mrf.mxu0
    %v199 = vadd.f32 %v105, %v198
    %v200 = vpop.f32.mrf.mxu0
    %201 = vdwg.mxu0
    %202 = vmatprep.subr.mxu0 0.0
    %203 = vmatpush1.msra.mxu0 0.0
    %204 = vmatprep.subr.mxu0 0.0
    %205 = vmatpush1.msra.mxu0 0.0
    %206 = vmatprep.subr.mxu0 0.0
    %207 = vmatpush1.msra.mxu0 0.0
    %208 = vmatprep.subr.mxu0 0.0
    %209 = vmatpush1.msra.mxu0 0.0
    %210 = vmatprep.subr.mxu0 0.0
    %211 = vmatpush1.msra.mxu0 0.0
    %212 = vmatprep.subr.mxu0 0.0
    %213 = vmatpush1.msra.mxu0 0.0
    %214 = vmatprep.subr.mxu0 0.0
    %215 = vmatpush1.msra.mxu0 0.0
    %216 = vmatprep.subr.mxu0 0.0
    %217 = vmatpush1.msra.mxu0 0.0
    %218 = vmatprep.subr.mxu0 0.0
    %219 = vmatpush1.msra.mxu0 0.0
    %220 = vmatprep.subr.mxu0 0.0
    %221 = vmatpush1.msra.mxu0 0.0
    %222 = vmatprep.subr.mxu0 0.0
    %223 = vmatpush1.msra.mxu0 0.0
    %224 = vmatprep.subr.mxu0 0.0
    %225 = vmatpush1.msra.mxu0 0.0
    %226 = vmatprep.subr.mxu0 0.0
    %v227 = vand.u32 %v84, 4294901760
    %v228 = vsub.f32 %v84, %v227
    %v229 = vand.u32 %v228, 4294901760
    %v230 = vsub.f32 %v228, %v229
    %v231 = vand.u32 %v230, 4294901760
    %232 = vmatpush1.msra.mxu0 %v231
    %233 = vmatprep.subr.mxu0 0.0
    %v234 = vand.u32 %v83, 4294901760
    %v235 = vsub.f32 %v83, %v234
    %v236 = vand.u32 %v235, 4294901760
    %v237 = vsub.f32 %v235, %v236
    %v238 = vand.u32 %v237, 4294901760
    %239 = vmatpush1.msra.mxu0 %v238
    %240 = vmatprep.subr.mxu0 0.0
    %v241 = vand.u32 %v82, 4294901760
    %v242 = vsub.f32 %v82, %v241
    %v243 = vand.u32 %v242, 4294901760
    %v244 = vsub.f32 %v242, %v243
    %v245 = vand.u32 %v244, 4294901760
    %246 = vmatpush1.msra.mxu0 %v245
    %247 = vmatprep.subr.mxu0 0.0
    %v248 = vand.u32 %v81, 4294901760
    %v249 = vsub.f32 %v81, %v248
    %v250 = vand.u32 %v249, 4294901760
    %v251 = vsub.f32 %v249, %v250
    %v252 = vand.u32 %v251, 4294901760
    %253 = vmatpush1.msra.mxu0 %v252
    %254 = vmatprep.subr.mxu0 0.0
    %255 = vmatpush2.msra.mxu0 0.0
    %256 = vmatprep.subr.mxu0 0.0
    %257 = vmatpush2.msra.mxu0 0.0
    %258 = vmatprep.subr.mxu0 0.0
    %259 = vmatpush2.msra.mxu0 0.0
    %260 = vmatprep.subr.mxu0 0.0
    %261 = vmatpush2.msra.mxu0 0.0
    %262 = vmatprep.subr.mxu0 0.0
    %263 = vmatpush2.msra.mxu0 0.0
    %264 = vmatprep.subr.mxu0 0.0
    %265 = vmatpush2.msra.mxu0 0.0
    %266 = vmatprep.subr.mxu0 0.0
    %267 = vmatpush2.msra.mxu0 0.0
    %268 = vmatprep.subr.mxu0 0.0
    %269 = vmatpush2.msra.mxu0 0.0
    %270 = vmatprep.subr.mxu0 0.0
    %271 = vmatpush2.msra.mxu0 0.0
    %272 = vmatprep.subr.mxu0 0.0
    %273 = vmatpush2.msra.mxu0 0.0
    %274 = vmatprep.subr.mxu0 0.0
    %275 = vmatpush2.msra.mxu0 0.0
    %276 = vmatprep.subr.mxu0 0.0
    %277 = vmatpush2.msra.mxu0 0.0
    %278 = vmatprep.subr.mxu0 0.0
    %279 = vmatpush2.msra.mxu0 0.0
    %280 = vmatprep.subr.mxu0 0.0
    %281 = vmatpush2.msra.mxu0 0.0
    %282 = vmatprep.subr.mxu0 0.0
    %283 = vmatpush2.msra.mxu0 0.0
    %284 = vmatprep.subr.mxu0 0.0
    %285 = vmatpush2.msra.mxu0 0.0
    %286 = vmatprep.mubr.f32.mxu0 0.0
    %v287 = vand.u32 %v108, 4294901760
    %288 = vmatmul.mubr.f32.gmra.mxu0 %v287
    %v289 = vpop.f32.mrf.mxu0
    %v290 = vadd.f32 %v189, %v289
    %v291 = vpop.f32.mrf.mxu0
    %292 = vmatprep.mubr.f32.mxu0 0.0
    %v293 = vand.u32 %v111, 4294901760
    %294 = vmatmul.mubr.f32.gmra.mxu0 %v293
    %v295 = vpop.f32.mrf.mxu0
    %v296 = vadd.f32 %v199, %v295
    %v297 = vpop.f32.mrf.mxu0
    %298 = vdwg.mxu0
    %299 = vmatprep.subr.mxu0 0.0
    %300 = vmatpush1.msra.mxu0 0.0
    %301 = vmatprep.subr.mxu0 0.0
    %302 = vmatpush1.msra.mxu0 0.0
    %303 = vmatprep.subr.mxu0 0.0
    %304 = vmatpush1.msra.mxu0 0.0
    %305 = vmatprep.subr.mxu0 0.0
    %306 = vmatpush1.msra.mxu0 0.0
    %307 = vmatprep.subr.mxu0 0.0
    %308 = vmatpush1.msra.mxu0 0.0
    %309 = vmatprep.subr.mxu0 0.0
    %310 = vmatpush1.msra.mxu0 0.0
    %311 = vmatprep.subr.mxu0 0.0
    %312 = vmatpush1.msra.mxu0 0.0
    %313 = vmatprep.subr.mxu0 0.0
    %314 = vmatpush1.msra.mxu0 0.0
    %315 = vmatprep.subr.mxu0 0.0
    %316 = vmatpush1.msra.mxu0 0.0
    %317 = vmatprep.subr.mxu0 0.0
    %318 = vmatpush1.msra.mxu0 0.0
    %319 = vmatprep.subr.mxu0 0.0
    %320 = vmatpush1.msra.mxu0 0.0
    %321 = vmatprep.subr.mxu0 0.0
    %322 = vmatpush1.msra.mxu0 0.0
    %323 = vmatprep.subr.mxu0 0.0
    %v324 = vand.u32 %v84, 4294901760
    %v325 = vsub.f32 %v84, %v324
    %326 = vmatpush1.msra.mxu0 %v325
    %327 = vmatprep.subr.mxu0 0.0
    %v328 = vand.u32 %v83, 4294901760
    %v329 = vsub.f32 %v83, %v328
    %330 = vmatpush1.msra.mxu0 %v329
    %331 = vmatprep.subr.mxu0 0.0
    %v332 = vand.u32 %v82, 4294901760
    %v333 = vsub.f32 %v82, %v332
    %334 = vmatpush1.msra.mxu0 %v333
    %335 = vmatprep.subr.mxu0 0.0
    %v336 = vand.u32 %v81, 4294901760
    %v337 = vsub.f32 %v81, %v336
    %338 = vmatpush1.msra.mxu0 %v337
    %339 = vmatprep.subr.mxu0 0.0
    %340 = vmatpush2.msra.mxu0 0.0
    %341 = vmatprep.subr.mxu0 0.0
    %342 = vmatpush2.msra.mxu0 0.0
    %343 = vmatprep.subr.mxu0 0.0
    %344 = vmatpush2.msra.mxu0 0.0
    %345 = vmatprep.subr.mxu0 0.0
    %346 = vmatpush2.msra.mxu0 0.0
    %347 = vmatprep.subr.mxu0 0.0
    %348 = vmatpush2.msra.mxu0 0.0
    %349 = vmatprep.subr.mxu0 0.0
    %350 = vmatpush2.msra.mxu0 0.0
    %351 = vmatprep.subr.mxu0 0.0
    %352 = vmatpush2.msra.mxu0 0.0
    %353 = vmatprep.subr.mxu0 0.0
    %354 = vmatpush2.msra.mxu0 0.0
    %355 = vmatprep.subr.mxu0 0.0
    %356 = vmatpush2.msra.mxu0 0.0
    %357 = vmatprep.subr.mxu0 0.0
    %358 = vmatpush2.msra.mxu0 0.0
    %359 = vmatprep.subr.mxu0 0.0
    %360 = vmatpush2.msra.mxu0 0.0
    %361 = vmatprep.subr.mxu0 0.0
    %362 = vmatpush2.msra.mxu0 0.0
    %363 = vmatprep.subr.mxu0 0.0
    %364 = vmatpush2.msra.mxu0 0.0
    %365 = vmatprep.subr.mxu0 0.0
    %366 = vmatpush2.msra.mxu0 0.0
    %367 = vmatprep.subr.mxu0 0.0
    %368 = vmatpush2.msra.mxu0 0.0
    %369 = vmatprep.subr.mxu0 0.0
    %370 = vmatpush2.msra.mxu0 0.0
    %371 = vmatprep.mubr.f32.mxu0 0.0
    %v372 = vand.u32 %v108, 4294901760
    %v373 = vsub.f32 %v108, %v372
    %374 = vmatmul.mubr.f32.gmra.mxu0 %v373
    %v375 = vpop.f32.mrf.mxu0
    %v376 = vadd.f32 %v290, %v375
    %v377 = vpop.f32.mrf.mxu0
    %378 = vmatprep.mubr.f32.mxu0 0.0
    %v379 = vand.u32 %v111, 4294901760
    %v380 = vsub.f32 %v111, %v379
    %381 = vmatmul.mubr.f32.gmra.mxu0 %v380
    %v382 = vpop.f32.mrf.mxu0
    %v383 = vadd.f32 %v296, %v382
    %v384 = vpop.f32.mrf.mxu0
    %385 = vdwg.mxu0
    %386 = vmatprep.subr.mxu0 0.0
    %387 = vmatpush1.msra.mxu0 0.0
    %388 = vmatprep.subr.mxu0 0.0
    %389 = vmatpush1.msra.mxu0 0.0
    %390 = vmatprep.subr.mxu0 0.0
    %391 = vmatpush1.msra.mxu0 0.0
    %392 = vmatprep.subr.mxu0 0.0
    %393 = vmatpush1.msra.mxu0 0.0
    %394 = vmatprep.subr.mxu0 0.0
    %395 = vmatpush1.msra.mxu0 0.0
    %396 = vmatprep.subr.mxu0 0.0
    %397 = vmatpush1.msra.mxu0 0.0
    %398 = vmatprep.subr.mxu0 0.0
    %399 = vmatpush1.msra.mxu0 0.0
    %400 = vmatprep.subr.mxu0 0.0
    %401 = vmatpush1.msra.mxu0 0.0
    %402 = vmatprep.subr.mxu0 0.0
    %403 = vmatpush1.msra.mxu0 0.0
    %404 = vmatprep.subr.mxu0 0.0
    %405 = vmatpush1.msra.mxu0 0.0
    %406 = vmatprep.subr.mxu0 0.0
    %407 = vmatpush1.msra.mxu0 0.0
    %408 = vmatprep.subr.mxu0 0.0
    %409 = vmatpush1.msra.mxu0 0.0
    %410 = vmatprep.subr.mxu0 0.0
    %v411 = vand.u32 %v84, 4294901760
    %412 = vmatpush1.msra.mxu0 %v411
    %413 = vmatprep.subr.mxu0 0.0
    %v414 = vand.u32 %v83, 4294901760
    %415 = vmatpush1.msra.mxu0 %v414
    %416 = vmatprep.subr.mxu0 0.0
    %v417 = vand.u32 %v82, 4294901760
    %418 = vmatpush1.msra.mxu0 %v417
    %419 = vmatprep.subr.mxu0 0.0
    %v420 = vand.u32 %v81, 4294901760
    %421 = vmatpush1.msra.mxu0 %v420
    %422 = vmatprep.subr.mxu0 0.0
    %423 = vmatpush2.msra.mxu0 0.0
    %424 = vmatprep.subr.mxu0 0.0
    %425 = vmatpush2.msra.mxu0 0.0
    %426 = vmatprep.subr.mxu0 0.0
    %427 = vmatpush2.msra.mxu0 0.0
    %428 = vmatprep.subr.mxu0 0.0
    %429 = vmatpush2.msra.mxu0 0.0
    %430 = vmatprep.subr.mxu0 0.0
    %431 = vmatpush2.msra.mxu0 0.0
    %432 = vmatprep.subr.mxu0 0.0
    %433 = vmatpush2.msra.mxu0 0.0
    %434 = vmatprep.subr.mxu0 0.0
    %435 = vmatpush2.msra.mxu0 0.0
    %436 = vmatprep.subr.mxu0 0.0
    %437 = vmatpush2.msra.mxu0 0.0
    %438 = vmatprep.subr.mxu0 0.0
    %439 = vmatpush2.msra.mxu0 0.0
    %440 = vmatprep.subr.mxu0 0.0
    %441 = vmatpush2.msra.mxu0 0.0
    %442 = vmatprep.subr.mxu0 0.0
    %443 = vmatpush2.msra.mxu0 0.0
    %444 = vmatprep.subr.mxu0 0.0
    %445 = vmatpush2.msra.mxu0 0.0
    %446 = vmatprep.subr.mxu0 0.0
    %447 = vmatpush2.msra.mxu0 0.0
    %448 = vmatprep.subr.mxu0 0.0
    %449 = vmatpush2.msra.mxu0 0.0
    %450 = vmatprep.subr.mxu0 0.0
    %451 = vmatpush2.msra.mxu0 0.0
    %452 = vmatprep.subr.mxu0 0.0
    %453 = vmatpush2.msra.mxu0 0.0
    %454 = vmatprep.mubr.f32.mxu0 0.0
    %v455 = vand.u32 %v108, 4294901760
    %v456 = vsub.f32 %v108, %v455
    %v457 = vand.u32 %v456, 4294901760
    %458 = vmatmul.mubr.f32.gmra.mxu0 %v457
    %v459 = vpop.f32.mrf.mxu0
    %v460 = vadd.f32 %v376, %v459
    %v461 = vpop.f32.mrf.mxu0
    %462 = vmatprep.mubr.f32.mxu0 0.0
    %v463 = vand.u32 %v111, 4294901760
    %v464 = vsub.f32 %v111, %v463
    %v465 = vand.u32 %v464, 4294901760
    %466 = vmatmul.mubr.f32.gmra.mxu0 %v465
    %v467 = vpop.f32.mrf.mxu0
    %v468 = vadd.f32 %v383, %v467
    %v469 = vpop.f32.mrf.mxu0
    %470 = vdwg.mxu0
    %471 = vmatprep.subr.mxu0 0.0
    %472 = vmatpush1.msra.mxu0 0.0
    %473 = vmatprep.subr.mxu0 0.0
    %474 = vmatpush1.msra.mxu0 0.0
    %475 = vmatprep.subr.mxu0 0.0
    %476 = vmatpush1.msra.mxu0 0.0
    %477 = vmatprep.subr.mxu0 0.0
    %478 = vmatpush1.msra.mxu0 0.0
    %479 = vmatprep.subr.mxu0 0.0
    %480 = vmatpush1.msra.mxu0 0.0
    %481 = vmatprep.subr.mxu0 0.0
    %482 = vmatpush1.msra.mxu0 0.0
    %483 = vmatprep.subr.mxu0 0.0
    %484 = vmatpush1.msra.mxu0 0.0
    %485 = vmatprep.subr.mxu0 0.0
    %486 = vmatpush1.msra.mxu0 0.0
    %487 = vmatprep.subr.mxu0 0.0
    %488 = vmatpush1.msra.mxu0 0.0
    %489 = vmatprep.subr.mxu0 0.0
    %490 = vmatpush1.msra.mxu0 0.0
    %491 = vmatprep.subr.mxu0 0.0
    %492 = vmatpush1.msra.mxu0 0.0
    %493 = vmatprep.subr.mxu0 0.0
    %494 = vmatpush1.msra.mxu0 0.0
    %495 = vmatprep.subr.mxu0 0.0
    %v496 = vand.u32 %v84, 4294901760
    %v497 = vsub.f32 %v84, %v496
    %v498 = vand.u32 %v497, 4294901760
    %499 = vmatpush1.msra.mxu0 %v498
    %500 = vmatprep.subr.mxu0 0.0
    %v501 = vand.u32 %v83, 4294901760
    %v502 = vsub.f32 %v83, %v501
    %v503 = vand.u32 %v502, 4294901760
    %504 = vmatpush1.msra.mxu0 %v503
    %505 = vmatprep.subr.mxu0 0.0
    %v506 = vand.u32 %v82, 4294901760
    %v507 = vsub.f32 %v82, %v506
    %v508 = vand.u32 %v507, 4294901760
    %509 = vmatpush1.msra.mxu0 %v508
    %510 = vmatprep.subr.mxu0 0.0
    %v511 = vand.u32 %v81, 4294901760
    %v512 = vsub.f32 %v81, %v511
    %v513 = vand.u32 %v512, 4294901760
    %514 = vmatpush1.msra.mxu0 %v513
    %515 = vmatprep.subr.mxu0 0.0
    %516 = vmatpush2.msra.mxu0 0.0
    %517 = vmatprep.subr.mxu0 0.0
    %518 = vmatpush2.msra.mxu0 0.0
    %519 = vmatprep.subr.mxu0 0.0
    %520 = vmatpush2.msra.mxu0 0.0
    %521 = vmatprep.subr.mxu0 0.0
    %522 = vmatpush2.msra.mxu0 0.0
    %523 = vmatprep.subr.mxu0 0.0
    %524 = vmatpush2.msra.mxu0 0.0
    %525 = vmatprep.subr.mxu0 0.0
    %526 = vmatpush2.msra.mxu0 0.0
    %527 = vmatprep.subr.mxu0 0.0
    %528 = vmatpush2.msra.mxu0 0.0
    %529 = vmatprep.subr.mxu0 0.0
    %530 = vmatpush2.msra.mxu0 0.0
    %531 = vmatprep.subr.mxu0 0.0
    %532 = vmatpush2.msra.mxu0 0.0
    %533 = vmatprep.subr.mxu0 0.0
    %534 = vmatpush2.msra.mxu0 0.0
    %535 = vmatprep.subr.mxu0 0.0
    %536 = vmatpush2.msra.mxu0 0.0
    %537 = vmatprep.subr.mxu0 0.0
    %538 = vmatpush2.msra.mxu0 0.0
    %539 = vmatprep.subr.mxu0 0.0
    %540 = vmatpush2.msra.mxu0 0.0
    %541 = vmatprep.subr.mxu0 0.0
    %542 = vmatpush2.msra.mxu0 0.0
    %543 = vmatprep.subr.mxu0 0.0
    %544 = vmatpush2.msra.mxu0 0.0
    %545 = vmatprep.subr.mxu0 0.0
    %546 = vmatpush2.msra.mxu0 0.0
    %547 = vmatprep.mubr.f32.mxu0 0.0
    %v548 = vand.u32 %v108, 4294901760
    %549 = vmatmul.mubr.f32.gmra.mxu0 %v548
    %v550 = vpop.f32.mrf.mxu0
    %v551 = vadd.f32 %v460, %v550
    %v552 = vpop.f32.mrf.mxu0
    %553 = vmatprep.mubr.f32.mxu0 0.0
    %v554 = vand.u32 %v111, 4294901760
    %555 = vmatmul.mubr.f32.gmra.mxu0 %v554
    %v556 = vpop.f32.mrf.mxu0
    %v557 = vadd.f32 %v468, %v556
    %v558 = vpop.f32.mrf.mxu0
    %559 = vdwg.mxu0
    %560 = vmatprep.subr.mxu0 0.0
    %561 = vmatpush1.msra.mxu0 0.0
    %562 = vmatprep.subr.mxu0 0.0
    %563 = vmatpush1.msra.mxu0 0.0
    %564 = vmatprep.subr.mxu0 0.0
    %565 = vmatpush1.msra.mxu0 0.0
    %566 = vmatprep.subr.mxu0 0.0
    %567 = vmatpush1.msra.mxu0 0.0
    %568 = vmatprep.subr.mxu0 0.0
    %569 = vmatpush1.msra.mxu0 0.0
    %570 = vmatprep.subr.mxu0 0.0
    %571 = vmatpush1.msra.mxu0 0.0
    %572 = vmatprep.subr.mxu0 0.0
    %573 = vmatpush1.msra.mxu0 0.0
    %574 = vmatprep.subr.mxu0 0.0
    %575 = vmatpush1.msra.mxu0 0.0
    %576 = vmatprep.subr.mxu0 0.0
    %577 = vmatpush1.msra.mxu0 0.0
    %578 = vmatprep.subr.mxu0 0.0
    %579 = vmatpush1.msra.mxu0 0.0
    %580 = vmatprep.subr.mxu0 0.0
    %581 = vmatpush1.msra.mxu0 0.0
    %582 = vmatprep.subr.mxu0 0.0
    %583 = vmatpush1.msra.mxu0 0.0
    %584 = vmatprep.subr.mxu0 0.0
    %v585 = vand.u32 %v84, 4294901760
    %586 = vmatpush1.msra.mxu0 %v585
    %587 = vmatprep.subr.mxu0 0.0
    %v588 = vand.u32 %v83, 4294901760
    %589 = vmatpush1.msra.mxu0 %v588
    %590 = vmatprep.subr.mxu0 0.0
    %v591 = vand.u32 %v82, 4294901760
    %592 = vmatpush1.msra.mxu0 %v591
    %593 = vmatprep.subr.mxu0 0.0
    %v594 = vand.u32 %v81, 4294901760
    %595 = vmatpush1.msra.mxu0 %v594
    %596 = vmatprep.subr.mxu0 0.0
    %597 = vmatpush2.msra.mxu0 0.0
    %598 = vmatprep.subr.mxu0 0.0
    %599 = vmatpush2.msra.mxu0 0.0
    %600 = vmatprep.subr.mxu0 0.0
    %601 = vmatpush2.msra.mxu0 0.0
    %602 = vmatprep.subr.mxu0 0.0
    %603 = vmatpush2.msra.mxu0 0.0
    %604 = vmatprep.subr.mxu0 0.0
    %605 = vmatpush2.msra.mxu0 0.0
    %606 = vmatprep.subr.mxu0 0.0
    %607 = vmatpush2.msra.mxu0 0.0
    %608 = vmatprep.subr.mxu0 0.0
    %609 = vmatpush2.msra.mxu0 0.0
    %610 = vmatprep.subr.mxu0 0.0
    %611 = vmatpush2.msra.mxu0 0.0
    %612 = vmatprep.subr.mxu0 0.0
    %613 = vmatpush2.msra.mxu0 0.0
    %614 = vmatprep.subr.mxu0 0.0
    %615 = vmatpush2.msra.mxu0 0.0
    %616 = vmatprep.subr.mxu0 0.0
    %617 = vmatpush2.msra.mxu0 0.0
    %618 = vmatprep.subr.mxu0 0.0
    %619 = vmatpush2.msra.mxu0 0.0
    %620 = vmatprep.subr.mxu0 0.0
    %621 = vmatpush2.msra.mxu0 0.0
    %622 = vmatprep.subr.mxu0 0.0
    %623 = vmatpush2.msra.mxu0 0.0
    %624 = vmatprep.subr.mxu0 0.0
    %625 = vmatpush2.msra.mxu0 0.0
    %626 = vmatprep.subr.mxu0 0.0
    %627 = vmatpush2.msra.mxu0 0.0
    %628 = vmatprep.mubr.f32.mxu0 0.0
    %v629 = vand.u32 %v108, 4294901760
    %630 = vmatmul.mubr.f32.gmra.mxu0 %v629
    %v631 = vpop.f32.mrf.mxu0
    %v632 = vadd.f32 %v551, %v631
    %v633 = vpop.f32.mrf.mxu0
    %634 = vmatprep.mubr.f32.mxu0 0.0
    %v635 = vand.u32 %v111, 4294901760
    %636 = vmatmul.mubr.f32.gmra.mxu0 %v635
    %v637 = vpop.f32.mrf.mxu0
    %v638 = vadd.f32 %v557, %v637
    %v639 = vpop.f32.mrf.mxu0
    %640 = vdwg.mxu0
    %v641 = vmul.f32 %v632, %v77
    %v642 = vmul.f32 %v632, %v78
    %v643 = vmul.f32 %v632, %v79
    %v644 = vmul.f32 %v632, %v80
    %v645 = vmul.f32 %v638, %v77
    %v646 = vmul.f32 %v638, %v78
    %v647 = vmul.f32 %v638, %v79
    %v648 = vmul.f32 %v638, %v80
    %650 = vrot.lane.b32.xlu0 %v632, 96
    %v651 = vpop.permute.xlu0 %650
    %v653 = vsel %vm106, %v641, 0
    %v656 = vsel %vm106, %v642, 0
    %v659 = vsel %vm106, %v643, 0
    %v662 = vsel %vm106, %v644, 0
    %v664 = vsel %vm106, %v651, 0
    %666 = vmatprep.subr.mxu0 0.0
    %667 = vmatpush1.xpose.msra.mxu0 0.0
    %668 = vmatprep.subr.mxu0 0.0
    %669 = vmatpush1.xpose.msra.mxu0 0.0
    %670 = vmatprep.subr.mxu0 0.0
    %671 = vmatpush1.xpose.msra.mxu0 0.0
    %672 = vmatprep.subr.mxu0 0.0
    %673 = vmatpush1.xpose.msra.mxu0 0.0
    %674 = vmatprep.subr.mxu0 0.0
    %675 = vmatpush1.xpose.msra.mxu0 0.0
    %676 = vmatprep.subr.mxu0 0.0
    %677 = vmatpush1.xpose.msra.mxu0 0.0
    %678 = vmatprep.subr.mxu0 0.0
    %679 = vmatpush1.xpose.msra.mxu0 0.0
    %680 = vmatprep.subr.mxu0 0.0
    %681 = vmatpush1.xpose.msra.mxu0 0.0
    %682 = vmatprep.subr.mxu0 0.0
    %683 = vmatpush1.xpose.msra.mxu0 0.0
    %684 = vmatprep.subr.mxu0 0.0
    %685 = vmatpush1.xpose.msra.mxu0 0.0
    %686 = vmatprep.subr.mxu0 0.0
    %687 = vmatpush1.xpose.msra.mxu0 0.0
    %688 = vmatprep.subr.mxu0 0.0
    %689 = vmatpush1.xpose.msra.mxu0 0.0
    %690 = vmatprep.subr.mxu0 0.0
    %691 = vmatpush1.xpose.msra.mxu0 0.0
    %692 = vmatprep.subr.mxu0 0.0
    %693 = vmatpush1.xpose.msra.mxu0 0.0
    %694 = vmatprep.subr.mxu0 0.0
    %695 = vmatpush1.xpose.msra.mxu0 0.0
    %696 = vmatprep.subr.mxu0 0.0
    %v697 = vand.u32 %v664, 4294901760
    %698 = vmatpush1.xpose.msra.mxu0 %v697
    %699 = vmatprep.subr.mxu0 0.0
    %700 = vmatpush2.xpose.msra.mxu0 0.0
    %701 = vmatprep.subr.mxu0 0.0
    %702 = vmatpush2.xpose.msra.mxu0 0.0
    %703 = vmatprep.subr.mxu0 0.0
    %704 = vmatpush2.xpose.msra.mxu0 0.0
    %705 = vmatprep.subr.mxu0 0.0
    %706 = vmatpush2.xpose.msra.mxu0 0.0
    %707 = vmatprep.subr.mxu0 0.0
    %708 = vmatpush2.xpose.msra.mxu0 0.0
    %709 = vmatprep.subr.mxu0 0.0
    %710 = vmatpush2.xpose.msra.mxu0 0.0
    %711 = vmatprep.subr.mxu0 0.0
    %712 = vmatpush2.xpose.msra.mxu0 0.0
    %713 = vmatprep.subr.mxu0 0.0
    %714 = vmatpush2.xpose.msra.mxu0 0.0
    %715 = vmatprep.subr.mxu0 0.0
    %716 = vmatpush2.xpose.msra.mxu0 0.0
    %717 = vmatprep.subr.mxu0 0.0
    %718 = vmatpush2.xpose.msra.mxu0 0.0
    %719 = vmatprep.subr.mxu0 0.0
    %720 = vmatpush2.xpose.msra.mxu0 0.0
    %721 = vmatprep.subr.mxu0 0.0
    %722 = vmatpush2.xpose.msra.mxu0 0.0
    %723 = vmatprep.subr.mxu0 0.0
    %724 = vmatpush2.xpose.msra.mxu0 0.0
    %725 = vmatprep.subr.mxu0 0.0
    %726 = vmatpush2.xpose.msra.mxu0 0.0
    %727 = vmatprep.subr.mxu0 0.0
    %728 = vmatpush2.xpose.msra.mxu0 0.0
    %729 = vmatprep.subr.mxu0 0.0
    %730 = vmatpush2.xpose.msra.mxu0 0.0
    %731 = vmatprep.mubr.f32.mxu0 0.0
    %v732 = vand.u32 %v653, 4294901760
    %v733 = vsub.f32 %v653, %v732
    %v734 = vand.u32 %v733, 4294901760
    %v735 = vsub.f32 %v733, %v734
    %v736 = vand.u32 %v735, 4294901760
    %737 = vmatmul.mubr.f32.gmra.mxu0 %v736
    %v738 = vpop.f32.mrf.mxu0
    %v739 = vadd.f32 0.0, %v738
    %v740 = vpop.f32.mrf.mxu0
    %741 = vmatprep.mubr.f32.mxu0 0.0
    %v742 = vand.u32 %v656, 4294901760
    %v743 = vsub.f32 %v656, %v742
    %v744 = vand.u32 %v743, 4294901760
    %v745 = vsub.f32 %v743, %v744
    %v746 = vand.u32 %v745, 4294901760
    %747 = vmatmul.mubr.f32.gmra.mxu0 %v746
    %v748 = vpop.f32.mrf.mxu0
    %v749 = vadd.f32 0.0, %v748
    %v750 = vpop.f32.mrf.mxu0
    %751 = vmatprep.mubr.f32.mxu0 0.0
    %v752 = vand.u32 %v659, 4294901760
    %v753 = vsub.f32 %v659, %v752
    %v754 = vand.u32 %v753, 4294901760
    %v755 = vsub.f32 %v753, %v754
    %v756 = vand.u32 %v755, 4294901760
    %757 = vmatmul.mubr.f32.gmra.mxu0 %v756
    %v758 = vpop.f32.mrf.mxu0
    %v759 = vadd.f32 0.0, %v758
    %v760 = vpop.f32.mrf.mxu0
    %761 = vmatprep.mubr.f32.mxu0 0.0
    %v762 = vand.u32 %v662, 4294901760
    %v763 = vsub.f32 %v662, %v762
    %v764 = vand.u32 %v763, 4294901760
    %v765 = vsub.f32 %v763, %v764
    %v766 = vand.u32 %v765, 4294901760
    %767 = vmatmul.mubr.f32.gmra.mxu0 %v766
    %v768 = vpop.f32.mrf.mxu0
    %v769 = vadd.f32 0.0, %v768
    %v770 = vpop.f32.mrf.mxu0
    %771 = vdwg.mxu0
    %772 = vmatprep.subr.mxu0 0.0
    %773 = vmatpush1.xpose.msra.mxu0 0.0
    %774 = vmatprep.subr.mxu0 0.0
    %775 = vmatpush1.xpose.msra.mxu0 0.0
    %776 = vmatprep.subr.mxu0 0.0
    %777 = vmatpush1.xpose.msra.mxu0 0.0
    %778 = vmatprep.subr.mxu0 0.0
    %779 = vmatpush1.xpose.msra.mxu0 0.0
    %780 = vmatprep.subr.mxu0 0.0
    %781 = vmatpush1.xpose.msra.mxu0 0.0
    %782 = vmatprep.subr.mxu0 0.0
    %783 = vmatpush1.xpose.msra.mxu0 0.0
    %784 = vmatprep.subr.mxu0 0.0
    %785 = vmatpush1.xpose.msra.mxu0 0.0
    %786 = vmatprep.subr.mxu0 0.0
    %787 = vmatpush1.xpose.msra.mxu0 0.0
    %788 = vmatprep.subr.mxu0 0.0
    %789 = vmatpush1.xpose.msra.mxu0 0.0
    %790 = vmatprep.subr.mxu0 0.0
    %791 = vmatpush1.xpose.msra.mxu0 0.0
    %792 = vmatprep.subr.mxu0 0.0
    %793 = vmatpush1.xpose.msra.mxu0 0.0
    %794 = vmatprep.subr.mxu0 0.0
    %795 = vmatpush1.xpose.msra.mxu0 0.0
    %796 = vmatprep.subr.mxu0 0.0
    %797 = vmatpush1.xpose.msra.mxu0 0.0
    %798 = vmatprep.subr.mxu0 0.0
    %799 = vmatpush1.xpose.msra.mxu0 0.0
    %800 = vmatprep.subr.mxu0 0.0
    %801 = vmatpush1.xpose.msra.mxu0 0.0
    %802 = vmatprep.subr.mxu0 0.0
    %v803 = vand.u32 %v664, 4294901760
    %v804 = vsub.f32 %v664, %v803
    %v805 = vand.u32 %v804, 4294901760
    %v806 = vsub.f32 %v804, %v805
    %v807 = vand.u32 %v806, 4294901760
    %808 = vmatpush1.xpose.msra.mxu0 %v807
    %809 = vmatprep.subr.mxu0 0.0
    %810 = vmatpush2.xpose.msra.mxu0 0.0
    %811 = vmatprep.subr.mxu0 0.0
    %812 = vmatpush2.xpose.msra.mxu0 0.0
    %813 = vmatprep.subr.mxu0 0.0
    %814 = vmatpush2.xpose.msra.mxu0 0.0
    %815 = vmatprep.subr.mxu0 0.0
    %816 = vmatpush2.xpose.msra.mxu0 0.0
    %817 = vmatprep.subr.mxu0 0.0
    %818 = vmatpush2.xpose.msra.mxu0 0.0
    %819 = vmatprep.subr.mxu0 0.0
    %820 = vmatpush2.xpose.msra.mxu0 0.0
    %821 = vmatprep.subr.mxu0 0.0
    %822 = vmatpush2.xpose.msra.mxu0 0.0
    %823 = vmatprep.subr.mxu0 0.0
    %824 = vmatpush2.xpose.msra.mxu0 0.0
    %825 = vmatprep.subr.mxu0 0.0
    %826 = vmatpush2.xpose.msra.mxu0 0.0
    %827 = vmatprep.subr.mxu0 0.0
    %828 = vmatpush2.xpose.msra.mxu0 0.0
    %829 = vmatprep.subr.mxu0 0.0
    %830 = vmatpush2.xpose.msra.mxu0 0.0
    %831 = vmatprep.subr.mxu0 0.0
    %832 = vmatpush2.xpose.msra.mxu0 0.0
    %833 = vmatprep.subr.mxu0 0.0
    %834 = vmatpush2.xpose.msra.mxu0 0.0
    %835 = vmatprep.subr.mxu0 0.0
    %836 = vmatpush2.xpose.msra.mxu0 0.0
    %837 = vmatprep.subr.mxu0 0.0
    %838 = vmatpush2.xpose.msra.mxu0 0.0
    %839 = vmatprep.subr.mxu0 0.0
    %840 = vmatpush2.xpose.msra.mxu0 0.0
    %841 = vmatprep.mubr.f32.mxu0 0.0
    %v842 = vand.u32 %v653, 4294901760
    %843 = vmatmul.mubr.f32.gmra.mxu0 %v842
    %v844 = vpop.f32.mrf.mxu0
    %v845 = vadd.f32 %v739, %v844
    %v846 = vpop.f32.mrf.mxu0
    %847 = vmatprep.mubr.f32.mxu0 0.0
    %v848 = vand.u32 %v656, 4294901760
    %849 = vmatmul.mubr.f32.gmra.mxu0 %v848
    %v850 = vpop.f32.mrf.mxu0
    %v851 = vadd.f32 %v749, %v850
    %v852 = vpop.f32.mrf.mxu0
    %853 = vmatprep.mubr.f32.mxu0 0.0
    %v854 = vand.u32 %v659, 4294901760
    %855 = vmatmul.mubr.f32.gmra.mxu0 %v854
    %v856 = vpop.f32.mrf.mxu0
    %v857 = vadd.f32 %v759, %v856
    %v858 = vpop.f32.mrf.mxu0
    %859 = vmatprep.mubr.f32.mxu0 0.0
    %v860 = vand.u32 %v662, 4294901760
    %861 = vmatmul.mubr.f32.gmra.mxu0 %v860
    %v862 = vpop.f32.mrf.mxu0
    %v863 = vadd.f32 %v769, %v862
    %v864 = vpop.f32.mrf.mxu0
    %865 = vdwg.mxu0
    %866 = vmatprep.subr.mxu0 0.0
    %867 = vmatpush1.xpose.msra.mxu0 0.0
    %868 = vmatprep.subr.mxu0 0.0
    %869 = vmatpush1.xpose.msra.mxu0 0.0
    %870 = vmatprep.subr.mxu0 0.0
    %871 = vmatpush1.xpose.msra.mxu0 0.0
    %872 = vmatprep.subr.mxu0 0.0
    %873 = vmatpush1.xpose.msra.mxu0 0.0
    %874 = vmatprep.subr.mxu0 0.0
    %875 = vmatpush1.xpose.msra.mxu0 0.0
    %876 = vmatprep.subr.mxu0 0.0
    %877 = vmatpush1.xpose.msra.mxu0 0.0
    %878 = vmatprep.subr.mxu0 0.0
    %879 = vmatpush1.xpose.msra.mxu0 0.0
    %880 = vmatprep.subr.mxu0 0.0
    %881 = vmatpush1.xpose.msra.mxu0 0.0
    %882 = vmatprep.subr.mxu0 0.0
    %883 = vmatpush1.xpose.msra.mxu0 0.0
    %884 = vmatprep.subr.mxu0 0.0
    %885 = vmatpush1.xpose.msra.mxu0 0.0
    %886 = vmatprep.subr.mxu0 0.0
    %887 = vmatpush1.xpose.msra.mxu0 0.0
    %888 = vmatprep.subr.mxu0 0.0
    %889 = vmatpush1.xpose.msra.mxu0 0.0
    %890 = vmatprep.subr.mxu0 0.0
    %891 = vmatpush1.xpose.msra.mxu0 0.0
    %892 = vmatprep.subr.mxu0 0.0
    %893 = vmatpush1.xpose.msra.mxu0 0.0
    %894 = vmatprep.subr.mxu0 0.0
    %895 = vmatpush1.xpose.msra.mxu0 0.0
    %896 = vmatprep.subr.mxu0 0.0
    %v897 = vand.u32 %v664, 4294901760
    %v898 = vsub.f32 %v664, %v897
    %899 = vmatpush1.xpose.msra.mxu0 %v898
    %900 = vmatprep.subr.mxu0 0.0
    %901 = vmatpush2.xpose.msra.mxu0 0.0
    %902 = vmatprep.subr.mxu0 0.0
    %903 = vmatpush2.xpose.msra.mxu0 0.0
    %904 = vmatprep.subr.mxu0 0.0
    %905 = vmatpush2.xpose.msra.mxu0 0.0
    %906 = vmatprep.subr.mxu0 0.0
    %907 = vmatpush2.xpose.msra.mxu0 0.0
    %908 = vmatprep.subr.mxu0 0.0
    %909 = vmatpush2.xpose.msra.mxu0 0.0
    %910 = vmatprep.subr.mxu0 0.0
    %911 = vmatpush2.xpose.msra.mxu0 0.0
    %912 = vmatprep.subr.mxu0 0.0
    %913 = vmatpush2.xpose.msra.mxu0 0.0
    %914 = vmatprep.subr.mxu0 0.0
    %915 = vmatpush2.xpose.msra.mxu0 0.0
    %916 = vmatprep.subr.mxu0 0.0
    %917 = vmatpush2.xpose.msra.mxu0 0.0
    %918 = vmatprep.subr.mxu0 0.0
    %919 = vmatpush2.xpose.msra.mxu0 0.0
    %920 = vmatprep.subr.mxu0 0.0
    %921 = vmatpush2.xpose.msra.mxu0 0.0
    %922 = vmatprep.subr.mxu0 0.0
    %923 = vmatpush2.xpose.msra.mxu0 0.0
    %924 = vmatprep.subr.mxu0 0.0
    %925 = vmatpush2.xpose.msra.mxu0 0.0
    %926 = vmatprep.subr.mxu0 0.0
    %927 = vmatpush2.xpose.msra.mxu0 0.0
    %928 = vmatprep.subr.mxu0 0.0
    %929 = vmatpush2.xpose.msra.mxu0 0.0
    %930 = vmatprep.subr.mxu0 0.0
    %931 = vmatpush2.xpose.msra.mxu0 0.0
    %932 = vmatprep.mubr.f32.mxu0 0.0
    %v933 = vand.u32 %v653, 4294901760
    %v934 = vsub.f32 %v653, %v933
    %935 = vmatmul.mubr.f32.gmra.mxu0 %v934
    %v936 = vpop.f32.mrf.mxu0
    %v937 = vadd.f32 %v845, %v936
    %v938 = vpop.f32.mrf.mxu0
    %939 = vmatprep.mubr.f32.mxu0 0.0
    %v940 = vand.u32 %v656, 4294901760
    %v941 = vsub.f32 %v656, %v940
    %942 = vmatmul.mubr.f32.gmra.mxu0 %v941
    %v943 = vpop.f32.mrf.mxu0
    %v944 = vadd.f32 %v851, %v943
    %v945 = vpop.f32.mrf.mxu0
    %946 = vmatprep.mubr.f32.mxu0 0.0
    %v947 = vand.u32 %v659, 4294901760
    %v948 = vsub.f32 %v659, %v947
    %949 = vmatmul.mubr.f32.gmra.mxu0 %v948
    %v950 = vpop.f32.mrf.mxu0
    %v951 = vadd.f32 %v857, %v950
    %v952 = vpop.f32.mrf.mxu0
    %953 = vmatprep.mubr.f32.mxu0 0.0
    %v954 = vand.u32 %v662, 4294901760
    %v955 = vsub.f32 %v662, %v954
    %956 = vmatmul.mubr.f32.gmra.mxu0 %v955
    %v957 = vpop.f32.mrf.mxu0
    %v958 = vadd.f32 %v863, %v957
    %v959 = vpop.f32.mrf.mxu0
    %960 = vdwg.mxu0
    %961 = vmatprep.subr.mxu0 0.0
    %962 = vmatpush1.xpose.msra.mxu0 0.0
    %963 = vmatprep.subr.mxu0 0.0
    %964 = vmatpush1.xpose.msra.mxu0 0.0
    %965 = vmatprep.subr.mxu0 0.0
    %966 = vmatpush1.xpose.msra.mxu0 0.0
    %967 = vmatprep.subr.mxu0 0.0
    %968 = vmatpush1.xpose.msra.mxu0 0.0
    %969 = vmatprep.subr.mxu0 0.0
    %970 = vmatpush1.xpose.msra.mxu0 0.0
    %971 = vmatprep.subr.mxu0 0.0
    %972 = vmatpush1.xpose.msra.mxu0 0.0
    %973 = vmatprep.subr.mxu0 0.0
    %974 = vmatpush1.xpose.msra.mxu0 0.0
    %975 = vmatprep.subr.mxu0 0.0
    %976 = vmatpush1.xpose.msra.mxu0 0.0
    %977 = vmatprep.subr.mxu0 0.0
    %978 = vmatpush1.xpose.msra.mxu0 0.0
    %979 = vmatprep.subr.mxu0 0.0
    %980 = vmatpush1.xpose.msra.mxu0 0.0
    %981 = vmatprep.subr.mxu0 0.0
    %982 = vmatpush1.xpose.msra.mxu0 0.0
    %983 = vmatprep.subr.mxu0 0.0
    %984 = vmatpush1.xpose.msra.mxu0 0.0
    %985 = vmatprep.subr.mxu0 0.0
    %986 = vmatpush1.xpose.msra.mxu0 0.0
    %987 = vmatprep.subr.mxu0 0.0
    %988 = vmatpush1.xpose.msra.mxu0 0.0
    %989 = vmatprep.subr.mxu0 0.0
    %990 = vmatpush1.xpose.msra.mxu0 0.0
    %991 = vmatprep.subr.mxu0 0.0
    %v992 = vand.u32 %v664, 4294901760
    %993 = vmatpush1.xpose.msra.mxu0 %v992
    %994 = vmatprep.subr.mxu0 0.0
    %995 = vmatpush2.xpose.msra.mxu0 0.0
    %996 = vmatprep.subr.mxu0 0.0
    %997 = vmatpush2.xpose.msra.mxu0 0.0
    %998 = vmatprep.subr.mxu0 0.0
    %999 = vmatpush2.xpose.msra.mxu0 0.0
    %1000 = vmatprep.subr.mxu0 0.0
    %1001 = vmatpush2.xpose.msra.mxu0 0.0
    %1002 = vmatprep.subr.mxu0 0.0
    %1003 = vmatpush2.xpose.msra.mxu0 0.0
    %1004 = vmatprep.subr.mxu0 0.0
    %1005 = vmatpush2.xpose.msra.mxu0 0.0
    %1006 = vmatprep.subr.mxu0 0.0
    %1007 = vmatpush2.xpose.msra.mxu0 0.0
    %1008 = vmatprep.subr.mxu0 0.0
    %1009 = vmatpush2.xpose.msra.mxu0 0.0
    %1010 = vmatprep.subr.mxu0 0.0
    %1011 = vmatpush2.xpose.msra.mxu0 0.0
    %1012 = vmatprep.subr.mxu0 0.0
    %1013 = vmatpush2.xpose.msra.mxu0 0.0
    %1014 = vmatprep.subr.mxu0 0.0
    %1015 = vmatpush2.xpose.msra.mxu0 0.0
    %1016 = vmatprep.subr.mxu0 0.0
    %1017 = vmatpush2.xpose.msra.mxu0 0.0
    %1018 = vmatprep.subr.mxu0 0.0
    %1019 = vmatpush2.xpose.msra.mxu0 0.0
    %1020 = vmatprep.subr.mxu0 0.0
    %1021 = vmatpush2.xpose.msra.mxu0 0.0
    %1022 = vmatprep.subr.mxu0 0.0
    %1023 = vmatpush2.xpose.msra.mxu0 0.0
    %1024 = vmatprep.subr.mxu0 0.0
    %1025 = vmatpush2.xpose.msra.mxu0 0.0
    %1026 = vmatprep.mubr.f32.mxu0 0.0
    %v1027 = vand.u32 %v653, 4294901760
    %v1028 = vsub.f32 %v653, %v1027
    %v1029 = vand.u32 %v1028, 4294901760
    %1030 = vmatmul.mubr.f32.gmra.mxu0 %v1029
    %v1031 = vpop.f32.mrf.mxu0
    %v1032 = vadd.f32 %v937, %v1031
    %v1033 = vpop.f32.mrf.mxu0
    %1034 = vmatprep.mubr.f32.mxu0 0.0
    %v1035 = vand.u32 %v656, 4294901760
    %v1036 = vsub.f32 %v656, %v1035
    %v1037 = vand.u32 %v1036, 4294901760
    %1038 = vmatmul.mubr.f32.gmra.mxu0 %v1037
    %v1039 = vpop.f32.mrf.mxu0
    %v1040 = vadd.f32 %v944, %v1039
    %v1041 = vpop.f32.mrf.mxu0
    %1042 = vmatprep.mubr.f32.mxu0 0.0
    %v1043 = vand.u32 %v659, 4294901760
    %v1044 = vsub.f32 %v659, %v1043
    %v1045 = vand.u32 %v1044, 4294901760
    %1046 = vmatmul.mubr.f32.gmra.mxu0 %v1045
    %v1047 = vpop.f32.mrf.mxu0
    %v1048 = vadd.f32 %v951, %v1047
    %v1049 = vpop.f32.mrf.mxu0
    %1050 = vmatprep.mubr.f32.mxu0 0.0
    %v1051 = vand.u32 %v662, 4294901760
    %v1052 = vsub.f32 %v662, %v1051
    %v1053 = vand.u32 %v1052, 4294901760
    %1054 = vmatmul.mubr.f32.gmra.mxu0 %v1053
    %v1055 = vpop.f32.mrf.mxu0
    %v1056 = vadd.f32 %v958, %v1055
    %v1057 = vpop.f32.mrf.mxu0
    %1058 = vdwg.mxu0
    %1059 = vmatprep.subr.mxu0 0.0
    %1060 = vmatpush1.xpose.msra.mxu0 0.0
    %1061 = vmatprep.subr.mxu0 0.0
    %1062 = vmatpush1.xpose.msra.mxu0 0.0
    %1063 = vmatprep.subr.mxu0 0.0
    %1064 = vmatpush1.xpose.msra.mxu0 0.0
    %1065 = vmatprep.subr.mxu0 0.0
    %1066 = vmatpush1.xpose.msra.mxu0 0.0
    %1067 = vmatprep.subr.mxu0 0.0
    %1068 = vmatpush1.xpose.msra.mxu0 0.0
    %1069 = vmatprep.subr.mxu0 0.0
    %1070 = vmatpush1.xpose.msra.mxu0 0.0
    %1071 = vmatprep.subr.mxu0 0.0
    %1072 = vmatpush1.xpose.msra.mxu0 0.0
    %1073 = vmatprep.subr.mxu0 0.0
    %1074 = vmatpush1.xpose.msra.mxu0 0.0
    %1075 = vmatprep.subr.mxu0 0.0
    %1076 = vmatpush1.xpose.msra.mxu0 0.0
    %1077 = vmatprep.subr.mxu0 0.0
    %1078 = vmatpush1.xpose.msra.mxu0 0.0
    %1079 = vmatprep.subr.mxu0 0.0
    %1080 = vmatpush1.xpose.msra.mxu0 0.0
    %1081 = vmatprep.subr.mxu0 0.0
    %1082 = vmatpush1.xpose.msra.mxu0 0.0
    %1083 = vmatprep.subr.mxu0 0.0
    %1084 = vmatpush1.xpose.msra.mxu0 0.0
    %1085 = vmatprep.subr.mxu0 0.0
    %1086 = vmatpush1.xpose.msra.mxu0 0.0
    %1087 = vmatprep.subr.mxu0 0.0
    %1088 = vmatpush1.xpose.msra.mxu0 0.0
    %1089 = vmatprep.subr.mxu0 0.0
    %v1090 = vand.u32 %v664, 4294901760
    %v1091 = vsub.f32 %v664, %v1090
    %v1092 = vand.u32 %v1091, 4294901760
    %1093 = vmatpush1.xpose.msra.mxu0 %v1092
    %1094 = vmatprep.subr.mxu0 0.0
    %1095 = vmatpush2.xpose.msra.mxu0 0.0
    %1096 = vmatprep.subr.mxu0 0.0
    %1097 = vmatpush2.xpose.msra.mxu0 0.0
    %1098 = vmatprep.subr.mxu0 0.0
    %1099 = vmatpush2.xpose.msra.mxu0 0.0
    %1100 = vmatprep.subr.mxu0 0.0
    %1101 = vmatpush2.xpose.msra.mxu0 0.0
    %1102 = vmatprep.subr.mxu0 0.0
    %1103 = vmatpush2.xpose.msra.mxu0 0.0
    %1104 = vmatprep.subr.mxu0 0.0
    %1105 = vmatpush2.xpose.msra.mxu0 0.0
    %1106 = vmatprep.subr.mxu0 0.0
    %1107 = vmatpush2.xpose.msra.mxu0 0.0
    %1108 = vmatprep.subr.mxu0 0.0
    %1109 = vmatpush2.xpose.msra.mxu0 0.0
    %1110 = vmatprep.subr.mxu0 0.0
    %1111 = vmatpush2.xpose.msra.mxu0 0.0
    %1112 = vmatprep.subr.mxu0 0.0
    %1113 = vmatpush2.xpose.msra.mxu0 0.0
    %1114 = vmatprep.subr.mxu0 0.0
    %1115 = vmatpush2.xpose.msra.mxu0 0.0
    %1116 = vmatprep.subr.mxu0 0.0
    %1117 = vmatpush2.xpose.msra.mxu0 0.0
    %1118 = vmatprep.subr.mxu0 0.0
    %1119 = vmatpush2.xpose.msra.mxu0 0.0
    %1120 = vmatprep.subr.mxu0 0.0
    %1121 = vmatpush2.xpose.msra.mxu0 0.0
    %1122 = vmatprep.subr.mxu0 0.0
    %1123 = vmatpush2.xpose.msra.mxu0 0.0
    %1124 = vmatprep.subr.mxu0 0.0
    %1125 = vmatpush2.xpose.msra.mxu0 0.0
    %1126 = vmatprep.mubr.f32.mxu0 0.0
    %v1127 = vand.u32 %v653, 4294901760
    %1128 = vmatmul.mubr.f32.gmra.mxu0 %v1127
    %v1129 = vpop.f32.mrf.mxu0
    %v1130 = vadd.f32 %v1032, %v1129
    %v1131 = vpop.f32.mrf.mxu0
    %1132 = vmatprep.mubr.f32.mxu0 0.0
    %v1133 = vand.u32 %v656, 4294901760
    %1134 = vmatmul.mubr.f32.gmra.mxu0 %v1133
    %v1135 = vpop.f32.mrf.mxu0
    %v1136 = vadd.f32 %v1040, %v1135
    %v1137 = vpop.f32.mrf.mxu0
    %1138 = vmatprep.mubr.f32.mxu0 0.0
    %v1139 = vand.u32 %v659, 4294901760
    %1140 = vmatmul.mubr.f32.gmra.mxu0 %v1139
    %v1141 = vpop.f32.mrf.mxu0
    %v1142 = vadd.f32 %v1048, %v1141
    %v1143 = vpop.f32.mrf.mxu0
    %1144 = vmatprep.mubr.f32.mxu0 0.0
    %v1145 = vand.u32 %v662, 4294901760
    %1146 = vmatmul.mubr.f32.gmra.mxu0 %v1145
    %v1147 = vpop.f32.mrf.mxu0
    %v1148 = vadd.f32 %v1056, %v1147
    %v1149 = vpop.f32.mrf.mxu0
    %1150 = vdwg.mxu0
    %1151 = vmatprep.subr.mxu0 0.0
    %1152 = vmatpush1.xpose.msra.mxu0 0.0
    %1153 = vmatprep.subr.mxu0 0.0
    %1154 = vmatpush1.xpose.msra.mxu0 0.0
    %1155 = vmatprep.subr.mxu0 0.0
    %1156 = vmatpush1.xpose.msra.mxu0 0.0
    %1157 = vmatprep.subr.mxu0 0.0
    %1158 = vmatpush1.xpose.msra.mxu0 0.0
    %1159 = vmatprep.subr.mxu0 0.0
    %1160 = vmatpush1.xpose.msra.mxu0 0.0
    %1161 = vmatprep.subr.mxu0 0.0
    %1162 = vmatpush1.xpose.msra.mxu0 0.0
    %1163 = vmatprep.subr.mxu0 0.0
    %1164 = vmatpush1.xpose.msra.mxu0 0.0
    %1165 = vmatprep.subr.mxu0 0.0
    %1166 = vmatpush1.xpose.msra.mxu0 0.0
    %1167 = vmatprep.subr.mxu0 0.0
    %1168 = vmatpush1.xpose.msra.mxu0 0.0
    %1169 = vmatprep.subr.mxu0 0.0
    %1170 = vmatpush1.xpose.msra.mxu0 0.0
    %1171 = vmatprep.subr.mxu0 0.0
    %1172 = vmatpush1.xpose.msra.mxu0 0.0
    %1173 = vmatprep.subr.mxu0 0.0
    %1174 = vmatpush1.xpose.msra.mxu0 0.0
    %1175 = vmatprep.subr.mxu0 0.0
    %1176 = vmatpush1.xpose.msra.mxu0 0.0
    %1177 = vmatprep.subr.mxu0 0.0
    %1178 = vmatpush1.xpose.msra.mxu0 0.0
    %1179 = vmatprep.subr.mxu0 0.0
    %1180 = vmatpush1.xpose.msra.mxu0 0.0
    %1181 = vmatprep.subr.mxu0 0.0
    %v1182 = vand.u32 %v664, 4294901760
    %1183 = vmatpush1.xpose.msra.mxu0 %v1182
    %1184 = vmatprep.subr.mxu0 0.0
    %1185 = vmatpush2.xpose.msra.mxu0 0.0
    %1186 = vmatprep.subr.mxu0 0.0
    %1187 = vmatpush2.xpose.msra.mxu0 0.0
    %1188 = vmatprep.subr.mxu0 0.0
    %1189 = vmatpush2.xpose.msra.mxu0 0.0
    %1190 = vmatprep.subr.mxu0 0.0
    %1191 = vmatpush2.xpose.msra.mxu0 0.0
    %1192 = vmatprep.subr.mxu0 0.0
    %1193 = vmatpush2.xpose.msra.mxu0 0.0
    %1194 = vmatprep.subr.mxu0 0.0
    %1195 = vmatpush2.xpose.msra.mxu0 0.0
    %1196 = vmatprep.subr.mxu0 0.0
    %1197 = vmatpush2.xpose.msra.mxu0 0.0
    %1198 = vmatprep.subr.mxu0 0.0
    %1199 = vmatpush2.xpose.msra.mxu0 0.0
    %1200 = vmatprep.subr.mxu0 0.0
    %1201 = vmatpush2.xpose.msra.mxu0 0.0
    %1202 = vmatprep.subr.mxu0 0.0
    %1203 = vmatpush2.xpose.msra.mxu0 0.0
    %1204 = vmatprep.subr.mxu0 0.0
    %1205 = vmatpush2.xpose.msra.mxu0 0.0
    %1206 = vmatprep.subr.mxu0 0.0
    %1207 = vmatpush2.xpose.msra.mxu0 0.0
    %1208 = vmatprep.subr.mxu0 0.0
    %1209 = vmatpush2.xpose.msra.mxu0 0.0
    %1210 = vmatprep.subr.mxu0 0.0
    %1211 = vmatpush2.xpose.msra.mxu0 0.0
    %1212 = vmatprep.subr.mxu0 0.0
    %1213 = vmatpush2.xpose.msra.mxu0 0.0
    %1214 = vmatprep.subr.mxu0 0.0
    %1215 = vmatpush2.xpose.msra.mxu0 0.0
    %1216 = vmatprep.mubr.f32.mxu0 0.0
    %v1217 = vand.u32 %v653, 4294901760
    %1218 = vmatmul.mubr.f32.gmra.mxu0 %v1217
    %v1219 = vpop.f32.mrf.mxu0
    %v1220 = vadd.f32 %v1130, %v1219
    %v1221 = vpop.f32.mrf.mxu0
    %1222 = vmatprep.mubr.f32.mxu0 0.0
    %v1223 = vand.u32 %v656, 4294901760
    %1224 = vmatmul.mubr.f32.gmra.mxu0 %v1223
    %v1225 = vpop.f32.mrf.mxu0
    %v1226 = vadd.f32 %v1136, %v1225
    %v1227 = vpop.f32.mrf.mxu0
    %1228 = vmatprep.mubr.f32.mxu0 0.0
    %v1229 = vand.u32 %v659, 4294901760
    %1230 = vmatmul.mubr.f32.gmra.mxu0 %v1229
    %v1231 = vpop.f32.mrf.mxu0
    %v1232 = vadd.f32 %v1142, %v1231
    %v1233 = vpop.f32.mrf.mxu0
    %1234 = vmatprep.mubr.f32.mxu0 0.0
    %v1235 = vand.u32 %v662, 4294901760
    %1236 = vmatmul.mubr.f32.gmra.mxu0 %v1235
    %v1237 = vpop.f32.mrf.mxu0
    %v1238 = vadd.f32 %v1148, %v1237
    %v1239 = vpop.f32.mrf.mxu0
    %1240 = vdwg.mxu0
    %1242 = vrot.lane.b32.xlu0 %v638, 96
    %v1243 = vpop.permute.xlu0 %1242
    %v1245 = vsel %vm106, %v645, 0
    %v1248 = vsel %vm106, %v646, 0
    %v1251 = vsel %vm106, %v647, 0
    %v1254 = vsel %vm106, %v648, 0
    %v1256 = vsel %vm106, %v1243, 0
    %1258 = vmatprep.subr.mxu0 0.0
    %1259 = vmatpush1.xpose.msra.mxu0 0.0
    %1260 = vmatprep.subr.mxu0 0.0
    %1261 = vmatpush1.xpose.msra.mxu0 0.0
    %1262 = vmatprep.subr.mxu0 0.0
    %1263 = vmatpush1.xpose.msra.mxu0 0.0
    %1264 = vmatprep.subr.mxu0 0.0
    %1265 = vmatpush1.xpose.msra.mxu0 0.0
    %1266 = vmatprep.subr.mxu0 0.0
    %1267 = vmatpush1.xpose.msra.mxu0 0.0
    %1268 = vmatprep.subr.mxu0 0.0
    %1269 = vmatpush1.xpose.msra.mxu0 0.0
    %1270 = vmatprep.subr.mxu0 0.0
    %1271 = vmatpush1.xpose.msra.mxu0 0.0
    %1272 = vmatprep.subr.mxu0 0.0
    %1273 = vmatpush1.xpose.msra.mxu0 0.0
    %1274 = vmatprep.subr.mxu0 0.0
    %1275 = vmatpush1.xpose.msra.mxu0 0.0
    %1276 = vmatprep.subr.mxu0 0.0
    %1277 = vmatpush1.xpose.msra.mxu0 0.0
    %1278 = vmatprep.subr.mxu0 0.0
    %1279 = vmatpush1.xpose.msra.mxu0 0.0
    %1280 = vmatprep.subr.mxu0 0.0
    %1281 = vmatpush1.xpose.msra.mxu0 0.0
    %1282 = vmatprep.subr.mxu0 0.0
    %1283 = vmatpush1.xpose.msra.mxu0 0.0
    %1284 = vmatprep.subr.mxu0 0.0
    %1285 = vmatpush1.xpose.msra.mxu0 0.0
    %1286 = vmatprep.subr.mxu0 0.0
    %1287 = vmatpush1.xpose.msra.mxu0 0.0
    %1288 = vmatprep.subr.mxu0 0.0
    %v1289 = vand.u32 %v1256, 4294901760
    %1290 = vmatpush1.xpose.msra.mxu0 %v1289
    %1291 = vmatprep.subr.mxu0 0.0
    %1292 = vmatpush2.xpose.msra.mxu0 0.0
    %1293 = vmatprep.subr.mxu0 0.0
    %1294 = vmatpush2.xpose.msra.mxu0 0.0
    %1295 = vmatprep.subr.mxu0 0.0
    %1296 = vmatpush2.xpose.msra.mxu0 0.0
    %1297 = vmatprep.subr.mxu0 0.0
    %1298 = vmatpush2.xpose.msra.mxu0 0.0
    %1299 = vmatprep.subr.mxu0 0.0
    %1300 = vmatpush2.xpose.msra.mxu0 0.0
    %1301 = vmatprep.subr.mxu0 0.0
    %1302 = vmatpush2.xpose.msra.mxu0 0.0
    %1303 = vmatprep.subr.mxu0 0.0
    %1304 = vmatpush2.xpose.msra.mxu0 0.0
    %1305 = vmatprep.subr.mxu0 0.0
    %1306 = vmatpush2.xpose.msra.mxu0 0.0
    %1307 = vmatprep.subr.mxu0 0.0
    %1308 = vmatpush2.xpose.msra.mxu0 0.0
    %1309 = vmatprep.subr.mxu0 0.0
    %1310 = vmatpush2.xpose.msra.mxu0 0.0
    %1311 = vmatprep.subr.mxu0 0.0
    %1312 = vmatpush2.xpose.msra.mxu0 0.0
    %1313 = vmatprep.subr.mxu0 0.0
    %1314 = vmatpush2.xpose.msra.mxu0 0.0
    %1315 = vmatprep.subr.mxu0 0.0
    %1316 = vmatpush2.xpose.msra.mxu0 0.0
    %1317 = vmatprep.subr.mxu0 0.0
    %1318 = vmatpush2.xpose.msra.mxu0 0.0
    %1319 = vmatprep.subr.mxu0 0.0
    %1320 = vmatpush2.xpose.msra.mxu0 0.0
    %1321 = vmatprep.subr.mxu0 0.0
    %1322 = vmatpush2.xpose.msra.mxu0 0.0
    %1323 = vmatprep.mubr.f32.mxu0 0.0
    %v1324 = vand.u32 %v1245, 4294901760
    %v1325 = vsub.f32 %v1245, %v1324
    %v1326 = vand.u32 %v1325, 4294901760
    %v1327 = vsub.f32 %v1325, %v1326
    %v1328 = vand.u32 %v1327, 4294901760
    %1329 = vmatmul.mubr.f32.gmra.mxu0 %v1328
    %v1330 = vpop.f32.mrf.mxu0
    %v1331 = vadd.f32 0.0, %v1330
    %v1332 = vpop.f32.mrf.mxu0
    %1333 = vmatprep.mubr.f32.mxu0 0.0
    %v1334 = vand.u32 %v1248, 4294901760
    %v1335 = vsub.f32 %v1248, %v1334
    %v1336 = vand.u32 %v1335, 4294901760
    %v1337 = vsub.f32 %v1335, %v1336
    %v1338 = vand.u32 %v1337, 4294901760
    %1339 = vmatmul.mubr.f32.gmra.mxu0 %v1338
    %v1340 = vpop.f32.mrf.mxu0
    %v1341 = vadd.f32 0.0, %v1340
    %v1342 = vpop.f32.mrf.mxu0
    %1343 = vmatprep.mubr.f32.mxu0 0.0
    %v1344 = vand.u32 %v1251, 4294901760
    %v1345 = vsub.f32 %v1251, %v1344
    %v1346 = vand.u32 %v1345, 4294901760
    %v1347 = vsub.f32 %v1345, %v1346
    %v1348 = vand.u32 %v1347, 4294901760
    %1349 = vmatmul.mubr.f32.gmra.mxu0 %v1348
    %v1350 = vpop.f32.mrf.mxu0
    %v1351 = vadd.f32 0.0, %v1350
    %v1352 = vpop.f32.mrf.mxu0
    %1353 = vmatprep.mubr.f32.mxu0 0.0
    %v1354 = vand.u32 %v1254, 4294901760
    %v1355 = vsub.f32 %v1254, %v1354
    %v1356 = vand.u32 %v1355, 4294901760
    %v1357 = vsub.f32 %v1355, %v1356
    %v1358 = vand.u32 %v1357, 4294901760
    %1359 = vmatmul.mubr.f32.gmra.mxu0 %v1358
    %v1360 = vpop.f32.mrf.mxu0
    %v1361 = vadd.f32 0.0, %v1360
    %v1362 = vpop.f32.mrf.mxu0
    %1363 = vdwg.mxu0
    %1364 = vmatprep.subr.mxu0 0.0
    %1365 = vmatpush1.xpose.msra.mxu0 0.0
    %1366 = vmatprep.subr.mxu0 0.0
    %1367 = vmatpush1.xpose.msra.mxu0 0.0
    %1368 = vmatprep.subr.mxu0 0.0
    %1369 = vmatpush1.xpose.msra.mxu0 0.0
    %1370 = vmatprep.subr.mxu0 0.0
    %1371 = vmatpush1.xpose.msra.mxu0 0.0
    %1372 = vmatprep.subr.mxu0 0.0
    %1373 = vmatpush1.xpose.msra.mxu0 0.0
    %1374 = vmatprep.subr.mxu0 0.0
    %1375 = vmatpush1.xpose.msra.mxu0 0.0
    %1376 = vmatprep.subr.mxu0 0.0
    %1377 = vmatpush1.xpose.msra.mxu0 0.0
    %1378 = vmatprep.subr.mxu0 0.0
    %1379 = vmatpush1.xpose.msra.mxu0 0.0
    %1380 = vmatprep.subr.mxu0 0.0
    %1381 = vmatpush1.xpose.msra.mxu0 0.0
    %1382 = vmatprep.subr.mxu0 0.0
    %1383 = vmatpush1.xpose.msra.mxu0 0.0
    %1384 = vmatprep.subr.mxu0 0.0
    %1385 = vmatpush1.xpose.msra.mxu0 0.0
    %1386 = vmatprep.subr.mxu0 0.0
    %1387 = vmatpush1.xpose.msra.mxu0 0.0
    %1388 = vmatprep.subr.mxu0 0.0
    %1389 = vmatpush1.xpose.msra.mxu0 0.0
    %1390 = vmatprep.subr.mxu0 0.0
    %1391 = vmatpush1.xpose.msra.mxu0 0.0
    %1392 = vmatprep.subr.mxu0 0.0
    %1393 = vmatpush1.xpose.msra.mxu0 0.0
    %1394 = vmatprep.subr.mxu0 0.0
    %v1395 = vand.u32 %v1256, 4294901760
    %v1396 = vsub.f32 %v1256, %v1395
    %v1397 = vand.u32 %v1396, 4294901760
    %v1398 = vsub.f32 %v1396, %v1397
    %v1399 = vand.u32 %v1398, 4294901760
    %1400 = vmatpush1.xpose.msra.mxu0 %v1399
    %1401 = vmatprep.subr.mxu0 0.0
    %1402 = vmatpush2.xpose.msra.mxu0 0.0
    %1403 = vmatprep.subr.mxu0 0.0
    %1404 = vmatpush2.xpose.msra.mxu0 0.0
    %1405 = vmatprep.subr.mxu0 0.0
    %1406 = vmatpush2.xpose.msra.mxu0 0.0
    %1407 = vmatprep.subr.mxu0 0.0
    %1408 = vmatpush2.xpose.msra.mxu0 0.0
    %1409 = vmatprep.subr.mxu0 0.0
    %1410 = vmatpush2.xpose.msra.mxu0 0.0
    %1411 = vmatprep.subr.mxu0 0.0
    %1412 = vmatpush2.xpose.msra.mxu0 0.0
    %1413 = vmatprep.subr.mxu0 0.0
    %1414 = vmatpush2.xpose.msra.mxu0 0.0
    %1415 = vmatprep.subr.mxu0 0.0
    %1416 = vmatpush2.xpose.msra.mxu0 0.0
    %1417 = vmatprep.subr.mxu0 0.0
    %1418 = vmatpush2.xpose.msra.mxu0 0.0
    %1419 = vmatprep.subr.mxu0 0.0
    %1420 = vmatpush2.xpose.msra.mxu0 0.0
    %1421 = vmatprep.subr.mxu0 0.0
    %1422 = vmatpush2.xpose.msra.mxu0 0.0
    %1423 = vmatprep.subr.mxu0 0.0
    %1424 = vmatpush2.xpose.msra.mxu0 0.0
    %1425 = vmatprep.subr.mxu0 0.0
    %1426 = vmatpush2.xpose.msra.mxu0 0.0
    %1427 = vmatprep.subr.mxu0 0.0
    %1428 = vmatpush2.xpose.msra.mxu0 0.0
    %1429 = vmatprep.subr.mxu0 0.0
    %1430 = vmatpush2.xpose.msra.mxu0 0.0
    %1431 = vmatprep.subr.mxu0 0.0
    %1432 = vmatpush2.xpose.msra.mxu0 0.0
    %1433 = vmatprep.mubr.f32.mxu0 0.0
    %v1434 = vand.u32 %v1245, 4294901760
    %1435 = vmatmul.mubr.f32.gmra.mxu0 %v1434
    %v1436 = vpop.f32.mrf.mxu0
    %v1437 = vadd.f32 %v1331, %v1436
    %v1438 = vpop.f32.mrf.mxu0
    %1439 = vmatprep.mubr.f32.mxu0 0.0
    %v1440 = vand.u32 %v1248, 4294901760
    %1441 = vmatmul.mubr.f32.gmra.mxu0 %v1440
    %v1442 = vpop.f32.mrf.mxu0
    %v1443 = vadd.f32 %v1341, %v1442
    %v1444 = vpop.f32.mrf.mxu0
    %1445 = vmatprep.mubr.f32.mxu0 0.0
    %v1446 = vand.u32 %v1251, 4294901760
    %1447 = vmatmul.mubr.f32.gmra.mxu0 %v1446
    %v1448 = vpop.f32.mrf.mxu0
    %v1449 = vadd.f32 %v1351, %v1448
    %v1450 = vpop.f32.mrf.mxu0
    %1451 = vmatprep.mubr.f32.mxu0 0.0
    %v1452 = vand.u32 %v1254, 4294901760
    %1453 = vmatmul.mubr.f32.gmra.mxu0 %v1452
    %v1454 = vpop.f32.mrf.mxu0
    %v1455 = vadd.f32 %v1361, %v1454
    %v1456 = vpop.f32.mrf.mxu0
    %1457 = vdwg.mxu0
    %1458 = vmatprep.subr.mxu0 0.0
    %1459 = vmatpush1.xpose.msra.mxu0 0.0
    %1460 = vmatprep.subr.mxu0 0.0
    %1461 = vmatpush1.xpose.msra.mxu0 0.0
    %1462 = vmatprep.subr.mxu0 0.0
    %1463 = vmatpush1.xpose.msra.mxu0 0.0
    %1464 = vmatprep.subr.mxu0 0.0
    %1465 = vmatpush1.xpose.msra.mxu0 0.0
    %1466 = vmatprep.subr.mxu0 0.0
    %1467 = vmatpush1.xpose.msra.mxu0 0.0
    %1468 = vmatprep.subr.mxu0 0.0
    %1469 = vmatpush1.xpose.msra.mxu0 0.0
    %1470 = vmatprep.subr.mxu0 0.0
    %1471 = vmatpush1.xpose.msra.mxu0 0.0
    %1472 = vmatprep.subr.mxu0 0.0
    %1473 = vmatpush1.xpose.msra.mxu0 0.0
    %1474 = vmatprep.subr.mxu0 0.0
    %1475 = vmatpush1.xpose.msra.mxu0 0.0
    %1476 = vmatprep.subr.mxu0 0.0
    %1477 = vmatpush1.xpose.msra.mxu0 0.0
    %1478 = vmatprep.subr.mxu0 0.0
    %1479 = vmatpush1.xpose.msra.mxu0 0.0
    %1480 = vmatprep.subr.mxu0 0.0
    %1481 = vmatpush1.xpose.msra.mxu0 0.0
    %1482 = vmatprep.subr.mxu0 0.0
    %1483 = vmatpush1.xpose.msra.mxu0 0.0
    %1484 = vmatprep.subr.mxu0 0.0
    %1485 = vmatpush1.xpose.msra.mxu0 0.0
    %1486 = vmatprep.subr.mxu0 0.0
    %1487 = vmatpush1.xpose.msra.mxu0 0.0
    %1488 = vmatprep.subr.mxu0 0.0
    %v1489 = vand.u32 %v1256, 4294901760
    %v1490 = vsub.f32 %v1256, %v1489
    %1491 = vmatpush1.xpose.msra.mxu0 %v1490
    %1492 = vmatprep.subr.mxu0 0.0
    %1493 = vmatpush2.xpose.msra.mxu0 0.0
    %1494 = vmatprep.subr.mxu0 0.0
    %1495 = vmatpush2.xpose.msra.mxu0 0.0
    %1496 = vmatprep.subr.mxu0 0.0
    %1497 = vmatpush2.xpose.msra.mxu0 0.0
    %1498 = vmatprep.subr.mxu0 0.0
    %1499 = vmatpush2.xpose.msra.mxu0 0.0
    %1500 = vmatprep.subr.mxu0 0.0
    %1501 = vmatpush2.xpose.msra.mxu0 0.0
    %1502 = vmatprep.subr.mxu0 0.0
    %1503 = vmatpush2.xpose.msra.mxu0 0.0
    %1504 = vmatprep.subr.mxu0 0.0
    %1505 = vmatpush2.xpose.msra.mxu0 0.0
    %1506 = vmatprep.subr.mxu0 0.0
    %1507 = vmatpush2.xpose.msra.mxu0 0.0
    %1508 = vmatprep.subr.mxu0 0.0
    %1509 = vmatpush2.xpose.msra.mxu0 0.0
    %1510 = vmatprep.subr.mxu0 0.0
    %1511 = vmatpush2.xpose.msra.mxu0 0.0
    %1512 = vmatprep.subr.mxu0 0.0
    %1513 = vmatpush2.xpose.msra.mxu0 0.0
    %1514 = vmatprep.subr.mxu0 0.0
    %1515 = vmatpush2.xpose.msra.mxu0 0.0
    %1516 = vmatprep.subr.mxu0 0.0
    %1517 = vmatpush2.xpose.msra.mxu0 0.0
    %1518 = vmatprep.subr.mxu0 0.0
    %1519 = vmatpush2.xpose.msra.mxu0 0.0
    %1520 = vmatprep.subr.mxu0 0.0
    %1521 = vmatpush2.xpose.msra.mxu0 0.0
    %1522 = vmatprep.subr.mxu0 0.0
    %1523 = vmatpush2.xpose.msra.mxu0 0.0
    %1524 = vmatprep.mubr.f32.mxu0 0.0
    %v1525 = vand.u32 %v1245, 4294901760
    %v1526 = vsub.f32 %v1245, %v1525
    %1527 = vmatmul.mubr.f32.gmra.mxu0 %v1526
    %v1528 = vpop.f32.mrf.mxu0
    %v1529 = vadd.f32 %v1437, %v1528
    %v1530 = vpop.f32.mrf.mxu0
    %1531 = vmatprep.mubr.f32.mxu0 0.0
    %v1532 = vand.u32 %v1248, 4294901760
    %v1533 = vsub.f32 %v1248, %v1532
    %1534 = vmatmul.mubr.f32.gmra.mxu0 %v1533
    %v1535 = vpop.f32.mrf.mxu0
    %v1536 = vadd.f32 %v1443, %v1535
    %v1537 = vpop.f32.mrf.mxu0
    %1538 = vmatprep.mubr.f32.mxu0 0.0
    %v1539 = vand.u32 %v1251, 4294901760
    %v1540 = vsub.f32 %v1251, %v1539
    %1541 = vmatmul.mubr.f32.gmra.mxu0 %v1540
    %v1542 = vpop.f32.mrf.mxu0
    %v1543 = vadd.f32 %v1449, %v1542
    %v1544 = vpop.f32.mrf.mxu0
    %1545 = vmatprep.mubr.f32.mxu0 0.0
    %v1546 = vand.u32 %v1254, 4294901760
    %v1547 = vsub.f32 %v1254, %v1546
    %1548 = vmatmul.mubr.f32.gmra.mxu0 %v1547
    %v1549 = vpop.f32.mrf.mxu0
    %v1550 = vadd.f32 %v1455, %v1549
    %v1551 = vpop.f32.mrf.mxu0
    %1552 = vdwg.mxu0
    %1553 = vmatprep.subr.mxu0 0.0
    %1554 = vmatpush1.xpose.msra.mxu0 0.0
    %1555 = vmatprep.subr.mxu0 0.0
    %1556 = vmatpush1.xpose.msra.mxu0 0.0
    %1557 = vmatprep.subr.mxu0 0.0
    %1558 = vmatpush1.xpose.msra.mxu0 0.0
    %1559 = vmatprep.subr.mxu0 0.0
    %1560 = vmatpush1.xpose.msra.mxu0 0.0
    %1561 = vmatprep.subr.mxu0 0.0
    %1562 = vmatpush1.xpose.msra.mxu0 0.0
    %1563 = vmatprep.subr.mxu0 0.0
    %1564 = vmatpush1.xpose.msra.mxu0 0.0
    %1565 = vmatprep.subr.mxu0 0.0
    %1566 = vmatpush1.xpose.msra.mxu0 0.0
    %1567 = vmatprep.subr.mxu0 0.0
    %1568 = vmatpush1.xpose.msra.mxu0 0.0
    %1569 = vmatprep.subr.mxu0 0.0
    %1570 = vmatpush1.xpose.msra.mxu0 0.0
    %1571 = vmatprep.subr.mxu0 0.0
    %1572 = vmatpush1.xpose.msra.mxu0 0.0
    %1573 = vmatprep.subr.mxu0 0.0
    %1574 = vmatpush1.xpose.msra.mxu0 0.0
    %1575 = vmatprep.subr.mxu0 0.0
    %1576 = vmatpush1.xpose.msra.mxu0 0.0
    %1577 = vmatprep.subr.mxu0 0.0
    %1578 = vmatpush1.xpose.msra.mxu0 0.0
    %1579 = vmatprep.subr.mxu0 0.0
    %1580 = vmatpush1.xpose.msra.mxu0 0.0
    %1581 = vmatprep.subr.mxu0 0.0
    %1582 = vmatpush1.xpose.msra.mxu0 0.0
    %1583 = vmatprep.subr.mxu0 0.0
    %v1584 = vand.u32 %v1256, 4294901760
    %1585 = vmatpush1.xpose.msra.mxu0 %v1584
    %1586 = vmatprep.subr.mxu0 0.0
    %1587 = vmatpush2.xpose.msra.mxu0 0.0
    %1588 = vmatprep.subr.mxu0 0.0
    %1589 = vmatpush2.xpose.msra.mxu0 0.0
    %1590 = vmatprep.subr.mxu0 0.0
    %1591 = vmatpush2.xpose.msra.mxu0 0.0
    %1592 = vmatprep.subr.mxu0 0.0
    %1593 = vmatpush2.xpose.msra.mxu0 0.0
    %1594 = vmatprep.subr.mxu0 0.0
    %1595 = vmatpush2.xpose.msra.mxu0 0.0
    %1596 = vmatprep.subr.mxu0 0.0
    %1597 = vmatpush2.xpose.msra.mxu0 0.0
    %1598 = vmatprep.subr.mxu0 0.0
    %1599 = vmatpush2.xpose.msra.mxu0 0.0
    %1600 = vmatprep.subr.mxu0 0.0
    %1601 = vmatpush2.xpose.msra.mxu0 0.0
    %1602 = vmatprep.subr.mxu0 0.0
    %1603 = vmatpush2.xpose.msra.mxu0 0.0
    %1604 = vmatprep.subr.mxu0 0.0
    %1605 = vmatpush2.xpose.msra.mxu0 0.0
    %1606 = vmatprep.subr.mxu0 0.0
    %1607 = vmatpush2.xpose.msra.mxu0 0.0
    %1608 = vmatprep.subr.mxu0 0.0
    %1609 = vmatpush2.xpose.msra.mxu0 0.0
    %1610 = vmatprep.subr.mxu0 0.0
    %1611 = vmatpush2.xpose.msra.mxu0 0.0
    %1612 = vmatprep.subr.mxu0 0.0
    %1613 = vmatpush2.xpose.msra.mxu0 0.0
    %1614 = vmatprep.subr.mxu0 0.0
    %1615 = vmatpush2.xpose.msra.mxu0 0.0
    %1616 = vmatprep.subr.mxu0 0.0
    %1617 = vmatpush2.xpose.msra.mxu0 0.0
    %1618 = vmatprep.mubr.f32.mxu0 0.0
    %v1619 = vand.u32 %v1245, 4294901760
    %v1620 = vsub.f32 %v1245, %v1619
    %v1621 = vand.u32 %v1620, 4294901760
    %1622 = vmatmul.mubr.f32.gmra.mxu0 %v1621
    %v1623 = vpop.f32.mrf.mxu0
    %v1624 = vadd.f32 %v1529, %v1623
    %v1625 = vpop.f32.mrf.mxu0
    %1626 = vmatprep.mubr.f32.mxu0 0.0
    %v1627 = vand.u32 %v1248, 4294901760
    %v1628 = vsub.f32 %v1248, %v1627
    %v1629 = vand.u32 %v1628, 4294901760
    %1630 = vmatmul.mubr.f32.gmra.mxu0 %v1629
    %v1631 = vpop.f32.mrf.mxu0
    %v1632 = vadd.f32 %v1536, %v1631
    %v1633 = vpop.f32.mrf.mxu0
    %1634 = vmatprep.mubr.f32.mxu0 0.0
    %v1635 = vand.u32 %v1251, 4294901760
    %v1636 = vsub.f32 %v1251, %v1635
    %v1637 = vand.u32 %v1636, 4294901760
    %1638 = vmatmul.mubr.f32.gmra.mxu0 %v1637
    %v1639 = vpop.f32.mrf.mxu0
    %v1640 = vadd.f32 %v1543, %v1639
    %v1641 = vpop.f32.mrf.mxu0
    %1642 = vmatprep.mubr.f32.mxu0 0.0
    %v1643 = vand.u32 %v1254, 4294901760
    %v1644 = vsub.f32 %v1254, %v1643
    %v1645 = vand.u32 %v1644, 4294901760
    %1646 = vmatmul.mubr.f32.gmra.mxu0 %v1645
    %v1647 = vpop.f32.mrf.mxu0
    %v1648 = vadd.f32 %v1550, %v1647
    %v1649 = vpop.f32.mrf.mxu0
    %1650 = vdwg.mxu0
    %1651 = vmatprep.subr.mxu0 0.0
    %1652 = vmatpush1.xpose.msra.mxu0 0.0
    %1653 = vmatprep.subr.mxu0 0.0
    %1654 = vmatpush1.xpose.msra.mxu0 0.0
    %1655 = vmatprep.subr.mxu0 0.0
    %1656 = vmatpush1.xpose.msra.mxu0 0.0
    %1657 = vmatprep.subr.mxu0 0.0
    %1658 = vmatpush1.xpose.msra.mxu0 0.0
    %1659 = vmatprep.subr.mxu0 0.0
    %1660 = vmatpush1.xpose.msra.mxu0 0.0
    %1661 = vmatprep.subr.mxu0 0.0
    %1662 = vmatpush1.xpose.msra.mxu0 0.0
    %1663 = vmatprep.subr.mxu0 0.0
    %1664 = vmatpush1.xpose.msra.mxu0 0.0
    %1665 = vmatprep.subr.mxu0 0.0
    %1666 = vmatpush1.xpose.msra.mxu0 0.0
    %1667 = vmatprep.subr.mxu0 0.0
    %1668 = vmatpush1.xpose.msra.mxu0 0.0
    %1669 = vmatprep.subr.mxu0 0.0
    %1670 = vmatpush1.xpose.msra.mxu0 0.0
    %1671 = vmatprep.subr.mxu0 0.0
    %1672 = vmatpush1.xpose.msra.mxu0 0.0
    %1673 = vmatprep.subr.mxu0 0.0
    %1674 = vmatpush1.xpose.msra.mxu0 0.0
    %1675 = vmatprep.subr.mxu0 0.0
    %1676 = vmatpush1.xpose.msra.mxu0 0.0
    %1677 = vmatprep.subr.mxu0 0.0
    %1678 = vmatpush1.xpose.msra.mxu0 0.0
    %1679 = vmatprep.subr.mxu0 0.0
    %1680 = vmatpush1.xpose.msra.mxu0 0.0
    %1681 = vmatprep.subr.mxu0 0.0
    %v1682 = vand.u32 %v1256, 4294901760
    %v1683 = vsub.f32 %v1256, %v1682
    %v1684 = vand.u32 %v1683, 4294901760
    %1685 = vmatpush1.xpose.msra.mxu0 %v1684
    %1686 = vmatprep.subr.mxu0 0.0
    %1687 = vmatpush2.xpose.msra.mxu0 0.0
    %1688 = vmatprep.subr.mxu0 0.0
    %1689 = vmatpush2.xpose.msra.mxu0 0.0
    %1690 = vmatprep.subr.mxu0 0.0
    %1691 = vmatpush2.xpose.msra.mxu0 0.0
    %1692 = vmatprep.subr.mxu0 0.0
    %1693 = vmatpush2.xpose.msra.mxu0 0.0
    %1694 = vmatprep.subr.mxu0 0.0
    %1695 = vmatpush2.xpose.msra.mxu0 0.0
    %1696 = vmatprep.subr.mxu0 0.0
    %1697 = vmatpush2.xpose.msra.mxu0 0.0
    %1698 = vmatprep.subr.mxu0 0.0
    %1699 = vmatpush2.xpose.msra.mxu0 0.0
    %1700 = vmatprep.subr.mxu0 0.0
    %1701 = vmatpush2.xpose.msra.mxu0 0.0
    %1702 = vmatprep.subr.mxu0 0.0
    %1703 = vmatpush2.xpose.msra.mxu0 0.0
    %1704 = vmatprep.subr.mxu0 0.0
    %1705 = vmatpush2.xpose.msra.mxu0 0.0
    %1706 = vmatprep.subr.mxu0 0.0
    %1707 = vmatpush2.xpose.msra.mxu0 0.0
    %1708 = vmatprep.subr.mxu0 0.0
    %1709 = vmatpush2.xpose.msra.mxu0 0.0
    %1710 = vmatprep.subr.mxu0 0.0
    %1711 = vmatpush2.xpose.msra.mxu0 0.0
    %1712 = vmatprep.subr.mxu0 0.0
    %1713 = vmatpush2.xpose.msra.mxu0 0.0
    %1714 = vmatprep.subr.mxu0 0.0
    %1715 = vmatpush2.xpose.msra.mxu0 0.0
    %1716 = vmatprep.subr.mxu0 0.0
    %1717 = vmatpush2.xpose.msra.mxu0 0.0
    %1718 = vmatprep.mubr.f32.mxu0 0.0
    %v1719 = vand.u32 %v1245, 4294901760
    %1720 = vmatmul.mubr.f32.gmra.mxu0 %v1719
    %v1721 = vpop.f32.mrf.mxu0
    %v1722 = vadd.f32 %v1624, %v1721
    %v1723 = vpop.f32.mrf.mxu0
    %1724 = vmatprep.mubr.f32.mxu0 0.0
    %v1725 = vand.u32 %v1248, 4294901760
    %1726 = vmatmul.mubr.f32.gmra.mxu0 %v1725
    %v1727 = vpop.f32.mrf.mxu0
    %v1728 = vadd.f32 %v1632, %v1727
    %v1729 = vpop.f32.mrf.mxu0
    %1730 = vmatprep.mubr.f32.mxu0 0.0
    %v1731 = vand.u32 %v1251, 4294901760
    %1732 = vmatmul.mubr.f32.gmra.mxu0 %v1731
    %v1733 = vpop.f32.mrf.mxu0
    %v1734 = vadd.f32 %v1640, %v1733
    %v1735 = vpop.f32.mrf.mxu0
    %1736 = vmatprep.mubr.f32.mxu0 0.0
    %v1737 = vand.u32 %v1254, 4294901760
    %1738 = vmatmul.mubr.f32.gmra.mxu0 %v1737
    %v1739 = vpop.f32.mrf.mxu0
    %v1740 = vadd.f32 %v1648, %v1739
    %v1741 = vpop.f32.mrf.mxu0
    %1742 = vdwg.mxu0
    %1743 = vmatprep.subr.mxu0 0.0
    %1744 = vmatpush1.xpose.msra.mxu0 0.0
    %1745 = vmatprep.subr.mxu0 0.0
    %1746 = vmatpush1.xpose.msra.mxu0 0.0
    %1747 = vmatprep.subr.mxu0 0.0
    %1748 = vmatpush1.xpose.msra.mxu0 0.0
    %1749 = vmatprep.subr.mxu0 0.0
    %1750 = vmatpush1.xpose.msra.mxu0 0.0
    %1751 = vmatprep.subr.mxu0 0.0
    %1752 = vmatpush1.xpose.msra.mxu0 0.0
    %1753 = vmatprep.subr.mxu0 0.0
    %1754 = vmatpush1.xpose.msra.mxu0 0.0
    %1755 = vmatprep.subr.mxu0 0.0
    %1756 = vmatpush1.xpose.msra.mxu0 0.0
    %1757 = vmatprep.subr.mxu0 0.0
    %1758 = vmatpush1.xpose.msra.mxu0 0.0
    %1759 = vmatprep.subr.mxu0 0.0
    %1760 = vmatpush1.xpose.msra.mxu0 0.0
    %1761 = vmatprep.subr.mxu0 0.0
    %1762 = vmatpush1.xpose.msra.mxu0 0.0
    %1763 = vmatprep.subr.mxu0 0.0
    %1764 = vmatpush1.xpose.msra.mxu0 0.0
    %1765 = vmatprep.subr.mxu0 0.0
    %1766 = vmatpush1.xpose.msra.mxu0 0.0
    %1767 = vmatprep.subr.mxu0 0.0
    %1768 = vmatpush1.xpose.msra.mxu0 0.0
    %1769 = vmatprep.subr.mxu0 0.0
    %1770 = vmatpush1.xpose.msra.mxu0 0.0
    %1771 = vmatprep.subr.mxu0 0.0
    %1772 = vmatpush1.xpose.msra.mxu0 0.0
    %1773 = vmatprep.subr.mxu0 0.0
    %v1774 = vand.u32 %v1256, 4294901760
    %1775 = vmatpush1.xpose.msra.mxu0 %v1774
    %1776 = vmatprep.subr.mxu0 0.0
    %1777 = vmatpush2.xpose.msra.mxu0 0.0
    %1778 = vmatprep.subr.mxu0 0.0
    %1779 = vmatpush2.xpose.msra.mxu0 0.0
    %1780 = vmatprep.subr.mxu0 0.0
    %1781 = vmatpush2.xpose.msra.mxu0 0.0
    %1782 = vmatprep.subr.mxu0 0.0
    %1783 = vmatpush2.xpose.msra.mxu0 0.0
    %1784 = vmatprep.subr.mxu0 0.0
    %1785 = vmatpush2.xpose.msra.mxu0 0.0
    %1786 = vmatprep.subr.mxu0 0.0
    %1787 = vmatpush2.xpose.msra.mxu0 0.0
    %1788 = vmatprep.subr.mxu0 0.0
    %1789 = vmatpush2.xpose.msra.mxu0 0.0
    %1790 = vmatprep.subr.mxu0 0.0
    %1791 = vmatpush2.xpose.msra.mxu0 0.0
    %1792 = vmatprep.subr.mxu0 0.0
    %1793 = vmatpush2.xpose.msra.mxu0 0.0
    %1794 = vmatprep.subr.mxu0 0.0
    %1795 = vmatpush2.xpose.msra.mxu0 0.0
    %1796 = vmatprep.subr.mxu0 0.0
    %1797 = vmatpush2.xpose.msra.mxu0 0.0
    %1798 = vmatprep.subr.mxu0 0.0
    %1799 = vmatpush2.xpose.msra.mxu0 0.0
    %1800 = vmatprep.subr.mxu0 0.0
    %1801 = vmatpush2.xpose.msra.mxu0 0.0
    %1802 = vmatprep.subr.mxu0 0.0
    %1803 = vmatpush2.xpose.msra.mxu0 0.0
    %1804 = vmatprep.subr.mxu0 0.0
    %1805 = vmatpush2.xpose.msra.mxu0 0.0
    %1806 = vmatprep.subr.mxu0 0.0
    %1807 = vmatpush2.xpose.msra.mxu0 0.0
    %1808 = vmatprep.mubr.f32.mxu0 0.0
    %v1809 = vand.u32 %v1245, 4294901760
    %1810 = vmatmul.mubr.f32.gmra.mxu0 %v1809
    %v1811 = vpop.f32.mrf.mxu0
    %v1812 = vadd.f32 %v1722, %v1811
    %v1813 = vpop.f32.mrf.mxu0
    %1814 = vmatprep.mubr.f32.mxu0 0.0
    %v1815 = vand.u32 %v1248, 4294901760
    %1816 = vmatmul.mubr.f32.gmra.mxu0 %v1815
    %v1817 = vpop.f32.mrf.mxu0
    %v1818 = vadd.f32 %v1728, %v1817
    %v1819 = vpop.f32.mrf.mxu0
    %1820 = vmatprep.mubr.f32.mxu0 0.0
    %v1821 = vand.u32 %v1251, 4294901760
    %1822 = vmatmul.mubr.f32.gmra.mxu0 %v1821
    %v1823 = vpop.f32.mrf.mxu0
    %v1824 = vadd.f32 %v1734, %v1823
    %v1825 = vpop.f32.mrf.mxu0
    %1826 = vmatprep.mubr.f32.mxu0 0.0
    %v1827 = vand.u32 %v1254, 4294901760
    %1828 = vmatmul.mubr.f32.gmra.mxu0 %v1827
    %v1829 = vpop.f32.mrf.mxu0
    %v1830 = vadd.f32 %v1740, %v1829
    %v1831 = vpop.f32.mrf.mxu0
    %1832 = vdwg.mxu0
    %v1833 = vmul.f32 %v1220, 0.35355338
    %v1834 = vmul.f32 %v1226, 0.35355338
    %v1835 = vmul.f32 %v1232, 0.35355338
    %v1836 = vmul.f32 %v1238, 0.35355338
    %v1837 = vmul.f32 %v1812, 0.35355338
    %v1838 = vmul.f32 %v1818, 0.35355338
    %v1839 = vmul.f32 %v1824, 0.35355338
    %v1840 = vmul.f32 %v1830, 0.35355338
    %vm1841 = vcmask 64512
    %v1842 = vsel %vm1841, %v1833, -inf
    %1843 = vmax.xlane.f32.xlu0 %v1842
    %v1844 = vpop.xlane.xlu0 %1843
    %v1845 = vsel %vm1841, %v1834, -inf
    %1846 = vmax.xlane.f32.xlu0 %v1845
    %v1847 = vpop.xlane.xlu0 %1846
    %v1848 = vsel %vm1841, %v1835, -inf
    %1849 = vmax.xlane.f32.xlu0 %v1848
    %v1850 = vpop.xlane.xlu0 %1849
    %v1851 = vsel %vm1841, %v1836, -inf
    %1852 = vmax.xlane.f32.xlu0 %v1851
    %v1853 = vpop.xlane.xlu0 %1852
    %v1854 = vsel %vm1841, %v1837, -inf
    %1855 = vmax.xlane.f32.xlu0 %v1854
    %v1856 = vpop.xlane.xlu0 %1855
    %v1857 = vsel %vm1841, %v1838, -inf
    %1858 = vmax.xlane.f32.xlu0 %v1857
    %v1859 = vpop.xlane.xlu0 %1858
    %v1860 = vsel %vm1841, %v1839, -inf
    %1861 = vmax.xlane.f32.xlu0 %v1860
    %v1862 = vpop.xlane.xlu0 %1861
    %v1863 = vsel %vm1841, %v1840, -inf
    %1864 = vmax.xlane.f32.xlu0 %v1863
    %v1865 = vpop.xlane.xlu0 %1864
    %v1866 = vsub.f32 %v1833, %v1844
    %v1867 = vsub.f32 %v1834, %v1847
    %v1868 = vsub.f32 %v1835, %v1850
    %v1869 = vsub.f32 %v1836, %v1853
    %v1870 = vsub.f32 %v1837, %v1856
    %v1871 = vsub.f32 %v1838, %v1859
    %v1872 = vsub.f32 %v1839, %v1862
    %v1873 = vsub.f32 %v1840, %v1865
    %v1874 = vmul.f32 %v1866, 1.442695
    %v1875 = vpow.pop %v1874
    %v1876 = vmul.f32 %v1867, 1.442695
    %v1877 = vpow.pop %v1876
    %v1878 = vmul.f32 %v1868, 1.442695
    %v1879 = vpow.pop %v1878
    %v1880 = vmul.f32 %v1869, 1.442695
    %v1881 = vpow.pop %v1880
    %v1882 = vmul.f32 %v1870, 1.442695
    %v1883 = vpow.pop %v1882
    %v1884 = vmul.f32 %v1871, 1.442695
    %v1885 = vpow.pop %v1884
    %v1886 = vmul.f32 %v1872, 1.442695
    %v1887 = vpow.pop %v1886
    %v1888 = vmul.f32 %v1873, 1.442695
    %v1889 = vpow.pop %v1888
    %v1890 = vsel %vm1841, %v1875, 0.0
    %1891 = vadd.xlane.f32.xlu0 %v1890
    %v1892 = vpop.xlane.xlu0 %1891
    %v1893 = vsel %vm1841, %v1877, 0.0
    %1894 = vadd.xlane.f32.xlu0 %v1893
    %v1895 = vpop.xlane.xlu0 %1894
    %v1896 = vsel %vm1841, %v1879, 0.0
    %1897 = vadd.xlane.f32.xlu0 %v1896
    %v1898 = vpop.xlane.xlu0 %1897
    %v1899 = vsel %vm1841, %v1881, 0.0
    %1900 = vadd.xlane.f32.xlu0 %v1899
    %v1901 = vpop.xlane.xlu0 %1900
    %v1902 = vsel %vm1841, %v1883, 0.0
    %1903 = vadd.xlane.f32.xlu0 %v1902
    %v1904 = vpop.xlane.xlu0 %1903
    %v1905 = vsel %vm1841, %v1885, 0.0
    %1906 = vadd.xlane.f32.xlu0 %v1905
    %v1907 = vpop.xlane.xlu0 %1906
    %v1908 = vsel %vm1841, %v1887, 0.0
    %1909 = vadd.xlane.f32.xlu0 %v1908
    %v1910 = vpop.xlane.xlu0 %1909
    %v1911 = vsel %vm1841, %v1889, 0.0
    %1912 = vadd.xlane.f32.xlu0 %v1911
    %v1913 = vpop.xlane.xlu0 %1912
    %v1914 = vrcp.pop %v1892
    %v1915 = vmul.f32 %v1875, %v1914
    %v1916 = vrcp.pop %v1895
    %v1917 = vmul.f32 %v1877, %v1916
    %v1918 = vrcp.pop %v1898
    %v1919 = vmul.f32 %v1879, %v1918
    %v1920 = vrcp.pop %v1901
    %v1921 = vmul.f32 %v1881, %v1920
    %v1922 = vrcp.pop %v1904
    %v1923 = vmul.f32 %v1883, %v1922
    %v1924 = vrcp.pop %v1907
    %v1925 = vmul.f32 %v1885, %v1924
    %v1926 = vrcp.pop %v1910
    %v1927 = vmul.f32 %v1887, %v1926
    %v1928 = vrcp.pop %v1913
    %v1929 = vmul.f32 %v1889, %v1928
    %1930 = vrot.lane.b32.xlu0 %v632, 64
    %v1931 = vpop.permute.xlu0 %1930
    %v1934 = vsel %vm1841, %v1915, 0
    %v1937 = vsel %vm1841, %v1917, 0
    %v1940 = vsel %vm1841, %v1919, 0
    %v1943 = vsel %vm1841, %v1921, 0
    %1945 = vmatprep.subr.mxu0 0.0
    %1946 = vmatpush1.msra.mxu0 0.0
    %1947 = vmatprep.subr.mxu0 0.0
    %1948 = vmatpush1.msra.mxu0 0.0
    %1949 = vmatprep.subr.mxu0 0.0
    %1950 = vmatpush1.msra.mxu0 0.0
    %1951 = vmatprep.subr.mxu0 0.0
    %1952 = vmatpush1.msra.mxu0 0.0
    %1953 = vmatprep.subr.mxu0 0.0
    %1954 = vmatpush1.msra.mxu0 0.0
    %1955 = vmatprep.subr.mxu0 0.0
    %1956 = vmatpush1.msra.mxu0 0.0
    %1957 = vmatprep.subr.mxu0 0.0
    %1958 = vmatpush1.msra.mxu0 0.0
    %1959 = vmatprep.subr.mxu0 0.0
    %1960 = vmatpush1.msra.mxu0 0.0
    %1961 = vmatprep.subr.mxu0 0.0
    %1962 = vmatpush1.msra.mxu0 0.0
    %1963 = vmatprep.subr.mxu0 0.0
    %1964 = vmatpush1.msra.mxu0 0.0
    %1965 = vmatprep.subr.mxu0 0.0
    %1966 = vmatpush1.msra.mxu0 0.0
    %1967 = vmatprep.subr.mxu0 0.0
    %1968 = vmatpush1.msra.mxu0 0.0
    %1969 = vmatprep.subr.mxu0 0.0
    %1970 = vmatpush1.msra.mxu0 0.0
    %1971 = vmatprep.subr.mxu0 0.0
    %1972 = vmatpush1.msra.mxu0 0.0
    %1973 = vmatprep.subr.mxu0 0.0
    %1974 = vmatpush1.msra.mxu0 0.0
    %1975 = vmatprep.subr.mxu0 0.0
    %v1976 = vand.u32 %v1931, 4294901760
    %1977 = vmatpush1.msra.mxu0 %v1976
    %1978 = vmatprep.subr.mxu0 0.0
    %1979 = vmatpush2.msra.mxu0 0.0
    %1980 = vmatprep.subr.mxu0 0.0
    %1981 = vmatpush2.msra.mxu0 0.0
    %1982 = vmatprep.subr.mxu0 0.0
    %1983 = vmatpush2.msra.mxu0 0.0
    %1984 = vmatprep.subr.mxu0 0.0
    %1985 = vmatpush2.msra.mxu0 0.0
    %1986 = vmatprep.subr.mxu0 0.0
    %1987 = vmatpush2.msra.mxu0 0.0
    %1988 = vmatprep.subr.mxu0 0.0
    %1989 = vmatpush2.msra.mxu0 0.0
    %1990 = vmatprep.subr.mxu0 0.0
    %1991 = vmatpush2.msra.mxu0 0.0
    %1992 = vmatprep.subr.mxu0 0.0
    %1993 = vmatpush2.msra.mxu0 0.0
    %1994 = vmatprep.subr.mxu0 0.0
    %1995 = vmatpush2.msra.mxu0 0.0
    %1996 = vmatprep.subr.mxu0 0.0
    %1997 = vmatpush2.msra.mxu0 0.0
    %1998 = vmatprep.subr.mxu0 0.0
    %1999 = vmatpush2.msra.mxu0 0.0
    %2000 = vmatprep.subr.mxu0 0.0
    %2001 = vmatpush2.msra.mxu0 0.0
    %2002 = vmatprep.subr.mxu0 0.0
    %2003 = vmatpush2.msra.mxu0 0.0
    %2004 = vmatprep.subr.mxu0 0.0
    %2005 = vmatpush2.msra.mxu0 0.0
    %2006 = vmatprep.subr.mxu0 0.0
    %2007 = vmatpush2.msra.mxu0 0.0
    %2008 = vmatprep.subr.mxu0 0.0
    %2009 = vmatpush2.msra.mxu0 0.0
    %2010 = vmatprep.mubr.f32.mxu0 0.0
    %v2011 = vand.u32 %v1934, 4294901760
    %v2012 = vsub.f32 %v1934, %v2011
    %v2013 = vand.u32 %v2012, 4294901760
    %v2014 = vsub.f32 %v2012, %v2013
    %v2015 = vand.u32 %v2014, 4294901760
    %2016 = vmatmul.mubr.f32.gmra.mxu0 %v2015
    %v2017 = vpop.f32.mrf.mxu0
    %v2018 = vadd.f32 0.0, %v2017
    %v2019 = vpop.f32.mrf.mxu0
    %2020 = vmatprep.mubr.f32.mxu0 0.0
    %v2021 = vand.u32 %v1937, 4294901760
    %v2022 = vsub.f32 %v1937, %v2021
    %v2023 = vand.u32 %v2022, 4294901760
    %v2024 = vsub.f32 %v2022, %v2023
    %v2025 = vand.u32 %v2024, 4294901760
    %2026 = vmatmul.mubr.f32.gmra.mxu0 %v2025
    %v2027 = vpop.f32.mrf.mxu0
    %v2028 = vadd.f32 0.0, %v2027
    %v2029 = vpop.f32.mrf.mxu0
    %2030 = vmatprep.mubr.f32.mxu0 0.0
    %v2031 = vand.u32 %v1940, 4294901760
    %v2032 = vsub.f32 %v1940, %v2031
    %v2033 = vand.u32 %v2032, 4294901760
    %v2034 = vsub.f32 %v2032, %v2033
    %v2035 = vand.u32 %v2034, 4294901760
    %2036 = vmatmul.mubr.f32.gmra.mxu0 %v2035
    %v2037 = vpop.f32.mrf.mxu0
    %v2038 = vadd.f32 0.0, %v2037
    %v2039 = vpop.f32.mrf.mxu0
    %2040 = vmatprep.mubr.f32.mxu0 0.0
    %v2041 = vand.u32 %v1943, 4294901760
    %v2042 = vsub.f32 %v1943, %v2041
    %v2043 = vand.u32 %v2042, 4294901760
    %v2044 = vsub.f32 %v2042, %v2043
    %v2045 = vand.u32 %v2044, 4294901760
    %2046 = vmatmul.mubr.f32.gmra.mxu0 %v2045
    %v2047 = vpop.f32.mrf.mxu0
    %v2048 = vadd.f32 0.0, %v2047
    %v2049 = vpop.f32.mrf.mxu0
    %2050 = vdwg.mxu0
    %2051 = vmatprep.subr.mxu0 0.0
    %2052 = vmatpush1.msra.mxu0 0.0
    %2053 = vmatprep.subr.mxu0 0.0
    %2054 = vmatpush1.msra.mxu0 0.0
    %2055 = vmatprep.subr.mxu0 0.0
    %2056 = vmatpush1.msra.mxu0 0.0
    %2057 = vmatprep.subr.mxu0 0.0
    %2058 = vmatpush1.msra.mxu0 0.0
    %2059 = vmatprep.subr.mxu0 0.0
    %2060 = vmatpush1.msra.mxu0 0.0
    %2061 = vmatprep.subr.mxu0 0.0
    %2062 = vmatpush1.msra.mxu0 0.0
    %2063 = vmatprep.subr.mxu0 0.0
    %2064 = vmatpush1.msra.mxu0 0.0
    %2065 = vmatprep.subr.mxu0 0.0
    %2066 = vmatpush1.msra.mxu0 0.0
    %2067 = vmatprep.subr.mxu0 0.0
    %2068 = vmatpush1.msra.mxu0 0.0
    %2069 = vmatprep.subr.mxu0 0.0
    %2070 = vmatpush1.msra.mxu0 0.0
    %2071 = vmatprep.subr.mxu0 0.0
    %2072 = vmatpush1.msra.mxu0 0.0
    %2073 = vmatprep.subr.mxu0 0.0
    %2074 = vmatpush1.msra.mxu0 0.0
    %2075 = vmatprep.subr.mxu0 0.0
    %2076 = vmatpush1.msra.mxu0 0.0
    %2077 = vmatprep.subr.mxu0 0.0
    %2078 = vmatpush1.msra.mxu0 0.0
    %2079 = vmatprep.subr.mxu0 0.0
    %2080 = vmatpush1.msra.mxu0 0.0
    %2081 = vmatprep.subr.mxu0 0.0
    %v2082 = vand.u32 %v1931, 4294901760
    %v2083 = vsub.f32 %v1931, %v2082
    %v2084 = vand.u32 %v2083, 4294901760
    %v2085 = vsub.f32 %v2083, %v2084
    %v2086 = vand.u32 %v2085, 4294901760
    %2087 = vmatpush1.msra.mxu0 %v2086
    %2088 = vmatprep.subr.mxu0 0.0
    %2089 = vmatpush2.msra.mxu0 0.0
    %2090 = vmatprep.subr.mxu0 0.0
    %2091 = vmatpush2.msra.mxu0 0.0
    %2092 = vmatprep.subr.mxu0 0.0
    %2093 = vmatpush2.msra.mxu0 0.0
    %2094 = vmatprep.subr.mxu0 0.0
    %2095 = vmatpush2.msra.mxu0 0.0
    %2096 = vmatprep.subr.mxu0 0.0
    %2097 = vmatpush2.msra.mxu0 0.0
    %2098 = vmatprep.subr.mxu0 0.0
    %2099 = vmatpush2.msra.mxu0 0.0
    %2100 = vmatprep.subr.mxu0 0.0
    %2101 = vmatpush2.msra.mxu0 0.0
    %2102 = vmatprep.subr.mxu0 0.0
    %2103 = vmatpush2.msra.mxu0 0.0
    %2104 = vmatprep.subr.mxu0 0.0
    %2105 = vmatpush2.msra.mxu0 0.0
    %2106 = vmatprep.subr.mxu0 0.0
    %2107 = vmatpush2.msra.mxu0 0.0
    %2108 = vmatprep.subr.mxu0 0.0
    %2109 = vmatpush2.msra.mxu0 0.0
    %2110 = vmatprep.subr.mxu0 0.0
    %2111 = vmatpush2.msra.mxu0 0.0
    %2112 = vmatprep.subr.mxu0 0.0
    %2113 = vmatpush2.msra.mxu0 0.0
    %2114 = vmatprep.subr.mxu0 0.0
    %2115 = vmatpush2.msra.mxu0 0.0
    %2116 = vmatprep.subr.mxu0 0.0
    %2117 = vmatpush2.msra.mxu0 0.0
    %2118 = vmatprep.subr.mxu0 0.0
    %2119 = vmatpush2.msra.mxu0 0.0
    %2120 = vmatprep.mubr.f32.mxu0 0.0
    %v2121 = vand.u32 %v1934, 4294901760
    %2122 = vmatmul.mubr.f32.gmra.mxu0 %v2121
    %v2123 = vpop.f32.mrf.mxu0
    %v2124 = vadd.f32 %v2018, %v2123
    %v2125 = vpop.f32.mrf.mxu0
    %2126 = vmatprep.mubr.f32.mxu0 0.0
    %v2127 = vand.u32 %v1937, 4294901760
    %2128 = vmatmul.mubr.f32.gmra.mxu0 %v2127
    %v2129 = vpop.f32.mrf.mxu0
    %v2130 = vadd.f32 %v2028, %v2129
    %v2131 = vpop.f32.mrf.mxu0
    %2132 = vmatprep.mubr.f32.mxu0 0.0
    %v2133 = vand.u32 %v1940, 4294901760
    %2134 = vmatmul.mubr.f32.gmra.mxu0 %v2133
    %v2135 = vpop.f32.mrf.mxu0
    %v2136 = vadd.f32 %v2038, %v2135
    %v2137 = vpop.f32.mrf.mxu0
    %2138 = vmatprep.mubr.f32.mxu0 0.0
    %v2139 = vand.u32 %v1943, 4294901760
    %2140 = vmatmul.mubr.f32.gmra.mxu0 %v2139
    %v2141 = vpop.f32.mrf.mxu0
    %v2142 = vadd.f32 %v2048, %v2141
    %v2143 = vpop.f32.mrf.mxu0
    %2144 = vdwg.mxu0
    %2145 = vmatprep.subr.mxu0 0.0
    %2146 = vmatpush1.msra.mxu0 0.0
    %2147 = vmatprep.subr.mxu0 0.0
    %2148 = vmatpush1.msra.mxu0 0.0
    %2149 = vmatprep.subr.mxu0 0.0
    %2150 = vmatpush1.msra.mxu0 0.0
    %2151 = vmatprep.subr.mxu0 0.0
    %2152 = vmatpush1.msra.mxu0 0.0
    %2153 = vmatprep.subr.mxu0 0.0
    %2154 = vmatpush1.msra.mxu0 0.0
    %2155 = vmatprep.subr.mxu0 0.0
    %2156 = vmatpush1.msra.mxu0 0.0
    %2157 = vmatprep.subr.mxu0 0.0
    %2158 = vmatpush1.msra.mxu0 0.0
    %2159 = vmatprep.subr.mxu0 0.0
    %2160 = vmatpush1.msra.mxu0 0.0
    %2161 = vmatprep.subr.mxu0 0.0
    %2162 = vmatpush1.msra.mxu0 0.0
    %2163 = vmatprep.subr.mxu0 0.0
    %2164 = vmatpush1.msra.mxu0 0.0
    %2165 = vmatprep.subr.mxu0 0.0
    %2166 = vmatpush1.msra.mxu0 0.0
    %2167 = vmatprep.subr.mxu0 0.0
    %2168 = vmatpush1.msra.mxu0 0.0
    %2169 = vmatprep.subr.mxu0 0.0
    %2170 = vmatpush1.msra.mxu0 0.0
    %2171 = vmatprep.subr.mxu0 0.0
    %2172 = vmatpush1.msra.mxu0 0.0
    %2173 = vmatprep.subr.mxu0 0.0
    %2174 = vmatpush1.msra.mxu0 0.0
    %2175 = vmatprep.subr.mxu0 0.0
    %v2176 = vand.u32 %v1931, 4294901760
    %v2177 = vsub.f32 %v1931, %v2176
    %2178 = vmatpush1.msra.mxu0 %v2177
    %2179 = vmatprep.subr.mxu0 0.0
    %2180 = vmatpush2.msra.mxu0 0.0
    %2181 = vmatprep.subr.mxu0 0.0
    %2182 = vmatpush2.msra.mxu0 0.0
    %2183 = vmatprep.subr.mxu0 0.0
    %2184 = vmatpush2.msra.mxu0 0.0
    %2185 = vmatprep.subr.mxu0 0.0
    %2186 = vmatpush2.msra.mxu0 0.0
    %2187 = vmatprep.subr.mxu0 0.0
    %2188 = vmatpush2.msra.mxu0 0.0
    %2189 = vmatprep.subr.mxu0 0.0
    %2190 = vmatpush2.msra.mxu0 0.0
    %2191 = vmatprep.subr.mxu0 0.0
    %2192 = vmatpush2.msra.mxu0 0.0
    %2193 = vmatprep.subr.mxu0 0.0
    %2194 = vmatpush2.msra.mxu0 0.0
    %2195 = vmatprep.subr.mxu0 0.0
    %2196 = vmatpush2.msra.mxu0 0.0
    %2197 = vmatprep.subr.mxu0 0.0
    %2198 = vmatpush2.msra.mxu0 0.0
    %2199 = vmatprep.subr.mxu0 0.0
    %2200 = vmatpush2.msra.mxu0 0.0
    %2201 = vmatprep.subr.mxu0 0.0
    %2202 = vmatpush2.msra.mxu0 0.0
    %2203 = vmatprep.subr.mxu0 0.0
    %2204 = vmatpush2.msra.mxu0 0.0
    %2205 = vmatprep.subr.mxu0 0.0
    %2206 = vmatpush2.msra.mxu0 0.0
    %2207 = vmatprep.subr.mxu0 0.0
    %2208 = vmatpush2.msra.mxu0 0.0
    %2209 = vmatprep.subr.mxu0 0.0
    %2210 = vmatpush2.msra.mxu0 0.0
    %2211 = vmatprep.mubr.f32.mxu0 0.0
    %v2212 = vand.u32 %v1934, 4294901760
    %v2213 = vsub.f32 %v1934, %v2212
    %2214 = vmatmul.mubr.f32.gmra.mxu0 %v2213
    %v2215 = vpop.f32.mrf.mxu0
    %v2216 = vadd.f32 %v2124, %v2215
    %v2217 = vpop.f32.mrf.mxu0
    %2218 = vmatprep.mubr.f32.mxu0 0.0
    %v2219 = vand.u32 %v1937, 4294901760
    %v2220 = vsub.f32 %v1937, %v2219
    %2221 = vmatmul.mubr.f32.gmra.mxu0 %v2220
    %v2222 = vpop.f32.mrf.mxu0
    %v2223 = vadd.f32 %v2130, %v2222
    %v2224 = vpop.f32.mrf.mxu0
    %2225 = vmatprep.mubr.f32.mxu0 0.0
    %v2226 = vand.u32 %v1940, 4294901760
    %v2227 = vsub.f32 %v1940, %v2226
    %2228 = vmatmul.mubr.f32.gmra.mxu0 %v2227
    %v2229 = vpop.f32.mrf.mxu0
    %v2230 = vadd.f32 %v2136, %v2229
    %v2231 = vpop.f32.mrf.mxu0
    %2232 = vmatprep.mubr.f32.mxu0 0.0
    %v2233 = vand.u32 %v1943, 4294901760
    %v2234 = vsub.f32 %v1943, %v2233
    %2235 = vmatmul.mubr.f32.gmra.mxu0 %v2234
    %v2236 = vpop.f32.mrf.mxu0
    %v2237 = vadd.f32 %v2142, %v2236
    %v2238 = vpop.f32.mrf.mxu0
    %2239 = vdwg.mxu0
    %2240 = vmatprep.subr.mxu0 0.0
    %2241 = vmatpush1.msra.mxu0 0.0
    %2242 = vmatprep.subr.mxu0 0.0
    %2243 = vmatpush1.msra.mxu0 0.0
    %2244 = vmatprep.subr.mxu0 0.0
    %2245 = vmatpush1.msra.mxu0 0.0
    %2246 = vmatprep.subr.mxu0 0.0
    %2247 = vmatpush1.msra.mxu0 0.0
    %2248 = vmatprep.subr.mxu0 0.0
    %2249 = vmatpush1.msra.mxu0 0.0
    %2250 = vmatprep.subr.mxu0 0.0
    %2251 = vmatpush1.msra.mxu0 0.0
    %2252 = vmatprep.subr.mxu0 0.0
    %2253 = vmatpush1.msra.mxu0 0.0
    %2254 = vmatprep.subr.mxu0 0.0
    %2255 = vmatpush1.msra.mxu0 0.0
    %2256 = vmatprep.subr.mxu0 0.0
    %2257 = vmatpush1.msra.mxu0 0.0
    %2258 = vmatprep.subr.mxu0 0.0
    %2259 = vmatpush1.msra.mxu0 0.0
    %2260 = vmatprep.subr.mxu0 0.0
    %2261 = vmatpush1.msra.mxu0 0.0
    %2262 = vmatprep.subr.mxu0 0.0
    %2263 = vmatpush1.msra.mxu0 0.0
    %2264 = vmatprep.subr.mxu0 0.0
    %2265 = vmatpush1.msra.mxu0 0.0
    %2266 = vmatprep.subr.mxu0 0.0
    %2267 = vmatpush1.msra.mxu0 0.0
    %2268 = vmatprep.subr.mxu0 0.0
    %2269 = vmatpush1.msra.mxu0 0.0
    %2270 = vmatprep.subr.mxu0 0.0
    %v2271 = vand.u32 %v1931, 4294901760
    %2272 = vmatpush1.msra.mxu0 %v2271
    %2273 = vmatprep.subr.mxu0 0.0
    %2274 = vmatpush2.msra.mxu0 0.0
    %2275 = vmatprep.subr.mxu0 0.0
    %2276 = vmatpush2.msra.mxu0 0.0
    %2277 = vmatprep.subr.mxu0 0.0
    %2278 = vmatpush2.msra.mxu0 0.0
    %2279 = vmatprep.subr.mxu0 0.0
    %2280 = vmatpush2.msra.mxu0 0.0
    %2281 = vmatprep.subr.mxu0 0.0
    %2282 = vmatpush2.msra.mxu0 0.0
    %2283 = vmatprep.subr.mxu0 0.0
    %2284 = vmatpush2.msra.mxu0 0.0
    %2285 = vmatprep.subr.mxu0 0.0
    %2286 = vmatpush2.msra.mxu0 0.0
    %2287 = vmatprep.subr.mxu0 0.0
    %2288 = vmatpush2.msra.mxu0 0.0
    %2289 = vmatprep.subr.mxu0 0.0
    %2290 = vmatpush2.msra.mxu0 0.0
    %2291 = vmatprep.subr.mxu0 0.0
    %2292 = vmatpush2.msra.mxu0 0.0
    %2293 = vmatprep.subr.mxu0 0.0
    %2294 = vmatpush2.msra.mxu0 0.0
    %2295 = vmatprep.subr.mxu0 0.0
    %2296 = vmatpush2.msra.mxu0 0.0
    %2297 = vmatprep.subr.mxu0 0.0
    %2298 = vmatpush2.msra.mxu0 0.0
    %2299 = vmatprep.subr.mxu0 0.0
    %2300 = vmatpush2.msra.mxu0 0.0
    %2301 = vmatprep.subr.mxu0 0.0
    %2302 = vmatpush2.msra.mxu0 0.0
    %2303 = vmatprep.subr.mxu0 0.0
    %2304 = vmatpush2.msra.mxu0 0.0
    %2305 = vmatprep.mubr.f32.mxu0 0.0
    %v2306 = vand.u32 %v1934, 4294901760
    %v2307 = vsub.f32 %v1934, %v2306
    %v2308 = vand.u32 %v2307, 4294901760
    %2309 = vmatmul.mubr.f32.gmra.mxu0 %v2308
    %v2310 = vpop.f32.mrf.mxu0
    %v2311 = vadd.f32 %v2216, %v2310
    %v2312 = vpop.f32.mrf.mxu0
    %2313 = vmatprep.mubr.f32.mxu0 0.0
    %v2314 = vand.u32 %v1937, 4294901760
    %v2315 = vsub.f32 %v1937, %v2314
    %v2316 = vand.u32 %v2315, 4294901760
    %2317 = vmatmul.mubr.f32.gmra.mxu0 %v2316
    %v2318 = vpop.f32.mrf.mxu0
    %v2319 = vadd.f32 %v2223, %v2318
    %v2320 = vpop.f32.mrf.mxu0
    %2321 = vmatprep.mubr.f32.mxu0 0.0
    %v2322 = vand.u32 %v1940, 4294901760
    %v2323 = vsub.f32 %v1940, %v2322
    %v2324 = vand.u32 %v2323, 4294901760
    %2325 = vmatmul.mubr.f32.gmra.mxu0 %v2324
    %v2326 = vpop.f32.mrf.mxu0
    %v2327 = vadd.f32 %v2230, %v2326
    %v2328 = vpop.f32.mrf.mxu0
    %2329 = vmatprep.mubr.f32.mxu0 0.0
    %v2330 = vand.u32 %v1943, 4294901760
    %v2331 = vsub.f32 %v1943, %v2330
    %v2332 = vand.u32 %v2331, 4294901760
    %2333 = vmatmul.mubr.f32.gmra.mxu0 %v2332
    %v2334 = vpop.f32.mrf.mxu0
    %v2335 = vadd.f32 %v2237, %v2334
    %v2336 = vpop.f32.mrf.mxu0
    %2337 = vdwg.mxu0
    %2338 = vmatprep.subr.mxu0 0.0
    %2339 = vmatpush1.msra.mxu0 0.0
    %2340 = vmatprep.subr.mxu0 0.0
    %2341 = vmatpush1.msra.mxu0 0.0
    %2342 = vmatprep.subr.mxu0 0.0
    %2343 = vmatpush1.msra.mxu0 0.0
    %2344 = vmatprep.subr.mxu0 0.0
    %2345 = vmatpush1.msra.mxu0 0.0
    %2346 = vmatprep.subr.mxu0 0.0
    %2347 = vmatpush1.msra.mxu0 0.0
    %2348 = vmatprep.subr.mxu0 0.0
    %2349 = vmatpush1.msra.mxu0 0.0
    %2350 = vmatprep.subr.mxu0 0.0
    %2351 = vmatpush1.msra.mxu0 0.0
    %2352 = vmatprep.subr.mxu0 0.0
    %2353 = vmatpush1.msra.mxu0 0.0
    %2354 = vmatprep.subr.mxu0 0.0
    %2355 = vmatpush1.msra.mxu0 0.0
    %2356 = vmatprep.subr.mxu0 0.0
    %2357 = vmatpush1.msra.mxu0 0.0
    %2358 = vmatprep.subr.mxu0 0.0
    %2359 = vmatpush1.msra.mxu0 0.0
    %2360 = vmatprep.subr.mxu0 0.0
    %2361 = vmatpush1.msra.mxu0 0.0
    %2362 = vmatprep.subr.mxu0 0.0
    %2363 = vmatpush1.msra.mxu0 0.0
    %2364 = vmatprep.subr.mxu0 0.0
    %2365 = vmatpush1.msra.mxu0 0.0
    %2366 = vmatprep.subr.mxu0 0.0
    %2367 = vmatpush1.msra.mxu0 0.0
    %2368 = vmatprep.subr.mxu0 0.0
    %v2369 = vand.u32 %v1931, 4294901760
    %v2370 = vsub.f32 %v1931, %v2369
    %v2371 = vand.u32 %v2370, 4294901760
    %2372 = vmatpush1.msra.mxu0 %v2371
    %2373 = vmatprep.subr.mxu0 0.0
    %2374 = vmatpush2.msra.mxu0 0.0
    %2375 = vmatprep.subr.mxu0 0.0
    %2376 = vmatpush2.msra.mxu0 0.0
    %2377 = vmatprep.subr.mxu0 0.0
    %2378 = vmatpush2.msra.mxu0 0.0
    %2379 = vmatprep.subr.mxu0 0.0
    %2380 = vmatpush2.msra.mxu0 0.0
    %2381 = vmatprep.subr.mxu0 0.0
    %2382 = vmatpush2.msra.mxu0 0.0
    %2383 = vmatprep.subr.mxu0 0.0
    %2384 = vmatpush2.msra.mxu0 0.0
    %2385 = vmatprep.subr.mxu0 0.0
    %2386 = vmatpush2.msra.mxu0 0.0
    %2387 = vmatprep.subr.mxu0 0.0
    %2388 = vmatpush2.msra.mxu0 0.0
    %2389 = vmatprep.subr.mxu0 0.0
    %2390 = vmatpush2.msra.mxu0 0.0
    %2391 = vmatprep.subr.mxu0 0.0
    %2392 = vmatpush2.msra.mxu0 0.0
    %2393 = vmatprep.subr.mxu0 0.0
    %2394 = vmatpush2.msra.mxu0 0.0
    %2395 = vmatprep.subr.mxu0 0.0
    %2396 = vmatpush2.msra.mxu0 0.0
    %2397 = vmatprep.subr.mxu0 0.0
    %2398 = vmatpush2.msra.mxu0 0.0
    %2399 = vmatprep.subr.mxu0 0.0
    %2400 = vmatpush2.msra.mxu0 0.0
    %2401 = vmatprep.subr.mxu0 0.0
    %2402 = vmatpush2.msra.mxu0 0.0
    %2403 = vmatprep.subr.mxu0 0.0
    %2404 = vmatpush2.msra.mxu0 0.0
    %2405 = vmatprep.mubr.f32.mxu0 0.0
    %v2406 = vand.u32 %v1934, 4294901760
    %2407 = vmatmul.mubr.f32.gmra.mxu0 %v2406
    %v2408 = vpop.f32.mrf.mxu0
    %v2409 = vadd.f32 %v2311, %v2408
    %v2410 = vpop.f32.mrf.mxu0
    %2411 = vmatprep.mubr.f32.mxu0 0.0
    %v2412 = vand.u32 %v1937, 4294901760
    %2413 = vmatmul.mubr.f32.gmra.mxu0 %v2412
    %v2414 = vpop.f32.mrf.mxu0
    %v2415 = vadd.f32 %v2319, %v2414
    %v2416 = vpop.f32.mrf.mxu0
    %2417 = vmatprep.mubr.f32.mxu0 0.0
    %v2418 = vand.u32 %v1940, 4294901760
    %2419 = vmatmul.mubr.f32.gmra.mxu0 %v2418
    %v2420 = vpop.f32.mrf.mxu0
    %v2421 = vadd.f32 %v2327, %v2420
    %v2422 = vpop.f32.mrf.mxu0
    %2423 = vmatprep.mubr.f32.mxu0 0.0
    %v2424 = vand.u32 %v1943, 4294901760
    %2425 = vmatmul.mubr.f32.gmra.mxu0 %v2424
    %v2426 = vpop.f32.mrf.mxu0
    %v2427 = vadd.f32 %v2335, %v2426
    %v2428 = vpop.f32.mrf.mxu0
    %2429 = vdwg.mxu0
    %2430 = vmatprep.subr.mxu0 0.0
    %2431 = vmatpush1.msra.mxu0 0.0
    %2432 = vmatprep.subr.mxu0 0.0
    %2433 = vmatpush1.msra.mxu0 0.0
    %2434 = vmatprep.subr.mxu0 0.0
    %2435 = vmatpush1.msra.mxu0 0.0
    %2436 = vmatprep.subr.mxu0 0.0
    %2437 = vmatpush1.msra.mxu0 0.0
    %2438 = vmatprep.subr.mxu0 0.0
    %2439 = vmatpush1.msra.mxu0 0.0
    %2440 = vmatprep.subr.mxu0 0.0
    %2441 = vmatpush1.msra.mxu0 0.0
    %2442 = vmatprep.subr.mxu0 0.0
    %2443 = vmatpush1.msra.mxu0 0.0
    %2444 = vmatprep.subr.mxu0 0.0
    %2445 = vmatpush1.msra.mxu0 0.0
    %2446 = vmatprep.subr.mxu0 0.0
    %2447 = vmatpush1.msra.mxu0 0.0
    %2448 = vmatprep.subr.mxu0 0.0
    %2449 = vmatpush1.msra.mxu0 0.0
    %2450 = vmatprep.subr.mxu0 0.0
    %2451 = vmatpush1.msra.mxu0 0.0
    %2452 = vmatprep.subr.mxu0 0.0
    %2453 = vmatpush1.msra.mxu0 0.0
    %2454 = vmatprep.subr.mxu0 0.0
    %2455 = vmatpush1.msra.mxu0 0.0
    %2456 = vmatprep.subr.mxu0 0.0
    %2457 = vmatpush1.msra.mxu0 0.0
    %2458 = vmatprep.subr.mxu0 0.0
    %2459 = vmatpush1.msra.mxu0 0.0
    %2460 = vmatprep.subr.mxu0 0.0
    %v2461 = vand.u32 %v1931, 4294901760
    %2462 = vmatpush1.msra.mxu0 %v2461
    %2463 = vmatprep.subr.mxu0 0.0
    %2464 = vmatpush2.msra.mxu0 0.0
    %2465 = vmatprep.subr.mxu0 0.0
    %2466 = vmatpush2.msra.mxu0 0.0
    %2467 = vmatprep.subr.mxu0 0.0
    %2468 = vmatpush2.msra.mxu0 0.0
    %2469 = vmatprep.subr.mxu0 0.0
    %2470 = vmatpush2.msra.mxu0 0.0
    %2471 = vmatprep.subr.mxu0 0.0
    %2472 = vmatpush2.msra.mxu0 0.0
    %2473 = vmatprep.subr.mxu0 0.0
    %2474 = vmatpush2.msra.mxu0 0.0
    %2475 = vmatprep.subr.mxu0 0.0
    %2476 = vmatpush2.msra.mxu0 0.0
    %2477 = vmatprep.subr.mxu0 0.0
    %2478 = vmatpush2.msra.mxu0 0.0
    %2479 = vmatprep.subr.mxu0 0.0
    %2480 = vmatpush2.msra.mxu0 0.0
    %2481 = vmatprep.subr.mxu0 0.0
    %2482 = vmatpush2.msra.mxu0 0.0
    %2483 = vmatprep.subr.mxu0 0.0
    %2484 = vmatpush2.msra.mxu0 0.0
    %2485 = vmatprep.subr.mxu0 0.0
    %2486 = vmatpush2.msra.mxu0 0.0
    %2487 = vmatprep.subr.mxu0 0.0
    %2488 = vmatpush2.msra.mxu0 0.0
    %2489 = vmatprep.subr.mxu0 0.0
    %2490 = vmatpush2.msra.mxu0 0.0
    %2491 = vmatprep.subr.mxu0 0.0
    %2492 = vmatpush2.msra.mxu0 0.0
    %2493 = vmatprep.subr.mxu0 0.0
    %2494 = vmatpush2.msra.mxu0 0.0
    %2495 = vmatprep.mubr.f32.mxu0 0.0
    %v2496 = vand.u32 %v1934, 4294901760
    %2497 = vmatmul.mubr.f32.gmra.mxu0 %v2496
    %v2498 = vpop.f32.mrf.mxu0
    %v2499 = vadd.f32 %v2409, %v2498
    %v2500 = vpop.f32.mrf.mxu0
    %2501 = vmatprep.mubr.f32.mxu0 0.0
    %v2502 = vand.u32 %v1937, 4294901760
    %2503 = vmatmul.mubr.f32.gmra.mxu0 %v2502
    %v2504 = vpop.f32.mrf.mxu0
    %v2505 = vadd.f32 %v2415, %v2504
    %v2506 = vpop.f32.mrf.mxu0
    %2507 = vmatprep.mubr.f32.mxu0 0.0
    %v2508 = vand.u32 %v1940, 4294901760
    %2509 = vmatmul.mubr.f32.gmra.mxu0 %v2508
    %v2510 = vpop.f32.mrf.mxu0
    %v2511 = vadd.f32 %v2421, %v2510
    %v2512 = vpop.f32.mrf.mxu0
    %2513 = vmatprep.mubr.f32.mxu0 0.0
    %v2514 = vand.u32 %v1943, 4294901760
    %2515 = vmatmul.mubr.f32.gmra.mxu0 %v2514
    %v2516 = vpop.f32.mrf.mxu0
    %v2517 = vadd.f32 %v2427, %v2516
    %v2518 = vpop.f32.mrf.mxu0
    %2519 = vdwg.mxu0
    %2520 = vrot.lane.b32.xlu0 %v638, 64
    %v2521 = vpop.permute.xlu0 %2520
    %v2524 = vsel %vm1841, %v1923, 0
    %v2527 = vsel %vm1841, %v1925, 0
    %v2530 = vsel %vm1841, %v1927, 0
    %v2533 = vsel %vm1841, %v1929, 0
    %2535 = vmatprep.subr.mxu0 0.0
    %2536 = vmatpush1.msra.mxu0 0.0
    %2537 = vmatprep.subr.mxu0 0.0
    %2538 = vmatpush1.msra.mxu0 0.0
    %2539 = vmatprep.subr.mxu0 0.0
    %2540 = vmatpush1.msra.mxu0 0.0
    %2541 = vmatprep.subr.mxu0 0.0
    %2542 = vmatpush1.msra.mxu0 0.0
    %2543 = vmatprep.subr.mxu0 0.0
    %2544 = vmatpush1.msra.mxu0 0.0
    %2545 = vmatprep.subr.mxu0 0.0
    %2546 = vmatpush1.msra.mxu0 0.0
    %2547 = vmatprep.subr.mxu0 0.0
    %2548 = vmatpush1.msra.mxu0 0.0
    %2549 = vmatprep.subr.mxu0 0.0
    %2550 = vmatpush1.msra.mxu0 0.0
    %2551 = vmatprep.subr.mxu0 0.0
    %2552 = vmatpush1.msra.mxu0 0.0
    %2553 = vmatprep.subr.mxu0 0.0
    %2554 = vmatpush1.msra.mxu0 0.0
    %2555 = vmatprep.subr.mxu0 0.0
    %2556 = vmatpush1.msra.mxu0 0.0
    %2557 = vmatprep.subr.mxu0 0.0
    %2558 = vmatpush1.msra.mxu0 0.0
    %2559 = vmatprep.subr.mxu0 0.0
    %2560 = vmatpush1.msra.mxu0 0.0
    %2561 = vmatprep.subr.mxu0 0.0
    %2562 = vmatpush1.msra.mxu0 0.0
    %2563 = vmatprep.subr.mxu0 0.0
    %2564 = vmatpush1.msra.mxu0 0.0
    %2565 = vmatprep.subr.mxu0 0.0
    %v2566 = vand.u32 %v2521, 4294901760
    %2567 = vmatpush1.msra.mxu0 %v2566
    %2568 = vmatprep.subr.mxu0 0.0
    %2569 = vmatpush2.msra.mxu0 0.0
    %2570 = vmatprep.subr.mxu0 0.0
    %2571 = vmatpush2.msra.mxu0 0.0
    %2572 = vmatprep.subr.mxu0 0.0
    %2573 = vmatpush2.msra.mxu0 0.0
    %2574 = vmatprep.subr.mxu0 0.0
    %2575 = vmatpush2.msra.mxu0 0.0
    %2576 = vmatprep.subr.mxu0 0.0
    %2577 = vmatpush2.msra.mxu0 0.0
    %2578 = vmatprep.subr.mxu0 0.0
    %2579 = vmatpush2.msra.mxu0 0.0
    %2580 = vmatprep.subr.mxu0 0.0
    %2581 = vmatpush2.msra.mxu0 0.0
    %2582 = vmatprep.subr.mxu0 0.0
    %2583 = vmatpush2.msra.mxu0 0.0
    %2584 = vmatprep.subr.mxu0 0.0
    %2585 = vmatpush2.msra.mxu0 0.0
    %2586 = vmatprep.subr.mxu0 0.0
    %2587 = vmatpush2.msra.mxu0 0.0
    %2588 = vmatprep.subr.mxu0 0.0
    %2589 = vmatpush2.msra.mxu0 0.0
    %2590 = vmatprep.subr.mxu0 0.0
    %2591 = vmatpush2.msra.mxu0 0.0
    %2592 = vmatprep.subr.mxu0 0.0
    %2593 = vmatpush2.msra.mxu0 0.0
    %2594 = vmatprep.subr.mxu0 0.0
    %2595 = vmatpush2.msra.mxu0 0.0
    %2596 = vmatprep.subr.mxu0 0.0
    %2597 = vmatpush2.msra.mxu0 0.0
    %2598 = vmatprep.subr.mxu0 0.0
    %2599 = vmatpush2.msra.mxu0 0.0
    %2600 = vmatprep.mubr.f32.mxu0 0.0
    %v2601 = vand.u32 %v2524, 4294901760
    %v2602 = vsub.f32 %v2524, %v2601
    %v2603 = vand.u32 %v2602, 4294901760
    %v2604 = vsub.f32 %v2602, %v2603
    %v2605 = vand.u32 %v2604, 4294901760
    %2606 = vmatmul.mubr.f32.gmra.mxu0 %v2605
    %v2607 = vpop.f32.mrf.mxu0
    %v2608 = vadd.f32 0.0, %v2607
    %v2609 = vpop.f32.mrf.mxu0
    %2610 = vmatprep.mubr.f32.mxu0 0.0
    %v2611 = vand.u32 %v2527, 4294901760
    %v2612 = vsub.f32 %v2527, %v2611
    %v2613 = vand.u32 %v2612, 4294901760
    %v2614 = vsub.f32 %v2612, %v2613
    %v2615 = vand.u32 %v2614, 4294901760
    %2616 = vmatmul.mubr.f32.gmra.mxu0 %v2615
    %v2617 = vpop.f32.mrf.mxu0
    %v2618 = vadd.f32 0.0, %v2617
    %v2619 = vpop.f32.mrf.mxu0
    %2620 = vmatprep.mubr.f32.mxu0 0.0
    %v2621 = vand.u32 %v2530, 4294901760
    %v2622 = vsub.f32 %v2530, %v2621
    %v2623 = vand.u32 %v2622, 4294901760
    %v2624 = vsub.f32 %v2622, %v2623
    %v2625 = vand.u32 %v2624, 4294901760
    %2626 = vmatmul.mubr.f32.gmra.mxu0 %v2625
    %v2627 = vpop.f32.mrf.mxu0
    %v2628 = vadd.f32 0.0, %v2627
    %v2629 = vpop.f32.mrf.mxu0
    %2630 = vmatprep.mubr.f32.mxu0 0.0
    %v2631 = vand.u32 %v2533, 4294901760
    %v2632 = vsub.f32 %v2533, %v2631
    %v2633 = vand.u32 %v2632, 4294901760
    %v2634 = vsub.f32 %v2632, %v2633
    %v2635 = vand.u32 %v2634, 4294901760
    %2636 = vmatmul.mubr.f32.gmra.mxu0 %v2635
    %v2637 = vpop.f32.mrf.mxu0
    %v2638 = vadd.f32 0.0, %v2637
    %v2639 = vpop.f32.mrf.mxu0
    %2640 = vdwg.mxu0
    %2641 = vmatprep.subr.mxu0 0.0
    %2642 = vmatpush1.msra.mxu0 0.0
    %2643 = vmatprep.subr.mxu0 0.0
    %2644 = vmatpush1.msra.mxu0 0.0
    %2645 = vmatprep.subr.mxu0 0.0
    %2646 = vmatpush1.msra.mxu0 0.0
    %2647 = vmatprep.subr.mxu0 0.0
    %2648 = vmatpush1.msra.mxu0 0.0
    %2649 = vmatprep.subr.mxu0 0.0
    %2650 = vmatpush1.msra.mxu0 0.0
    %2651 = vmatprep.subr.mxu0 0.0
    %2652 = vmatpush1.msra.mxu0 0.0
    %2653 = vmatprep.subr.mxu0 0.0
    %2654 = vmatpush1.msra.mxu0 0.0
    %2655 = vmatprep.subr.mxu0 0.0
    %2656 = vmatpush1.msra.mxu0 0.0
    %2657 = vmatprep.subr.mxu0 0.0
    %2658 = vmatpush1.msra.mxu0 0.0
    %2659 = vmatprep.subr.mxu0 0.0
    %2660 = vmatpush1.msra.mxu0 0.0
    %2661 = vmatprep.subr.mxu0 0.0
    %2662 = vmatpush1.msra.mxu0 0.0
    %2663 = vmatprep.subr.mxu0 0.0
    %2664 = vmatpush1.msra.mxu0 0.0
    %2665 = vmatprep.subr.mxu0 0.0
    %2666 = vmatpush1.msra.mxu0 0.0
    %2667 = vmatprep.subr.mxu0 0.0
    %2668 = vmatpush1.msra.mxu0 0.0
    %2669 = vmatprep.subr.mxu0 0.0
    %2670 = vmatpush1.msra.mxu0 0.0
    %2671 = vmatprep.subr.mxu0 0.0
    %v2672 = vand.u32 %v2521, 4294901760
    %v2673 = vsub.f32 %v2521, %v2672
    %v2674 = vand.u32 %v2673, 4294901760
    %v2675 = vsub.f32 %v2673, %v2674
    %v2676 = vand.u32 %v2675, 4294901760
    %2677 = vmatpush1.msra.mxu0 %v2676
    %2678 = vmatprep.subr.mxu0 0.0
    %2679 = vmatpush2.msra.mxu0 0.0
    %2680 = vmatprep.subr.mxu0 0.0
    %2681 = vmatpush2.msra.mxu0 0.0
    %2682 = vmatprep.subr.mxu0 0.0
    %2683 = vmatpush2.msra.mxu0 0.0
    %2684 = vmatprep.subr.mxu0 0.0
    %2685 = vmatpush2.msra.mxu0 0.0
    %2686 = vmatprep.subr.mxu0 0.0
    %2687 = vmatpush2.msra.mxu0 0.0
    %2688 = vmatprep.subr.mxu0 0.0
    %2689 = vmatpush2.msra.mxu0 0.0
    %2690 = vmatprep.subr.mxu0 0.0
    %2691 = vmatpush2.msra.mxu0 0.0
    %2692 = vmatprep.subr.mxu0 0.0
    %2693 = vmatpush2.msra.mxu0 0.0
    %2694 = vmatprep.subr.mxu0 0.0
    %2695 = vmatpush2.msra.mxu0 0.0
    %2696 = vmatprep.subr.mxu0 0.0
    %2697 = vmatpush2.msra.mxu0 0.0
    %2698 = vmatprep.subr.mxu0 0.0
    %2699 = vmatpush2.msra.mxu0 0.0
    %2700 = vmatprep.subr.mxu0 0.0
    %2701 = vmatpush2.msra.mxu0 0.0
    %2702 = vmatprep.subr.mxu0 0.0
    %2703 = vmatpush2.msra.mxu0 0.0
    %2704 = vmatprep.subr.mxu0 0.0
    %2705 = vmatpush2.msra.mxu0 0.0
    %2706 = vmatprep.subr.mxu0 0.0
    %2707 = vmatpush2.msra.mxu0 0.0
    %2708 = vmatprep.subr.mxu0 0.0
    %2709 = vmatpush2.msra.mxu0 0.0
    %2710 = vmatprep.mubr.f32.mxu0 0.0
    %v2711 = vand.u32 %v2524, 4294901760
    %2712 = vmatmul.mubr.f32.gmra.mxu0 %v2711
    %v2713 = vpop.f32.mrf.mxu0
    %v2714 = vadd.f32 %v2608, %v2713
    %v2715 = vpop.f32.mrf.mxu0
    %2716 = vmatprep.mubr.f32.mxu0 0.0
    %v2717 = vand.u32 %v2527, 4294901760
    %2718 = vmatmul.mubr.f32.gmra.mxu0 %v2717
    %v2719 = vpop.f32.mrf.mxu0
    %v2720 = vadd.f32 %v2618, %v2719
    %v2721 = vpop.f32.mrf.mxu0
    %2722 = vmatprep.mubr.f32.mxu0 0.0
    %v2723 = vand.u32 %v2530, 4294901760
    %2724 = vmatmul.mubr.f32.gmra.mxu0 %v2723
    %v2725 = vpop.f32.mrf.mxu0
    %v2726 = vadd.f32 %v2628, %v2725
    %v2727 = vpop.f32.mrf.mxu0
    %2728 = vmatprep.mubr.f32.mxu0 0.0
    %v2729 = vand.u32 %v2533, 4294901760
    %2730 = vmatmul.mubr.f32.gmra.mxu0 %v2729
    %v2731 = vpop.f32.mrf.mxu0
    %v2732 = vadd.f32 %v2638, %v2731
    %v2733 = vpop.f32.mrf.mxu0
    %2734 = vdwg.mxu0
    %2735 = vmatprep.subr.mxu0 0.0
    %2736 = vmatpush1.msra.mxu0 0.0
    %2737 = vmatprep.subr.mxu0 0.0
    %2738 = vmatpush1.msra.mxu0 0.0
    %2739 = vmatprep.subr.mxu0 0.0
    %2740 = vmatpush1.msra.mxu0 0.0
    %2741 = vmatprep.subr.mxu0 0.0
    %2742 = vmatpush1.msra.mxu0 0.0
    %2743 = vmatprep.subr.mxu0 0.0
    %2744 = vmatpush1.msra.mxu0 0.0
    %2745 = vmatprep.subr.mxu0 0.0
    %2746 = vmatpush1.msra.mxu0 0.0
    %2747 = vmatprep.subr.mxu0 0.0
    %2748 = vmatpush1.msra.mxu0 0.0
    %2749 = vmatprep.subr.mxu0 0.0
    %2750 = vmatpush1.msra.mxu0 0.0
    %2751 = vmatprep.subr.mxu0 0.0
    %2752 = vmatpush1.msra.mxu0 0.0
    %2753 = vmatprep.subr.mxu0 0.0
    %2754 = vmatpush1.msra.mxu0 0.0
    %2755 = vmatprep.subr.mxu0 0.0
    %2756 = vmatpush1.msra.mxu0 0.0
    %2757 = vmatprep.subr.mxu0 0.0
    %2758 = vmatpush1.msra.mxu0 0.0
    %2759 = vmatprep.subr.mxu0 0.0
    %2760 = vmatpush1.msra.mxu0 0.0
    %2761 = vmatprep.subr.mxu0 0.0
    %2762 = vmatpush1.msra.mxu0 0.0
    %2763 = vmatprep.subr.mxu0 0.0
    %2764 = vmatpush1.msra.mxu0 0.0
    %2765 = vmatprep.subr.mxu0 0.0
    %v2766 = vand.u32 %v2521, 4294901760
    %v2767 = vsub.f32 %v2521, %v2766
    %2768 = vmatpush1.msra.mxu0 %v2767
    %2769 = vmatprep.subr.mxu0 0.0
    %2770 = vmatpush2.msra.mxu0 0.0
    %2771 = vmatprep.subr.mxu0 0.0
    %2772 = vmatpush2.msra.mxu0 0.0
    %2773 = vmatprep.subr.mxu0 0.0
    %2774 = vmatpush2.msra.mxu0 0.0
    %2775 = vmatprep.subr.mxu0 0.0
    %2776 = vmatpush2.msra.mxu0 0.0
    %2777 = vmatprep.subr.mxu0 0.0
    %2778 = vmatpush2.msra.mxu0 0.0
    %2779 = vmatprep.subr.mxu0 0.0
    %2780 = vmatpush2.msra.mxu0 0.0
    %2781 = vmatprep.subr.mxu0 0.0
    %2782 = vmatpush2.msra.mxu0 0.0
    %2783 = vmatprep.subr.mxu0 0.0
    %2784 = vmatpush2.msra.mxu0 0.0
    %2785 = vmatprep.subr.mxu0 0.0
    %2786 = vmatpush2.msra.mxu0 0.0
    %2787 = vmatprep.subr.mxu0 0.0
    %2788 = vmatpush2.msra.mxu0 0.0
    %2789 = vmatprep.subr.mxu0 0.0
    %2790 = vmatpush2.msra.mxu0 0.0
    %2791 = vmatprep.subr.mxu0 0.0
    %2792 = vmatpush2.msra.mxu0 0.0
    %2793 = vmatprep.subr.mxu0 0.0
    %2794 = vmatpush2.msra.mxu0 0.0
    %2795 = vmatprep.subr.mxu0 0.0
    %2796 = vmatpush2.msra.mxu0 0.0
    %2797 = vmatprep.subr.mxu0 0.0
    %2798 = vmatpush2.msra.mxu0 0.0
    %2799 = vmatprep.subr.mxu0 0.0
    %2800 = vmatpush2.msra.mxu0 0.0
    %2801 = vmatprep.mubr.f32.mxu0 0.0
    %v2802 = vand.u32 %v2524, 4294901760
    %v2803 = vsub.f32 %v2524, %v2802
    %2804 = vmatmul.mubr.f32.gmra.mxu0 %v2803
    %v2805 = vpop.f32.mrf.mxu0
    %v2806 = vadd.f32 %v2714, %v2805
    %v2807 = vpop.f32.mrf.mxu0
    %2808 = vmatprep.mubr.f32.mxu0 0.0
    %v2809 = vand.u32 %v2527, 4294901760
    %v2810 = vsub.f32 %v2527, %v2809
    %2811 = vmatmul.mubr.f32.gmra.mxu0 %v2810
    %v2812 = vpop.f32.mrf.mxu0
    %v2813 = vadd.f32 %v2720, %v2812
    %v2814 = vpop.f32.mrf.mxu0
    %2815 = vmatprep.mubr.f32.mxu0 0.0
    %v2816 = vand.u32 %v2530, 4294901760
    %v2817 = vsub.f32 %v2530, %v2816
    %2818 = vmatmul.mubr.f32.gmra.mxu0 %v2817
    %v2819 = vpop.f32.mrf.mxu0
    %v2820 = vadd.f32 %v2726, %v2819
    %v2821 = vpop.f32.mrf.mxu0
    %2822 = vmatprep.mubr.f32.mxu0 0.0
    %v2823 = vand.u32 %v2533, 4294901760
    %v2824 = vsub.f32 %v2533, %v2823
    %2825 = vmatmul.mubr.f32.gmra.mxu0 %v2824
    %v2826 = vpop.f32.mrf.mxu0
    %v2827 = vadd.f32 %v2732, %v2826
    %v2828 = vpop.f32.mrf.mxu0
    %2829 = vdwg.mxu0
    %2830 = vmatprep.subr.mxu0 0.0
    %2831 = vmatpush1.msra.mxu0 0.0
    %2832 = vmatprep.subr.mxu0 0.0
    %2833 = vmatpush1.msra.mxu0 0.0
    %2834 = vmatprep.subr.mxu0 0.0
    %2835 = vmatpush1.msra.mxu0 0.0
    %2836 = vmatprep.subr.mxu0 0.0
    %2837 = vmatpush1.msra.mxu0 0.0
    %2838 = vmatprep.subr.mxu0 0.0
    %2839 = vmatpush1.msra.mxu0 0.0
    %2840 = vmatprep.subr.mxu0 0.0
    %2841 = vmatpush1.msra.mxu0 0.0
    %2842 = vmatprep.subr.mxu0 0.0
    %2843 = vmatpush1.msra.mxu0 0.0
    %2844 = vmatprep.subr.mxu0 0.0
    %2845 = vmatpush1.msra.mxu0 0.0
    %2846 = vmatprep.subr.mxu0 0.0
    %2847 = vmatpush1.msra.mxu0 0.0
    %2848 = vmatprep.subr.mxu0 0.0
    %2849 = vmatpush1.msra.mxu0 0.0
    %2850 = vmatprep.subr.mxu0 0.0
    %2851 = vmatpush1.msra.mxu0 0.0
    %2852 = vmatprep.subr.mxu0 0.0
    %2853 = vmatpush1.msra.mxu0 0.0
    %2854 = vmatprep.subr.mxu0 0.0
    %2855 = vmatpush1.msra.mxu0 0.0
    %2856 = vmatprep.subr.mxu0 0.0
    %2857 = vmatpush1.msra.mxu0 0.0
    %2858 = vmatprep.subr.mxu0 0.0
    %2859 = vmatpush1.msra.mxu0 0.0
    %2860 = vmatprep.subr.mxu0 0.0
    %v2861 = vand.u32 %v2521, 4294901760
    %2862 = vmatpush1.msra.mxu0 %v2861
    %2863 = vmatprep.subr.mxu0 0.0
    %2864 = vmatpush2.msra.mxu0 0.0
    %2865 = vmatprep.subr.mxu0 0.0
    %2866 = vmatpush2.msra.mxu0 0.0
    %2867 = vmatprep.subr.mxu0 0.0
    %2868 = vmatpush2.msra.mxu0 0.0
    %2869 = vmatprep.subr.mxu0 0.0
    %2870 = vmatpush2.msra.mxu0 0.0
    %2871 = vmatprep.subr.mxu0 0.0
    %2872 = vmatpush2.msra.mxu0 0.0
    %2873 = vmatprep.subr.mxu0 0.0
    %2874 = vmatpush2.msra.mxu0 0.0
    %2875 = vmatprep.subr.mxu0 0.0
    %2876 = vmatpush2.msra.mxu0 0.0
    %2877 = vmatprep.subr.mxu0 0.0
    %2878 = vmatpush2.msra.mxu0 0.0
    %2879 = vmatprep.subr.mxu0 0.0
    %2880 = vmatpush2.msra.mxu0 0.0
    %2881 = vmatprep.subr.mxu0 0.0
    %2882 = vmatpush2.msra.mxu0 0.0
    %2883 = vmatprep.subr.mxu0 0.0
    %2884 = vmatpush2.msra.mxu0 0.0
    %2885 = vmatprep.subr.mxu0 0.0
    %2886 = vmatpush2.msra.mxu0 0.0
    %2887 = vmatprep.subr.mxu0 0.0
    %2888 = vmatpush2.msra.mxu0 0.0
    %2889 = vmatprep.subr.mxu0 0.0
    %2890 = vmatpush2.msra.mxu0 0.0
    %2891 = vmatprep.subr.mxu0 0.0
    %2892 = vmatpush2.msra.mxu0 0.0
    %2893 = vmatprep.subr.mxu0 0.0
    %2894 = vmatpush2.msra.mxu0 0.0
    %2895 = vmatprep.mubr.f32.mxu0 0.0
    %v2896 = vand.u32 %v2524, 4294901760
    %v2897 = vsub.f32 %v2524, %v2896
    %v2898 = vand.u32 %v2897, 4294901760
    %2899 = vmatmul.mubr.f32.gmra.mxu0 %v2898
    %v2900 = vpop.f32.mrf.mxu0
    %v2901 = vadd.f32 %v2806, %v2900
    %v2902 = vpop.f32.mrf.mxu0
    %2903 = vmatprep.mubr.f32.mxu0 0.0
    %v2904 = vand.u32 %v2527, 4294901760
    %v2905 = vsub.f32 %v2527, %v2904
    %v2906 = vand.u32 %v2905, 4294901760
    %2907 = vmatmul.mubr.f32.gmra.mxu0 %v2906
    %v2908 = vpop.f32.mrf.mxu0
    %v2909 = vadd.f32 %v2813, %v2908
    %v2910 = vpop.f32.mrf.mxu0
    %2911 = vmatprep.mubr.f32.mxu0 0.0
    %v2912 = vand.u32 %v2530, 4294901760
    %v2913 = vsub.f32 %v2530, %v2912
    %v2914 = vand.u32 %v2913, 4294901760
    %2915 = vmatmul.mubr.f32.gmra.mxu0 %v2914
    %v2916 = vpop.f32.mrf.mxu0
    %v2917 = vadd.f32 %v2820, %v2916
    %v2918 = vpop.f32.mrf.mxu0
    %2919 = vmatprep.mubr.f32.mxu0 0.0
    %v2920 = vand.u32 %v2533, 4294901760
    %v2921 = vsub.f32 %v2533, %v2920
    %v2922 = vand.u32 %v2921, 4294901760
    %2923 = vmatmul.mubr.f32.gmra.mxu0 %v2922
    %v2924 = vpop.f32.mrf.mxu0
    %v2925 = vadd.f32 %v2827, %v2924
    %v2926 = vpop.f32.mrf.mxu0
    %2927 = vdwg.mxu0
    %2928 = vmatprep.subr.mxu0 0.0
    %2929 = vmatpush1.msra.mxu0 0.0
    %2930 = vmatprep.subr.mxu0 0.0
    %2931 = vmatpush1.msra.mxu0 0.0
    %2932 = vmatprep.subr.mxu0 0.0
    %2933 = vmatpush1.msra.mxu0 0.0
    %2934 = vmatprep.subr.mxu0 0.0
    %2935 = vmatpush1.msra.mxu0 0.0
    %2936 = vmatprep.subr.mxu0 0.0
    %2937 = vmatpush1.msra.mxu0 0.0
    %2938 = vmatprep.subr.mxu0 0.0
    %2939 = vmatpush1.msra.mxu0 0.0
    %2940 = vmatprep.subr.mxu0 0.0
    %2941 = vmatpush1.msra.mxu0 0.0
    %2942 = vmatprep.subr.mxu0 0.0
    %2943 = vmatpush1.msra.mxu0 0.0
    %2944 = vmatprep.subr.mxu0 0.0
    %2945 = vmatpush1.msra.mxu0 0.0
    %2946 = vmatprep.subr.mxu0 0.0
    %2947 = vmatpush1.msra.mxu0 0.0
    %2948 = vmatprep.subr.mxu0 0.0
    %2949 = vmatpush1.msra.mxu0 0.0
    %2950 = vmatprep.subr.mxu0 0.0
    %2951 = vmatpush1.msra.mxu0 0.0
    %2952 = vmatprep.subr.mxu0 0.0
    %2953 = vmatpush1.msra.mxu0 0.0
    %2954 = vmatprep.subr.mxu0 0.0
    %2955 = vmatpush1.msra.mxu0 0.0
    %2956 = vmatprep.subr.mxu0 0.0
    %2957 = vmatpush1.msra.mxu0 0.0
    %2958 = vmatprep.subr.mxu0 0.0
    %v2959 = vand.u32 %v2521, 4294901760
    %v2960 = vsub.f32 %v2521, %v2959
    %v2961 = vand.u32 %v2960, 4294901760
    %2962 = vmatpush1.msra.mxu0 %v2961
    %2963 = vmatprep.subr.mxu0 0.0
    %2964 = vmatpush2.msra.mxu0 0.0
    %2965 = vmatprep.subr.mxu0 0.0
    %2966 = vmatpush2.msra.mxu0 0.0
    %2967 = vmatprep.subr.mxu0 0.0
    %2968 = vmatpush2.msra.mxu0 0.0
    %2969 = vmatprep.subr.mxu0 0.0
    %2970 = vmatpush2.msra.mxu0 0.0
    %2971 = vmatprep.subr.mxu0 0.0
    %2972 = vmatpush2.msra.mxu0 0.0
    %2973 = vmatprep.subr.mxu0 0.0
    %2974 = vmatpush2.msra.mxu0 0.0
    %2975 = vmatprep.subr.mxu0 0.0
    %2976 = vmatpush2.msra.mxu0 0.0
    %2977 = vmatprep.subr.mxu0 0.0
    %2978 = vmatpush2.msra.mxu0 0.0
    %2979 = vmatprep.subr.mxu0 0.0
    %2980 = vmatpush2.msra.mxu0 0.0
    %2981 = vmatprep.subr.mxu0 0.0
    %2982 = vmatpush2.msra.mxu0 0.0
    %2983 = vmatprep.subr.mxu0 0.0
    %2984 = vmatpush2.msra.mxu0 0.0
    %2985 = vmatprep.subr.mxu0 0.0
    %2986 = vmatpush2.msra.mxu0 0.0
    %2987 = vmatprep.subr.mxu0 0.0
    %2988 = vmatpush2.msra.mxu0 0.0
    %2989 = vmatprep.subr.mxu0 0.0
    %2990 = vmatpush2.msra.mxu0 0.0
    %2991 = vmatprep.subr.mxu0 0.0
    %2992 = vmatpush2.msra.mxu0 0.0
    %2993 = vmatprep.subr.mxu0 0.0
    %2994 = vmatpush2.msra.mxu0 0.0
    %2995 = vmatprep.mubr.f32.mxu0 0.0
    %v2996 = vand.u32 %v2524, 4294901760
    %2997 = vmatmul.mubr.f32.gmra.mxu0 %v2996
    %v2998 = vpop.f32.mrf.mxu0
    %v2999 = vadd.f32 %v2901, %v2998
    %v3000 = vpop.f32.mrf.mxu0
    %3001 = vmatprep.mubr.f32.mxu0 0.0
    %v3002 = vand.u32 %v2527, 4294901760
    %3003 = vmatmul.mubr.f32.gmra.mxu0 %v3002
    %v3004 = vpop.f32.mrf.mxu0
    %v3005 = vadd.f32 %v2909, %v3004
    %v3006 = vpop.f32.mrf.mxu0
    %3007 = vmatprep.mubr.f32.mxu0 0.0
    %v3008 = vand.u32 %v2530, 4294901760
    %3009 = vmatmul.mubr.f32.gmra.mxu0 %v3008
    %v3010 = vpop.f32.mrf.mxu0
    %v3011 = vadd.f32 %v2917, %v3010
    %v3012 = vpop.f32.mrf.mxu0
    %3013 = vmatprep.mubr.f32.mxu0 0.0
    %v3014 = vand.u32 %v2533, 4294901760
    %3015 = vmatmul.mubr.f32.gmra.mxu0 %v3014
    %v3016 = vpop.f32.mrf.mxu0
    %v3017 = vadd.f32 %v2925, %v3016
    %v3018 = vpop.f32.mrf.mxu0
    %3019 = vdwg.mxu0
    %3020 = vmatprep.subr.mxu0 0.0
    %3021 = vmatpush1.msra.mxu0 0.0
    %3022 = vmatprep.subr.mxu0 0.0
    %3023 = vmatpush1.msra.mxu0 0.0
    %3024 = vmatprep.subr.mxu0 0.0
    %3025 = vmatpush1.msra.mxu0 0.0
    %3026 = vmatprep.subr.mxu0 0.0
    %3027 = vmatpush1.msra.mxu0 0.0
    %3028 = vmatprep.subr.mxu0 0.0
    %3029 = vmatpush1.msra.mxu0 0.0
    %3030 = vmatprep.subr.mxu0 0.0
    %3031 = vmatpush1.msra.mxu0 0.0
    %3032 = vmatprep.subr.mxu0 0.0
    %3033 = vmatpush1.msra.mxu0 0.0
    %3034 = vmatprep.subr.mxu0 0.0
    %3035 = vmatpush1.msra.mxu0 0.0
    %3036 = vmatprep.subr.mxu0 0.0
    %3037 = vmatpush1.msra.mxu0 0.0
    %3038 = vmatprep.subr.mxu0 0.0
    %3039 = vmatpush1.msra.mxu0 0.0
    %3040 = vmatprep.subr.mxu0 0.0
    %3041 = vmatpush1.msra.mxu0 0.0
    %3042 = vmatprep.subr.mxu0 0.0
    %3043 = vmatpush1.msra.mxu0 0.0
    %3044 = vmatprep.subr.mxu0 0.0
    %3045 = vmatpush1.msra.mxu0 0.0
    %3046 = vmatprep.subr.mxu0 0.0
    %3047 = vmatpush1.msra.mxu0 0.0
    %3048 = vmatprep.subr.mxu0 0.0
    %3049 = vmatpush1.msra.mxu0 0.0
    %3050 = vmatprep.subr.mxu0 0.0
    %v3051 = vand.u32 %v2521, 4294901760
    %3052 = vmatpush1.msra.mxu0 %v3051
    %3053 = vmatprep.subr.mxu0 0.0
    %3054 = vmatpush2.msra.mxu0 0.0
    %3055 = vmatprep.subr.mxu0 0.0
    %3056 = vmatpush2.msra.mxu0 0.0
    %3057 = vmatprep.subr.mxu0 0.0
    %3058 = vmatpush2.msra.mxu0 0.0
    %3059 = vmatprep.subr.mxu0 0.0
    %3060 = vmatpush2.msra.mxu0 0.0
    %3061 = vmatprep.subr.mxu0 0.0
    %3062 = vmatpush2.msra.mxu0 0.0
    %3063 = vmatprep.subr.mxu0 0.0
    %3064 = vmatpush2.msra.mxu0 0.0
    %3065 = vmatprep.subr.mxu0 0.0
    %3066 = vmatpush2.msra.mxu0 0.0
    %3067 = vmatprep.subr.mxu0 0.0
    %3068 = vmatpush2.msra.mxu0 0.0
    %3069 = vmatprep.subr.mxu0 0.0
    %3070 = vmatpush2.msra.mxu0 0.0
    %3071 = vmatprep.subr.mxu0 0.0
    %3072 = vmatpush2.msra.mxu0 0.0
    %3073 = vmatprep.subr.mxu0 0.0
    %3074 = vmatpush2.msra.mxu0 0.0
    %3075 = vmatprep.subr.mxu0 0.0
    %3076 = vmatpush2.msra.mxu0 0.0
    %3077 = vmatprep.subr.mxu0 0.0
    %3078 = vmatpush2.msra.mxu0 0.0
    %3079 = vmatprep.subr.mxu0 0.0
    %3080 = vmatpush2.msra.mxu0 0.0
    %3081 = vmatprep.subr.mxu0 0.0
    %3082 = vmatpush2.msra.mxu0 0.0
    %3083 = vmatprep.subr.mxu0 0.0
    %3084 = vmatpush2.msra.mxu0 0.0
    %3085 = vmatprep.mubr.f32.mxu0 0.0
    %v3086 = vand.u32 %v2524, 4294901760
    %3087 = vmatmul.mubr.f32.gmra.mxu0 %v3086
    %v3088 = vpop.f32.mrf.mxu0
    %v3089 = vadd.f32 %v2999, %v3088
    %v3090 = vpop.f32.mrf.mxu0
    %3091 = vmatprep.mubr.f32.mxu0 0.0
    %v3092 = vand.u32 %v2527, 4294901760
    %3093 = vmatmul.mubr.f32.gmra.mxu0 %v3092
    %v3094 = vpop.f32.mrf.mxu0
    %v3095 = vadd.f32 %v3005, %v3094
    %v3096 = vpop.f32.mrf.mxu0
    %3097 = vmatprep.mubr.f32.mxu0 0.0
    %v3098 = vand.u32 %v2530, 4294901760
    %3099 = vmatmul.mubr.f32.gmra.mxu0 %v3098
    %v3100 = vpop.f32.mrf.mxu0
    %v3101 = vadd.f32 %v3011, %v3100
    %v3102 = vpop.f32.mrf.mxu0
    %3103 = vmatprep.mubr.f32.mxu0 0.0
    %v3104 = vand.u32 %v2533, 4294901760
    %3105 = vmatmul.mubr.f32.gmra.mxu0 %v3104
    %v3106 = vpop.f32.mrf.mxu0
    %v3107 = vadd.f32 %v3017, %v3106
    %v3108 = vpop.f32.mrf.mxu0
    %3109 = vdwg.mxu0
    %v3110 = vmul.f32 %v2499, %v77
    %v3111 = vmul.f32 %v2505, %v78
    %v3112 = vmul.f32 %v2511, %v79
    %v3113 = vmul.f32 %v2517, %v80
    %v3114 = vmul.f32 %v3089, %v77
    %v3115 = vmul.f32 %v3095, %v78
    %v3116 = vmul.f32 %v3101, %v79
    %v3117 = vmul.f32 %v3107, %v80
    %v3118 = vsel %vm106, %v3110, 0.0
    %v3119 = vsel %vm106, %v3111, 0.0
    %v3120 = vadd.f32 %v3118, %v3119
    %v3121 = vsel %vm106, %v3112, 0.0
    %v3122 = vadd.f32 %v3120, %v3121
    %v3123 = vsel %vm106, %v3113, 0.0
    %v3124 = vadd.f32 %v3122, %v3123
    %v3125 = vsel %vm106, %v3114, 0.0
    %v3126 = vsel %vm106, %v3115, 0.0
    %v3127 = vadd.f32 %v3125, %v3126
    %v3128 = vsel %vm106, %v3116, 0.0
    %v3129 = vadd.f32 %v3127, %v3128
    %v3130 = vsel %vm106, %v3117, 0.0
    %v3131 = vadd.f32 %v3129, %v3130
    %v3132 = vlaneseq
    %v3133 = vshrl.u32 %v3132, 7
    %v3134 = vsub.s32 1, %v3133
    %v3135 = vrot.slane %v101, %v3134
    %v3137 = vsel %vm106, %v3124, 0
    %v3140 = vsel %vm106, %v3131, 0
    %3142 = vmatprep.subr.mxu0 0.0
    %3143 = vmatpush1.msra.mxu0 0.0
    %3144 = vmatprep.subr.mxu0 0.0
    %3145 = vmatpush1.msra.mxu0 0.0
    %3146 = vmatprep.subr.mxu0 0.0
    %3147 = vmatpush1.msra.mxu0 0.0
    %3148 = vmatprep.subr.mxu0 0.0
    %3149 = vmatpush1.msra.mxu0 0.0
    %3150 = vmatprep.subr.mxu0 0.0
    %3151 = vmatpush1.msra.mxu0 0.0
    %3152 = vmatprep.subr.mxu0 0.0
    %3153 = vmatpush1.msra.mxu0 0.0
    %3154 = vmatprep.subr.mxu0 0.0
    %3155 = vmatpush1.msra.mxu0 0.0
    %3156 = vmatprep.subr.mxu0 0.0
    %3157 = vmatpush1.msra.mxu0 0.0
    %3158 = vmatprep.subr.mxu0 0.0
    %3159 = vmatpush1.msra.mxu0 0.0
    %3160 = vmatprep.subr.mxu0 0.0
    %3161 = vmatpush1.msra.mxu0 0.0
    %3162 = vmatprep.subr.mxu0 0.0
    %3163 = vmatpush1.msra.mxu0 0.0
    %3164 = vmatprep.subr.mxu0 0.0
    %3165 = vmatpush1.msra.mxu0 0.0
    %3166 = vmatprep.subr.mxu0 0.0
    %v3167 = vand.u32 %v88, 4294901760
    %3168 = vmatpush1.msra.mxu0 %v3167
    %3169 = vmatprep.subr.mxu0 0.0
    %v3170 = vand.u32 %v87, 4294901760
    %3171 = vmatpush1.msra.mxu0 %v3170
    %3172 = vmatprep.subr.mxu0 0.0
    %v3173 = vand.u32 %v86, 4294901760
    %3174 = vmatpush1.msra.mxu0 %v3173
    %3175 = vmatprep.subr.mxu0 0.0
    %v3176 = vand.u32 %v85, 4294901760
    %3177 = vmatpush1.msra.mxu0 %v3176
    %3178 = vmatprep.subr.mxu0 0.0
    %3179 = vmatpush2.msra.mxu0 0.0
    %3180 = vmatprep.subr.mxu0 0.0
    %3181 = vmatpush2.msra.mxu0 0.0
    %3182 = vmatprep.subr.mxu0 0.0
    %3183 = vmatpush2.msra.mxu0 0.0
    %3184 = vmatprep.subr.mxu0 0.0
    %3185 = vmatpush2.msra.mxu0 0.0
    %3186 = vmatprep.subr.mxu0 0.0
    %3187 = vmatpush2.msra.mxu0 0.0
    %3188 = vmatprep.subr.mxu0 0.0
    %3189 = vmatpush2.msra.mxu0 0.0
    %3190 = vmatprep.subr.mxu0 0.0
    %3191 = vmatpush2.msra.mxu0 0.0
    %3192 = vmatprep.subr.mxu0 0.0
    %3193 = vmatpush2.msra.mxu0 0.0
    %3194 = vmatprep.subr.mxu0 0.0
    %3195 = vmatpush2.msra.mxu0 0.0
    %3196 = vmatprep.subr.mxu0 0.0
    %3197 = vmatpush2.msra.mxu0 0.0
    %3198 = vmatprep.subr.mxu0 0.0
    %3199 = vmatpush2.msra.mxu0 0.0
    %3200 = vmatprep.subr.mxu0 0.0
    %3201 = vmatpush2.msra.mxu0 0.0
    %3202 = vmatprep.subr.mxu0 0.0
    %3203 = vmatpush2.msra.mxu0 0.0
    %3204 = vmatprep.subr.mxu0 0.0
    %3205 = vmatpush2.msra.mxu0 0.0
    %3206 = vmatprep.subr.mxu0 0.0
    %3207 = vmatpush2.msra.mxu0 0.0
    %3208 = vmatprep.subr.mxu0 0.0
    %3209 = vmatpush2.msra.mxu0 0.0
    %3210 = vmatprep.mubr.f32.mxu0 0.0
    %v3211 = vand.u32 %v3137, 4294901760
    %v3212 = vsub.f32 %v3137, %v3211
    %v3213 = vand.u32 %v3212, 4294901760
    %v3214 = vsub.f32 %v3212, %v3213
    %v3215 = vand.u32 %v3214, 4294901760
    %3216 = vmatmul.mubr.f32.gmra.mxu0 %v3215
    %v3217 = vpop.f32.mrf.mxu0
    %v3218 = vadd.f32 %v3135, %v3217
    %v3219 = vpop.f32.mrf.mxu0
    %3220 = vmatprep.mubr.f32.mxu0 0.0
    %v3221 = vand.u32 %v3140, 4294901760
    %v3222 = vsub.f32 %v3140, %v3221
    %v3223 = vand.u32 %v3222, 4294901760
    %v3224 = vsub.f32 %v3222, %v3223
    %v3225 = vand.u32 %v3224, 4294901760
    %3226 = vmatmul.mubr.f32.gmra.mxu0 %v3225
    %v3227 = vpop.f32.mrf.mxu0
    %v3228 = vadd.f32 %v3135, %v3227
    %v3229 = vpop.f32.mrf.mxu0
    %3230 = vdwg.mxu0
    %3231 = vmatprep.subr.mxu0 0.0
    %3232 = vmatpush1.msra.mxu0 0.0
    %3233 = vmatprep.subr.mxu0 0.0
    %3234 = vmatpush1.msra.mxu0 0.0
    %3235 = vmatprep.subr.mxu0 0.0
    %3236 = vmatpush1.msra.mxu0 0.0
    %3237 = vmatprep.subr.mxu0 0.0
    %3238 = vmatpush1.msra.mxu0 0.0
    %3239 = vmatprep.subr.mxu0 0.0
    %3240 = vmatpush1.msra.mxu0 0.0
    %3241 = vmatprep.subr.mxu0 0.0
    %3242 = vmatpush1.msra.mxu0 0.0
    %3243 = vmatprep.subr.mxu0 0.0
    %3244 = vmatpush1.msra.mxu0 0.0
    %3245 = vmatprep.subr.mxu0 0.0
    %3246 = vmatpush1.msra.mxu0 0.0
    %3247 = vmatprep.subr.mxu0 0.0
    %3248 = vmatpush1.msra.mxu0 0.0
    %3249 = vmatprep.subr.mxu0 0.0
    %3250 = vmatpush1.msra.mxu0 0.0
    %3251 = vmatprep.subr.mxu0 0.0
    %3252 = vmatpush1.msra.mxu0 0.0
    %3253 = vmatprep.subr.mxu0 0.0
    %3254 = vmatpush1.msra.mxu0 0.0
    %3255 = vmatprep.subr.mxu0 0.0
    %v3256 = vand.u32 %v88, 4294901760
    %v3257 = vsub.f32 %v88, %v3256
    %v3258 = vand.u32 %v3257, 4294901760
    %v3259 = vsub.f32 %v3257, %v3258
    %v3260 = vand.u32 %v3259, 4294901760
    %3261 = vmatpush1.msra.mxu0 %v3260
    %3262 = vmatprep.subr.mxu0 0.0
    %v3263 = vand.u32 %v87, 4294901760
    %v3264 = vsub.f32 %v87, %v3263
    %v3265 = vand.u32 %v3264, 4294901760
    %v3266 = vsub.f32 %v3264, %v3265
    %v3267 = vand.u32 %v3266, 4294901760
    %3268 = vmatpush1.msra.mxu0 %v3267
    %3269 = vmatprep.subr.mxu0 0.0
    %v3270 = vand.u32 %v86, 4294901760
    %v3271 = vsub.f32 %v86, %v3270
    %v3272 = vand.u32 %v3271, 4294901760
    %v3273 = vsub.f32 %v3271, %v3272
    %v3274 = vand.u32 %v3273, 4294901760
    %3275 = vmatpush1.msra.mxu0 %v3274
    %3276 = vmatprep.subr.mxu0 0.0
    %v3277 = vand.u32 %v85, 4294901760
    %v3278 = vsub.f32 %v85, %v3277
    %v3279 = vand.u32 %v3278, 4294901760
    %v3280 = vsub.f32 %v3278, %v3279
    %v3281 = vand.u32 %v3280, 4294901760
    %3282 = vmatpush1.msra.mxu0 %v3281
    %3283 = vmatprep.subr.mxu0 0.0
    %3284 = vmatpush2.msra.mxu0 0.0
    %3285 = vmatprep.subr.mxu0 0.0
    %3286 = vmatpush2.msra.mxu0 0.0
    %3287 = vmatprep.subr.mxu0 0.0
    %3288 = vmatpush2.msra.mxu0 0.0
    %3289 = vmatprep.subr.mxu0 0.0
    %3290 = vmatpush2.msra.mxu0 0.0
    %3291 = vmatprep.subr.mxu0 0.0
    %3292 = vmatpush2.msra.mxu0 0.0
    %3293 = vmatprep.subr.mxu0 0.0
    %3294 = vmatpush2.msra.mxu0 0.0
    %3295 = vmatprep.subr.mxu0 0.0
    %3296 = vmatpush2.msra.mxu0 0.0
    %3297 = vmatprep.subr.mxu0 0.0
    %3298 = vmatpush2.msra.mxu0 0.0
    %3299 = vmatprep.subr.mxu0 0.0
    %3300 = vmatpush2.msra.mxu0 0.0
    %3301 = vmatprep.subr.mxu0 0.0
    %3302 = vmatpush2.msra.mxu0 0.0
    %3303 = vmatprep.subr.mxu0 0.0
    %3304 = vmatpush2.msra.mxu0 0.0
    %3305 = vmatprep.subr.mxu0 0.0
    %3306 = vmatpush2.msra.mxu0 0.0
    %3307 = vmatprep.subr.mxu0 0.0
    %3308 = vmatpush2.msra.mxu0 0.0
    %3309 = vmatprep.subr.mxu0 0.0
    %3310 = vmatpush2.msra.mxu0 0.0
    %3311 = vmatprep.subr.mxu0 0.0
    %3312 = vmatpush2.msra.mxu0 0.0
    %3313 = vmatprep.subr.mxu0 0.0
    %3314 = vmatpush2.msra.mxu0 0.0
    %3315 = vmatprep.mubr.f32.mxu0 0.0
    %v3316 = vand.u32 %v3137, 4294901760
    %3317 = vmatmul.mubr.f32.gmra.mxu0 %v3316
    %v3318 = vpop.f32.mrf.mxu0
    %v3319 = vadd.f32 %v3218, %v3318
    %v3320 = vpop.f32.mrf.mxu0
    %3321 = vmatprep.mubr.f32.mxu0 0.0
    %v3322 = vand.u32 %v3140, 4294901760
    %3323 = vmatmul.mubr.f32.gmra.mxu0 %v3322
    %v3324 = vpop.f32.mrf.mxu0
    %v3325 = vadd.f32 %v3228, %v3324
    %v3326 = vpop.f32.mrf.mxu0
    %3327 = vdwg.mxu0
    %3328 = vmatprep.subr.mxu0 0.0
    %3329 = vmatpush1.msra.mxu0 0.0
    %3330 = vmatprep.subr.mxu0 0.0
    %3331 = vmatpush1.msra.mxu0 0.0
    %3332 = vmatprep.subr.mxu0 0.0
    %3333 = vmatpush1.msra.mxu0 0.0
    %3334 = vmatprep.subr.mxu0 0.0
    %3335 = vmatpush1.msra.mxu0 0.0
    %3336 = vmatprep.subr.mxu0 0.0
    %3337 = vmatpush1.msra.mxu0 0.0
    %3338 = vmatprep.subr.mxu0 0.0
    %3339 = vmatpush1.msra.mxu0 0.0
    %3340 = vmatprep.subr.mxu0 0.0
    %3341 = vmatpush1.msra.mxu0 0.0
    %3342 = vmatprep.subr.mxu0 0.0
    %3343 = vmatpush1.msra.mxu0 0.0
    %3344 = vmatprep.subr.mxu0 0.0
    %3345 = vmatpush1.msra.mxu0 0.0
    %3346 = vmatprep.subr.mxu0 0.0
    %3347 = vmatpush1.msra.mxu0 0.0
    %3348 = vmatprep.subr.mxu0 0.0
    %3349 = vmatpush1.msra.mxu0 0.0
    %3350 = vmatprep.subr.mxu0 0.0
    %3351 = vmatpush1.msra.mxu0 0.0
    %3352 = vmatprep.subr.mxu0 0.0
    %v3353 = vand.u32 %v88, 4294901760
    %v3354 = vsub.f32 %v88, %v3353
    %3355 = vmatpush1.msra.mxu0 %v3354
    %3356 = vmatprep.subr.mxu0 0.0
    %v3357 = vand.u32 %v87, 4294901760
    %v3358 = vsub.f32 %v87, %v3357
    %3359 = vmatpush1.msra.mxu0 %v3358
    %3360 = vmatprep.subr.mxu0 0.0
    %v3361 = vand.u32 %v86, 4294901760
    %v3362 = vsub.f32 %v86, %v3361
    %3363 = vmatpush1.msra.mxu0 %v3362
    %3364 = vmatprep.subr.mxu0 0.0
    %v3365 = vand.u32 %v85, 4294901760
    %v3366 = vsub.f32 %v85, %v3365
    %3367 = vmatpush1.msra.mxu0 %v3366
    %3368 = vmatprep.subr.mxu0 0.0
    %3369 = vmatpush2.msra.mxu0 0.0
    %3370 = vmatprep.subr.mxu0 0.0
    %3371 = vmatpush2.msra.mxu0 0.0
    %3372 = vmatprep.subr.mxu0 0.0
    %3373 = vmatpush2.msra.mxu0 0.0
    %3374 = vmatprep.subr.mxu0 0.0
    %3375 = vmatpush2.msra.mxu0 0.0
    %3376 = vmatprep.subr.mxu0 0.0
    %3377 = vmatpush2.msra.mxu0 0.0
    %3378 = vmatprep.subr.mxu0 0.0
    %3379 = vmatpush2.msra.mxu0 0.0
    %3380 = vmatprep.subr.mxu0 0.0
    %3381 = vmatpush2.msra.mxu0 0.0
    %3382 = vmatprep.subr.mxu0 0.0
    %3383 = vmatpush2.msra.mxu0 0.0
    %3384 = vmatprep.subr.mxu0 0.0
    %3385 = vmatpush2.msra.mxu0 0.0
    %3386 = vmatprep.subr.mxu0 0.0
    %3387 = vmatpush2.msra.mxu0 0.0
    %3388 = vmatprep.subr.mxu0 0.0
    %3389 = vmatpush2.msra.mxu0 0.0
    %3390 = vmatprep.subr.mxu0 0.0
    %3391 = vmatpush2.msra.mxu0 0.0
    %3392 = vmatprep.subr.mxu0 0.0
    %3393 = vmatpush2.msra.mxu0 0.0
    %3394 = vmatprep.subr.mxu0 0.0
    %3395 = vmatpush2.msra.mxu0 0.0
    %3396 = vmatprep.subr.mxu0 0.0
    %3397 = vmatpush2.msra.mxu0 0.0
    %3398 = vmatprep.subr.mxu0 0.0
    %3399 = vmatpush2.msra.mxu0 0.0
    %3400 = vmatprep.mubr.f32.mxu0 0.0
    %v3401 = vand.u32 %v3137, 4294901760
    %v3402 = vsub.f32 %v3137, %v3401
    %3403 = vmatmul.mubr.f32.gmra.mxu0 %v3402
    %v3404 = vpop.f32.mrf.mxu0
    %v3405 = vadd.f32 %v3319, %v3404
    %v3406 = vpop.f32.mrf.mxu0
    %3407 = vmatprep.mubr.f32.mxu0 0.0
    %v3408 = vand.u32 %v3140, 4294901760
    %v3409 = vsub.f32 %v3140, %v3408
    %3410 = vmatmul.mubr.f32.gmra.mxu0 %v3409
    %v3411 = vpop.f32.mrf.mxu0
    %v3412 = vadd.f32 %v3325, %v3411
    %v3413 = vpop.f32.mrf.mxu0
    %3414 = vdwg.mxu0
    %3415 = vmatprep.subr.mxu0 0.0
    %3416 = vmatpush1.msra.mxu0 0.0
    %3417 = vmatprep.subr.mxu0 0.0
    %3418 = vmatpush1.msra.mxu0 0.0
    %3419 = vmatprep.subr.mxu0 0.0
    %3420 = vmatpush1.msra.mxu0 0.0
    %3421 = vmatprep.subr.mxu0 0.0
    %3422 = vmatpush1.msra.mxu0 0.0
    %3423 = vmatprep.subr.mxu0 0.0
    %3424 = vmatpush1.msra.mxu0 0.0
    %3425 = vmatprep.subr.mxu0 0.0
    %3426 = vmatpush1.msra.mxu0 0.0
    %3427 = vmatprep.subr.mxu0 0.0
    %3428 = vmatpush1.msra.mxu0 0.0
    %3429 = vmatprep.subr.mxu0 0.0
    %3430 = vmatpush1.msra.mxu0 0.0
    %3431 = vmatprep.subr.mxu0 0.0
    %3432 = vmatpush1.msra.mxu0 0.0
    %3433 = vmatprep.subr.mxu0 0.0
    %3434 = vmatpush1.msra.mxu0 0.0
    %3435 = vmatprep.subr.mxu0 0.0
    %3436 = vmatpush1.msra.mxu0 0.0
    %3437 = vmatprep.subr.mxu0 0.0
    %3438 = vmatpush1.msra.mxu0 0.0
    %3439 = vmatprep.subr.mxu0 0.0
    %v3440 = vand.u32 %v88, 4294901760
    %3441 = vmatpush1.msra.mxu0 %v3440
    %3442 = vmatprep.subr.mxu0 0.0
    %v3443 = vand.u32 %v87, 4294901760
    %3444 = vmatpush1.msra.mxu0 %v3443
    %3445 = vmatprep.subr.mxu0 0.0
    %v3446 = vand.u32 %v86, 4294901760
    %3447 = vmatpush1.msra.mxu0 %v3446
    %3448 = vmatprep.subr.mxu0 0.0
    %v3449 = vand.u32 %v85, 4294901760
    %3450 = vmatpush1.msra.mxu0 %v3449
    %3451 = vmatprep.subr.mxu0 0.0
    %3452 = vmatpush2.msra.mxu0 0.0
    %3453 = vmatprep.subr.mxu0 0.0
    %3454 = vmatpush2.msra.mxu0 0.0
    %3455 = vmatprep.subr.mxu0 0.0
    %3456 = vmatpush2.msra.mxu0 0.0
    %3457 = vmatprep.subr.mxu0 0.0
    %3458 = vmatpush2.msra.mxu0 0.0
    %3459 = vmatprep.subr.mxu0 0.0
    %3460 = vmatpush2.msra.mxu0 0.0
    %3461 = vmatprep.subr.mxu0 0.0
    %3462 = vmatpush2.msra.mxu0 0.0
    %3463 = vmatprep.subr.mxu0 0.0
    %3464 = vmatpush2.msra.mxu0 0.0
    %3465 = vmatprep.subr.mxu0 0.0
    %3466 = vmatpush2.msra.mxu0 0.0
    %3467 = vmatprep.subr.mxu0 0.0
    %3468 = vmatpush2.msra.mxu0 0.0
    %3469 = vmatprep.subr.mxu0 0.0
    %3470 = vmatpush2.msra.mxu0 0.0
    %3471 = vmatprep.subr.mxu0 0.0
    %3472 = vmatpush2.msra.mxu0 0.0
    %3473 = vmatprep.subr.mxu0 0.0
    %3474 = vmatpush2.msra.mxu0 0.0
    %3475 = vmatprep.subr.mxu0 0.0
    %3476 = vmatpush2.msra.mxu0 0.0
    %3477 = vmatprep.subr.mxu0 0.0
    %3478 = vmatpush2.msra.mxu0 0.0
    %3479 = vmatprep.subr.mxu0 0.0
    %3480 = vmatpush2.msra.mxu0 0.0
    %3481 = vmatprep.subr.mxu0 0.0
    %3482 = vmatpush2.msra.mxu0 0.0
    %3483 = vmatprep.mubr.f32.mxu0 0.0
    %v3484 = vand.u32 %v3137, 4294901760
    %v3485 = vsub.f32 %v3137, %v3484
    %v3486 = vand.u32 %v3485, 4294901760
    %3487 = vmatmul.mubr.f32.gmra.mxu0 %v3486
    %v3488 = vpop.f32.mrf.mxu0
    %v3489 = vadd.f32 %v3405, %v3488
    %v3490 = vpop.f32.mrf.mxu0
    %3491 = vmatprep.mubr.f32.mxu0 0.0
    %v3492 = vand.u32 %v3140, 4294901760
    %v3493 = vsub.f32 %v3140, %v3492
    %v3494 = vand.u32 %v3493, 4294901760
    %3495 = vmatmul.mubr.f32.gmra.mxu0 %v3494
    %v3496 = vpop.f32.mrf.mxu0
    %v3497 = vadd.f32 %v3412, %v3496
    %v3498 = vpop.f32.mrf.mxu0
    %3499 = vdwg.mxu0
    %3500 = vmatprep.subr.mxu0 0.0
    %3501 = vmatpush1.msra.mxu0 0.0
    %3502 = vmatprep.subr.mxu0 0.0
    %3503 = vmatpush1.msra.mxu0 0.0
    %3504 = vmatprep.subr.mxu0 0.0
    %3505 = vmatpush1.msra.mxu0 0.0
    %3506 = vmatprep.subr.mxu0 0.0
    %3507 = vmatpush1.msra.mxu0 0.0
    %3508 = vmatprep.subr.mxu0 0.0
    %3509 = vmatpush1.msra.mxu0 0.0
    %3510 = vmatprep.subr.mxu0 0.0
    %3511 = vmatpush1.msra.mxu0 0.0
    %3512 = vmatprep.subr.mxu0 0.0
    %3513 = vmatpush1.msra.mxu0 0.0
    %3514 = vmatprep.subr.mxu0 0.0
    %3515 = vmatpush1.msra.mxu0 0.0
    %3516 = vmatprep.subr.mxu0 0.0
    %3517 = vmatpush1.msra.mxu0 0.0
    %3518 = vmatprep.subr.mxu0 0.0
    %3519 = vmatpush1.msra.mxu0 0.0
    %3520 = vmatprep.subr.mxu0 0.0
    %3521 = vmatpush1.msra.mxu0 0.0
    %3522 = vmatprep.subr.mxu0 0.0
    %3523 = vmatpush1.msra.mxu0 0.0
    %3524 = vmatprep.subr.mxu0 0.0
    %v3525 = vand.u32 %v88, 4294901760
    %v3526 = vsub.f32 %v88, %v3525
    %v3527 = vand.u32 %v3526, 4294901760
    %3528 = vmatpush1.msra.mxu0 %v3527
    %3529 = vmatprep.subr.mxu0 0.0
    %v3530 = vand.u32 %v87, 4294901760
    %v3531 = vsub.f32 %v87, %v3530
    %v3532 = vand.u32 %v3531, 4294901760
    %3533 = vmatpush1.msra.mxu0 %v3532
    %3534 = vmatprep.subr.mxu0 0.0
    %v3535 = vand.u32 %v86, 4294901760
    %v3536 = vsub.f32 %v86, %v3535
    %v3537 = vand.u32 %v3536, 4294901760
    %3538 = vmatpush1.msra.mxu0 %v3537
    %3539 = vmatprep.subr.mxu0 0.0
    %v3540 = vand.u32 %v85, 4294901760
    %v3541 = vsub.f32 %v85, %v3540
    %v3542 = vand.u32 %v3541, 4294901760
    %3543 = vmatpush1.msra.mxu0 %v3542
    %3544 = vmatprep.subr.mxu0 0.0
    %3545 = vmatpush2.msra.mxu0 0.0
    %3546 = vmatprep.subr.mxu0 0.0
    %3547 = vmatpush2.msra.mxu0 0.0
    %3548 = vmatprep.subr.mxu0 0.0
    %3549 = vmatpush2.msra.mxu0 0.0
    %3550 = vmatprep.subr.mxu0 0.0
    %3551 = vmatpush2.msra.mxu0 0.0
    %3552 = vmatprep.subr.mxu0 0.0
    %3553 = vmatpush2.msra.mxu0 0.0
    %3554 = vmatprep.subr.mxu0 0.0
    %3555 = vmatpush2.msra.mxu0 0.0
    %3556 = vmatprep.subr.mxu0 0.0
    %3557 = vmatpush2.msra.mxu0 0.0
    %3558 = vmatprep.subr.mxu0 0.0
    %3559 = vmatpush2.msra.mxu0 0.0
    %3560 = vmatprep.subr.mxu0 0.0
    %3561 = vmatpush2.msra.mxu0 0.0
    %3562 = vmatprep.subr.mxu0 0.0
    %3563 = vmatpush2.msra.mxu0 0.0
    %3564 = vmatprep.subr.mxu0 0.0
    %3565 = vmatpush2.msra.mxu0 0.0
    %3566 = vmatprep.subr.mxu0 0.0
    %3567 = vmatpush2.msra.mxu0 0.0
    %3568 = vmatprep.subr.mxu0 0.0
    %3569 = vmatpush2.msra.mxu0 0.0
    %3570 = vmatprep.subr.mxu0 0.0
    %3571 = vmatpush2.msra.mxu0 0.0
    %3572 = vmatprep.subr.mxu0 0.0
    %3573 = vmatpush2.msra.mxu0 0.0
    %3574 = vmatprep.subr.mxu0 0.0
    %3575 = vmatpush2.msra.mxu0 0.0
    %3576 = vmatprep.mubr.f32.mxu0 0.0
    %v3577 = vand.u32 %v3137, 4294901760
    %3578 = vmatmul.mubr.f32.gmra.mxu0 %v3577
    %v3579 = vpop.f32.mrf.mxu0
    %v3580 = vadd.f32 %v3489, %v3579
    %v3581 = vpop.f32.mrf.mxu0
    %3582 = vmatprep.mubr.f32.mxu0 0.0
    %v3583 = vand.u32 %v3140, 4294901760
    %3584 = vmatmul.mubr.f32.gmra.mxu0 %v3583
    %v3585 = vpop.f32.mrf.mxu0
    %v3586 = vadd.f32 %v3497, %v3585
    %v3587 = vpop.f32.mrf.mxu0
    %3588 = vdwg.mxu0
    %3589 = vmatprep.subr.mxu0 0.0
    %3590 = vmatpush1.msra.mxu0 0.0
    %3591 = vmatprep.subr.mxu0 0.0
    %3592 = vmatpush1.msra.mxu0 0.0
    %3593 = vmatprep.subr.mxu0 0.0
    %3594 = vmatpush1.msra.mxu0 0.0
    %3595 = vmatprep.subr.mxu0 0.0
    %3596 = vmatpush1.msra.mxu0 0.0
    %3597 = vmatprep.subr.mxu0 0.0
    %3598 = vmatpush1.msra.mxu0 0.0
    %3599 = vmatprep.subr.mxu0 0.0
    %3600 = vmatpush1.msra.mxu0 0.0
    %3601 = vmatprep.subr.mxu0 0.0
    %3602 = vmatpush1.msra.mxu0 0.0
    %3603 = vmatprep.subr.mxu0 0.0
    %3604 = vmatpush1.msra.mxu0 0.0
    %3605 = vmatprep.subr.mxu0 0.0
    %3606 = vmatpush1.msra.mxu0 0.0
    %3607 = vmatprep.subr.mxu0 0.0
    %3608 = vmatpush1.msra.mxu0 0.0
    %3609 = vmatprep.subr.mxu0 0.0
    %3610 = vmatpush1.msra.mxu0 0.0
    %3611 = vmatprep.subr.mxu0 0.0
    %3612 = vmatpush1.msra.mxu0 0.0
    %3613 = vmatprep.subr.mxu0 0.0
    %v3614 = vand.u32 %v88, 4294901760
    %3615 = vmatpush1.msra.mxu0 %v3614
    %3616 = vmatprep.subr.mxu0 0.0
    %v3617 = vand.u32 %v87, 4294901760
    %3618 = vmatpush1.msra.mxu0 %v3617
    %3619 = vmatprep.subr.mxu0 0.0
    %v3620 = vand.u32 %v86, 4294901760
    %3621 = vmatpush1.msra.mxu0 %v3620
    %3622 = vmatprep.subr.mxu0 0.0
    %v3623 = vand.u32 %v85, 4294901760
    %3624 = vmatpush1.msra.mxu0 %v3623
    %3625 = vmatprep.subr.mxu0 0.0
    %3626 = vmatpush2.msra.mxu0 0.0
    %3627 = vmatprep.subr.mxu0 0.0
    %3628 = vmatpush2.msra.mxu0 0.0
    %3629 = vmatprep.subr.mxu0 0.0
    %3630 = vmatpush2.msra.mxu0 0.0
    %3631 = vmatprep.subr.mxu0 0.0
    %3632 = vmatpush2.msra.mxu0 0.0
    %3633 = vmatprep.subr.mxu0 0.0
    %3634 = vmatpush2.msra.mxu0 0.0
    %3635 = vmatprep.subr.mxu0 0.0
    %3636 = vmatpush2.msra.mxu0 0.0
    %3637 = vmatprep.subr.mxu0 0.0
    %3638 = vmatpush2.msra.mxu0 0.0
    %3639 = vmatprep.subr.mxu0 0.0
    %3640 = vmatpush2.msra.mxu0 0.0
    %3641 = vmatprep.subr.mxu0 0.0
    %3642 = vmatpush2.msra.mxu0 0.0
    %3643 = vmatprep.subr.mxu0 0.0
    %3644 = vmatpush2.msra.mxu0 0.0
    %3645 = vmatprep.subr.mxu0 0.0
    %3646 = vmatpush2.msra.mxu0 0.0
    %3647 = vmatprep.subr.mxu0 0.0
    %3648 = vmatpush2.msra.mxu0 0.0
    %3649 = vmatprep.subr.mxu0 0.0
    %3650 = vmatpush2.msra.mxu0 0.0
    %3651 = vmatprep.subr.mxu0 0.0
    %3652 = vmatpush2.msra.mxu0 0.0
    %3653 = vmatprep.subr.mxu0 0.0
    %3654 = vmatpush2.msra.mxu0 0.0
    %3655 = vmatprep.subr.mxu0 0.0
    %3656 = vmatpush2.msra.mxu0 0.0
    %3657 = vmatprep.mubr.f32.mxu0 0.0
    %v3658 = vand.u32 %v3137, 4294901760
    %3659 = vmatmul.mubr.f32.gmra.mxu0 %v3658
    %v3660 = vpop.f32.mrf.mxu0
    %v3661 = vadd.f32 %v3580, %v3660
    %v3662 = vpop.f32.mrf.mxu0
    %3663 = vmatprep.mubr.f32.mxu0 0.0
    %v3664 = vand.u32 %v3140, 4294901760
    %3665 = vmatmul.mubr.f32.gmra.mxu0 %v3664
    %v3666 = vpop.f32.mrf.mxu0
    %v3667 = vadd.f32 %v3586, %v3666
    %v3668 = vpop.f32.mrf.mxu0
    %3669 = vdwg.mxu0
    %v3670 = vadd.f32 %v75, %v3661
    %v3671 = vadd.f32 %v76, %v3667
    %v3672 = vsel %vm106, %v3670, 0.0
    %3673 = vadd.xlane.f32.xlu0 %v3672
    %v3674 = vpop.xlane.xlu0 %3673
    %v3675 = vsel %vm106, %v3671, 0.0
    %3676 = vadd.xlane.f32.xlu0 %v3675
    %v3677 = vpop.xlane.xlu0 %3676
    %v3678 = vrcp.pop 32.0
    %v3679 = vmul.f32 %v3674, %v3678
    %v3680 = vmul.f32 %v3677, %v3678
    %v3681 = vsub.f32 %v3670, %v3679
    %v3682 = vsub.f32 %v3671, %v3680
    %v3683 = vmul.f32 %v3681, %v3681
    %v3684 = vmul.f32 %v3682, %v3682
    %v3685 = vsel %vm106, %v3683, 0.0
    %3686 = vadd.xlane.f32.xlu0 %v3685
    %v3687 = vpop.xlane.xlu0 %3686
    %v3688 = vsel %vm106, %v3684, 0.0
    %3689 = vadd.xlane.f32.xlu0 %v3688
    %v3690 = vpop.xlane.xlu0 %3689
    %v3691 = vmul.f32 %v3687, %v3678
    %v3692 = vmul.f32 %v3690, %v3678
    %v3693 = vadd.f32 %v3691, 1e-05
    %v3694 = vadd.f32 %v3692, 1e-05
    %v3695 = vrsqrt.pop %v3693
    %v3696 = vrsqrt.pop %v3694
    %v3697 = vmul.f32 %v3681, %v3695
    %v3698 = vmul.f32 %v3682, %v3696
    %v3699 = vlaneseq
    %v3700 = vshrl.u32 %v3699, 7
    %v3701 = vsub.s32 4, %v3700
    %v3702 = vrot.slane %v101, %v3701
    %v3703 = vmul.f32 %v3697, %v3702
    %v3704 = vmul.f32 %v3698, %v3702
    %v3705 = vlaneseq
    %v3706 = vshrl.u32 %v3705, 7
    %v3707 = vsub.s32 5, %v3706
    %v3708 = vrot.slane %v101, %v3707
    %v3709 = vadd.f32 %v3703, %v3708
    %v3710 = vadd.f32 %v3704, %v3708
    %v3711 = vlaneseq
    %v3712 = vshrl.u32 %v3711, 7
    %v3713 = vsub.s32 2, %v3712
    %v3714 = vrot.slane %v101, %v3713
    %v3716 = vsel %vm106, %v3709, 0
    %v3719 = vsel %vm106, %v3710, 0
    %3721 = vmatprep.subr.mxu0 0.0
    %3722 = vmatpush1.msra.mxu0 0.0
    %3723 = vmatprep.subr.mxu0 0.0
    %3724 = vmatpush1.msra.mxu0 0.0
    %3725 = vmatprep.subr.mxu0 0.0
    %3726 = vmatpush1.msra.mxu0 0.0
    %3727 = vmatprep.subr.mxu0 0.0
    %3728 = vmatpush1.msra.mxu0 0.0
    %3729 = vmatprep.subr.mxu0 0.0
    %3730 = vmatpush1.msra.mxu0 0.0
    %3731 = vmatprep.subr.mxu0 0.0
    %3732 = vmatpush1.msra.mxu0 0.0
    %3733 = vmatprep.subr.mxu0 0.0
    %3734 = vmatpush1.msra.mxu0 0.0
    %3735 = vmatprep.subr.mxu0 0.0
    %3736 = vmatpush1.msra.mxu0 0.0
    %3737 = vmatprep.subr.mxu0 0.0
    %3738 = vmatpush1.msra.mxu0 0.0
    %3739 = vmatprep.subr.mxu0 0.0
    %3740 = vmatpush1.msra.mxu0 0.0
    %3741 = vmatprep.subr.mxu0 0.0
    %3742 = vmatpush1.msra.mxu0 0.0
    %3743 = vmatprep.subr.mxu0 0.0
    %3744 = vmatpush1.msra.mxu0 0.0
    %3745 = vmatprep.subr.mxu0 0.0
    %v3746 = vand.u32 %v92, 4294901760
    %3747 = vmatpush1.msra.mxu0 %v3746
    %3748 = vmatprep.subr.mxu0 0.0
    %v3749 = vand.u32 %v91, 4294901760
    %3750 = vmatpush1.msra.mxu0 %v3749
    %3751 = vmatprep.subr.mxu0 0.0
    %v3752 = vand.u32 %v90, 4294901760
    %3753 = vmatpush1.msra.mxu0 %v3752
    %3754 = vmatprep.subr.mxu0 0.0
    %v3755 = vand.u32 %v89, 4294901760
    %3756 = vmatpush1.msra.mxu0 %v3755
    %3757 = vmatprep.subr.mxu0 0.0
    %3758 = vmatpush2.msra.mxu0 0.0
    %3759 = vmatprep.subr.mxu0 0.0
    %3760 = vmatpush2.msra.mxu0 0.0
    %3761 = vmatprep.subr.mxu0 0.0
    %3762 = vmatpush2.msra.mxu0 0.0
    %3763 = vmatprep.subr.mxu0 0.0
    %3764 = vmatpush2.msra.mxu0 0.0
    %3765 = vmatprep.subr.mxu0 0.0
    %3766 = vmatpush2.msra.mxu0 0.0
    %3767 = vmatprep.subr.mxu0 0.0
    %3768 = vmatpush2.msra.mxu0 0.0
    %3769 = vmatprep.subr.mxu0 0.0
    %3770 = vmatpush2.msra.mxu0 0.0
    %3771 = vmatprep.subr.mxu0 0.0
    %3772 = vmatpush2.msra.mxu0 0.0
    %3773 = vmatprep.subr.mxu0 0.0
    %3774 = vmatpush2.msra.mxu0 0.0
    %3775 = vmatprep.subr.mxu0 0.0
    %3776 = vmatpush2.msra.mxu0 0.0
    %3777 = vmatprep.subr.mxu0 0.0
    %3778 = vmatpush2.msra.mxu0 0.0
    %3779 = vmatprep.subr.mxu0 0.0
    %3780 = vmatpush2.msra.mxu0 0.0
    %3781 = vmatprep.subr.mxu0 0.0
    %3782 = vmatpush2.msra.mxu0 0.0
    %3783 = vmatprep.subr.mxu0 0.0
    %3784 = vmatpush2.msra.mxu0 0.0
    %3785 = vmatprep.subr.mxu0 0.0
    %3786 = vmatpush2.msra.mxu0 0.0
    %3787 = vmatprep.subr.mxu0 0.0
    %3788 = vmatpush2.msra.mxu0 0.0
    %3789 = vmatprep.mubr.f32.mxu0 0.0
    %v3790 = vand.u32 %v3716, 4294901760
    %v3791 = vsub.f32 %v3716, %v3790
    %v3792 = vand.u32 %v3791, 4294901760
    %v3793 = vsub.f32 %v3791, %v3792
    %v3794 = vand.u32 %v3793, 4294901760
    %3795 = vmatmul.mubr.f32.gmra.mxu0 %v3794
    %v3796 = vpop.f32.mrf.mxu0
    %v3797 = vadd.f32 %v3714, %v3796
    %v3798 = vpop.f32.mrf.mxu0
    %3799 = vmatprep.mubr.f32.mxu0 0.0
    %v3800 = vand.u32 %v3719, 4294901760
    %v3801 = vsub.f32 %v3719, %v3800
    %v3802 = vand.u32 %v3801, 4294901760
    %v3803 = vsub.f32 %v3801, %v3802
    %v3804 = vand.u32 %v3803, 4294901760
    %3805 = vmatmul.mubr.f32.gmra.mxu0 %v3804
    %v3806 = vpop.f32.mrf.mxu0
    %v3807 = vadd.f32 %v3714, %v3806
    %v3808 = vpop.f32.mrf.mxu0
    %3809 = vdwg.mxu0
    %3810 = vmatprep.subr.mxu0 0.0
    %3811 = vmatpush1.msra.mxu0 0.0
    %3812 = vmatprep.subr.mxu0 0.0
    %3813 = vmatpush1.msra.mxu0 0.0
    %3814 = vmatprep.subr.mxu0 0.0
    %3815 = vmatpush1.msra.mxu0 0.0
    %3816 = vmatprep.subr.mxu0 0.0
    %3817 = vmatpush1.msra.mxu0 0.0
    %3818 = vmatprep.subr.mxu0 0.0
    %3819 = vmatpush1.msra.mxu0 0.0
    %3820 = vmatprep.subr.mxu0 0.0
    %3821 = vmatpush1.msra.mxu0 0.0
    %3822 = vmatprep.subr.mxu0 0.0
    %3823 = vmatpush1.msra.mxu0 0.0
    %3824 = vmatprep.subr.mxu0 0.0
    %3825 = vmatpush1.msra.mxu0 0.0
    %3826 = vmatprep.subr.mxu0 0.0
    %3827 = vmatpush1.msra.mxu0 0.0
    %3828 = vmatprep.subr.mxu0 0.0
    %3829 = vmatpush1.msra.mxu0 0.0
    %3830 = vmatprep.subr.mxu0 0.0
    %3831 = vmatpush1.msra.mxu0 0.0
    %3832 = vmatprep.subr.mxu0 0.0
    %3833 = vmatpush1.msra.mxu0 0.0
    %3834 = vmatprep.subr.mxu0 0.0
    %v3835 = vand.u32 %v92, 4294901760
    %v3836 = vsub.f32 %v92, %v3835
    %v3837 = vand.u32 %v3836, 4294901760
    %v3838 = vsub.f32 %v3836, %v3837
    %v3839 = vand.u32 %v3838, 4294901760
    %3840 = vmatpush1.msra.mxu0 %v3839
    %3841 = vmatprep.subr.mxu0 0.0
    %v3842 = vand.u32 %v91, 4294901760
    %v3843 = vsub.f32 %v91, %v3842
    %v3844 = vand.u32 %v3843, 4294901760
    %v3845 = vsub.f32 %v3843, %v3844
    %v3846 = vand.u32 %v3845, 4294901760
    %3847 = vmatpush1.msra.mxu0 %v3846
    %3848 = vmatprep.subr.mxu0 0.0
    %v3849 = vand.u32 %v90, 4294901760
    %v3850 = vsub.f32 %v90, %v3849
    %v3851 = vand.u32 %v3850, 4294901760
    %v3852 = vsub.f32 %v3850, %v3851
    %v3853 = vand.u32 %v3852, 4294901760
    %3854 = vmatpush1.msra.mxu0 %v3853
    %3855 = vmatprep.subr.mxu0 0.0
    %v3856 = vand.u32 %v89, 4294901760
    %v3857 = vsub.f32 %v89, %v3856
    %v3858 = vand.u32 %v3857, 4294901760
    %v3859 = vsub.f32 %v3857, %v3858
    %v3860 = vand.u32 %v3859, 4294901760
    %3861 = vmatpush1.msra.mxu0 %v3860
    %3862 = vmatprep.subr.mxu0 0.0
    %3863 = vmatpush2.msra.mxu0 0.0
    %3864 = vmatprep.subr.mxu0 0.0
    %3865 = vmatpush2.msra.mxu0 0.0
    %3866 = vmatprep.subr.mxu0 0.0
    %3867 = vmatpush2.msra.mxu0 0.0
    %3868 = vmatprep.subr.mxu0 0.0
    %3869 = vmatpush2.msra.mxu0 0.0
    %3870 = vmatprep.subr.mxu0 0.0
    %3871 = vmatpush2.msra.mxu0 0.0
    %3872 = vmatprep.subr.mxu0 0.0
    %3873 = vmatpush2.msra.mxu0 0.0
    %3874 = vmatprep.subr.mxu0 0.0
    %3875 = vmatpush2.msra.mxu0 0.0
    %3876 = vmatprep.subr.mxu0 0.0
    %3877 = vmatpush2.msra.mxu0 0.0
    %3878 = vmatprep.subr.mxu0 0.0
    %3879 = vmatpush2.msra.mxu0 0.0
    %3880 = vmatprep.subr.mxu0 0.0
    %3881 = vmatpush2.msra.mxu0 0.0
    %3882 = vmatprep.subr.mxu0 0.0
    %3883 = vmatpush2.msra.mxu0 0.0
    %3884 = vmatprep.subr.mxu0 0.0
    %3885 = vmatpush2.msra.mxu0 0.0
    %3886 = vmatprep.subr.mxu0 0.0
    %3887 = vmatpush2.msra.mxu0 0.0
    %3888 = vmatprep.subr.mxu0 0.0
    %3889 = vmatpush2.msra.mxu0 0.0
    %3890 = vmatprep.subr.mxu0 0.0
    %3891 = vmatpush2.msra.mxu0 0.0
    %3892 = vmatprep.subr.mxu0 0.0
    %3893 = vmatpush2.msra.mxu0 0.0
    %3894 = vmatprep.mubr.f32.mxu0 0.0
    %v3895 = vand.u32 %v3716, 4294901760
    %3896 = vmatmul.mubr.f32.gmra.mxu0 %v3895
    %v3897 = vpop.f32.mrf.mxu0
    %v3898 = vadd.f32 %v3797, %v3897
    %v3899 = vpop.f32.mrf.mxu0
    %3900 = vmatprep.mubr.f32.mxu0 0.0
    %v3901 = vand.u32 %v3719, 4294901760
    %3902 = vmatmul.mubr.f32.gmra.mxu0 %v3901
    %v3903 = vpop.f32.mrf.mxu0
    %v3904 = vadd.f32 %v3807, %v3903
    %v3905 = vpop.f32.mrf.mxu0
    %3906 = vdwg.mxu0
    %3907 = vmatprep.subr.mxu0 0.0
    %3908 = vmatpush1.msra.mxu0 0.0
    %3909 = vmatprep.subr.mxu0 0.0
    %3910 = vmatpush1.msra.mxu0 0.0
    %3911 = vmatprep.subr.mxu0 0.0
    %3912 = vmatpush1.msra.mxu0 0.0
    %3913 = vmatprep.subr.mxu0 0.0
    %3914 = vmatpush1.msra.mxu0 0.0
    %3915 = vmatprep.subr.mxu0 0.0
    %3916 = vmatpush1.msra.mxu0 0.0
    %3917 = vmatprep.subr.mxu0 0.0
    %3918 = vmatpush1.msra.mxu0 0.0
    %3919 = vmatprep.subr.mxu0 0.0
    %3920 = vmatpush1.msra.mxu0 0.0
    %3921 = vmatprep.subr.mxu0 0.0
    %3922 = vmatpush1.msra.mxu0 0.0
    %3923 = vmatprep.subr.mxu0 0.0
    %3924 = vmatpush1.msra.mxu0 0.0
    %3925 = vmatprep.subr.mxu0 0.0
    %3926 = vmatpush1.msra.mxu0 0.0
    %3927 = vmatprep.subr.mxu0 0.0
    %3928 = vmatpush1.msra.mxu0 0.0
    %3929 = vmatprep.subr.mxu0 0.0
    %3930 = vmatpush1.msra.mxu0 0.0
    %3931 = vmatprep.subr.mxu0 0.0
    %v3932 = vand.u32 %v92, 4294901760
    %v3933 = vsub.f32 %v92, %v3932
    %3934 = vmatpush1.msra.mxu0 %v3933
    %3935 = vmatprep.subr.mxu0 0.0
    %v3936 = vand.u32 %v91, 4294901760
    %v3937 = vsub.f32 %v91, %v3936
    %3938 = vmatpush1.msra.mxu0 %v3937
    %3939 = vmatprep.subr.mxu0 0.0
    %v3940 = vand.u32 %v90, 4294901760
    %v3941 = vsub.f32 %v90, %v3940
    %3942 = vmatpush1.msra.mxu0 %v3941
    %3943 = vmatprep.subr.mxu0 0.0
    %v3944 = vand.u32 %v89, 4294901760
    %v3945 = vsub.f32 %v89, %v3944
    %3946 = vmatpush1.msra.mxu0 %v3945
    %3947 = vmatprep.subr.mxu0 0.0
    %3948 = vmatpush2.msra.mxu0 0.0
    %3949 = vmatprep.subr.mxu0 0.0
    %3950 = vmatpush2.msra.mxu0 0.0
    %3951 = vmatprep.subr.mxu0 0.0
    %3952 = vmatpush2.msra.mxu0 0.0
    %3953 = vmatprep.subr.mxu0 0.0
    %3954 = vmatpush2.msra.mxu0 0.0
    %3955 = vmatprep.subr.mxu0 0.0
    %3956 = vmatpush2.msra.mxu0 0.0
    %3957 = vmatprep.subr.mxu0 0.0
    %3958 = vmatpush2.msra.mxu0 0.0
    %3959 = vmatprep.subr.mxu0 0.0
    %3960 = vmatpush2.msra.mxu0 0.0
    %3961 = vmatprep.subr.mxu0 0.0
    %3962 = vmatpush2.msra.mxu0 0.0
    %3963 = vmatprep.subr.mxu0 0.0
    %3964 = vmatpush2.msra.mxu0 0.0
    %3965 = vmatprep.subr.mxu0 0.0
    %3966 = vmatpush2.msra.mxu0 0.0
    %3967 = vmatprep.subr.mxu0 0.0
    %3968 = vmatpush2.msra.mxu0 0.0
    %3969 = vmatprep.subr.mxu0 0.0
    %3970 = vmatpush2.msra.mxu0 0.0
    %3971 = vmatprep.subr.mxu0 0.0
    %3972 = vmatpush2.msra.mxu0 0.0
    %3973 = vmatprep.subr.mxu0 0.0
    %3974 = vmatpush2.msra.mxu0 0.0
    %3975 = vmatprep.subr.mxu0 0.0
    %3976 = vmatpush2.msra.mxu0 0.0
    %3977 = vmatprep.subr.mxu0 0.0
    %3978 = vmatpush2.msra.mxu0 0.0
    %3979 = vmatprep.mubr.f32.mxu0 0.0
    %v3980 = vand.u32 %v3716, 4294901760
    %v3981 = vsub.f32 %v3716, %v3980
    %3982 = vmatmul.mubr.f32.gmra.mxu0 %v3981
    %v3983 = vpop.f32.mrf.mxu0
    %v3984 = vadd.f32 %v3898, %v3983
    %v3985 = vpop.f32.mrf.mxu0
    %3986 = vmatprep.mubr.f32.mxu0 0.0
    %v3987 = vand.u32 %v3719, 4294901760
    %v3988 = vsub.f32 %v3719, %v3987
    %3989 = vmatmul.mubr.f32.gmra.mxu0 %v3988
    %v3990 = vpop.f32.mrf.mxu0
    %v3991 = vadd.f32 %v3904, %v3990
    %v3992 = vpop.f32.mrf.mxu0
    %3993 = vdwg.mxu0
    %3994 = vmatprep.subr.mxu0 0.0
    %3995 = vmatpush1.msra.mxu0 0.0
    %3996 = vmatprep.subr.mxu0 0.0
    %3997 = vmatpush1.msra.mxu0 0.0
    %3998 = vmatprep.subr.mxu0 0.0
    %3999 = vmatpush1.msra.mxu0 0.0
    %4000 = vmatprep.subr.mxu0 0.0
    %4001 = vmatpush1.msra.mxu0 0.0
    %4002 = vmatprep.subr.mxu0 0.0
    %4003 = vmatpush1.msra.mxu0 0.0
    %4004 = vmatprep.subr.mxu0 0.0
    %4005 = vmatpush1.msra.mxu0 0.0
    %4006 = vmatprep.subr.mxu0 0.0
    %4007 = vmatpush1.msra.mxu0 0.0
    %4008 = vmatprep.subr.mxu0 0.0
    %4009 = vmatpush1.msra.mxu0 0.0
    %4010 = vmatprep.subr.mxu0 0.0
    %4011 = vmatpush1.msra.mxu0 0.0
    %4012 = vmatprep.subr.mxu0 0.0
    %4013 = vmatpush1.msra.mxu0 0.0
    %4014 = vmatprep.subr.mxu0 0.0
    %4015 = vmatpush1.msra.mxu0 0.0
    %4016 = vmatprep.subr.mxu0 0.0
    %4017 = vmatpush1.msra.mxu0 0.0
    %4018 = vmatprep.subr.mxu0 0.0
    %v4019 = vand.u32 %v92, 4294901760
    %4020 = vmatpush1.msra.mxu0 %v4019
    %4021 = vmatprep.subr.mxu0 0.0
    %v4022 = vand.u32 %v91, 4294901760
    %4023 = vmatpush1.msra.mxu0 %v4022
    %4024 = vmatprep.subr.mxu0 0.0
    %v4025 = vand.u32 %v90, 4294901760
    %4026 = vmatpush1.msra.mxu0 %v4025
    %4027 = vmatprep.subr.mxu0 0.0
    %v4028 = vand.u32 %v89, 4294901760
    %4029 = vmatpush1.msra.mxu0 %v4028
    %4030 = vmatprep.subr.mxu0 0.0
    %4031 = vmatpush2.msra.mxu0 0.0
    %4032 = vmatprep.subr.mxu0 0.0
    %4033 = vmatpush2.msra.mxu0 0.0
    %4034 = vmatprep.subr.mxu0 0.0
    %4035 = vmatpush2.msra.mxu0 0.0
    %4036 = vmatprep.subr.mxu0 0.0
    %4037 = vmatpush2.msra.mxu0 0.0
    %4038 = vmatprep.subr.mxu0 0.0
    %4039 = vmatpush2.msra.mxu0 0.0
    %4040 = vmatprep.subr.mxu0 0.0
    %4041 = vmatpush2.msra.mxu0 0.0
    %4042 = vmatprep.subr.mxu0 0.0
    %4043 = vmatpush2.msra.mxu0 0.0
    %4044 = vmatprep.subr.mxu0 0.0
    %4045 = vmatpush2.msra.mxu0 0.0
    %4046 = vmatprep.subr.mxu0 0.0
    %4047 = vmatpush2.msra.mxu0 0.0
    %4048 = vmatprep.subr.mxu0 0.0
    %4049 = vmatpush2.msra.mxu0 0.0
    %4050 = vmatprep.subr.mxu0 0.0
    %4051 = vmatpush2.msra.mxu0 0.0
    %4052 = vmatprep.subr.mxu0 0.0
    %4053 = vmatpush2.msra.mxu0 0.0
    %4054 = vmatprep.subr.mxu0 0.0
    %4055 = vmatpush2.msra.mxu0 0.0
    %4056 = vmatprep.subr.mxu0 0.0
    %4057 = vmatpush2.msra.mxu0 0.0
    %4058 = vmatprep.subr.mxu0 0.0
    %4059 = vmatpush2.msra.mxu0 0.0
    %4060 = vmatprep.subr.mxu0 0.0
    %4061 = vmatpush2.msra.mxu0 0.0
    %4062 = vmatprep.mubr.f32.mxu0 0.0
    %v4063 = vand.u32 %v3716, 4294901760
    %v4064 = vsub.f32 %v3716, %v4063
    %v4065 = vand.u32 %v4064, 4294901760
    %4066 = vmatmul.mubr.f32.gmra.mxu0 %v4065
    %v4067 = vpop.f32.mrf.mxu0
    %v4068 = vadd.f32 %v3984, %v4067
    %v4069 = vpop.f32.mrf.mxu0
    %4070 = vmatprep.mubr.f32.mxu0 0.0
    %v4071 = vand.u32 %v3719, 4294901760
    %v4072 = vsub.f32 %v3719, %v4071
    %v4073 = vand.u32 %v4072, 4294901760
    %4074 = vmatmul.mubr.f32.gmra.mxu0 %v4073
    %v4075 = vpop.f32.mrf.mxu0
    %v4076 = vadd.f32 %v3991, %v4075
    %v4077 = vpop.f32.mrf.mxu0
    %4078 = vdwg.mxu0
    %4079 = vmatprep.subr.mxu0 0.0
    %4080 = vmatpush1.msra.mxu0 0.0
    %4081 = vmatprep.subr.mxu0 0.0
    %4082 = vmatpush1.msra.mxu0 0.0
    %4083 = vmatprep.subr.mxu0 0.0
    %4084 = vmatpush1.msra.mxu0 0.0
    %4085 = vmatprep.subr.mxu0 0.0
    %4086 = vmatpush1.msra.mxu0 0.0
    %4087 = vmatprep.subr.mxu0 0.0
    %4088 = vmatpush1.msra.mxu0 0.0
    %4089 = vmatprep.subr.mxu0 0.0
    %4090 = vmatpush1.msra.mxu0 0.0
    %4091 = vmatprep.subr.mxu0 0.0
    %4092 = vmatpush1.msra.mxu0 0.0
    %4093 = vmatprep.subr.mxu0 0.0
    %4094 = vmatpush1.msra.mxu0 0.0
    %4095 = vmatprep.subr.mxu0 0.0
    %4096 = vmatpush1.msra.mxu0 0.0
    %4097 = vmatprep.subr.mxu0 0.0
    %4098 = vmatpush1.msra.mxu0 0.0
    %4099 = vmatprep.subr.mxu0 0.0
    %4100 = vmatpush1.msra.mxu0 0.0
    %4101 = vmatprep.subr.mxu0 0.0
    %4102 = vmatpush1.msra.mxu0 0.0
    %4103 = vmatprep.subr.mxu0 0.0
    %v4104 = vand.u32 %v92, 4294901760
    %v4105 = vsub.f32 %v92, %v4104
    %v4106 = vand.u32 %v4105, 4294901760
    %4107 = vmatpush1.msra.mxu0 %v4106
    %4108 = vmatprep.subr.mxu0 0.0
    %v4109 = vand.u32 %v91, 4294901760
    %v4110 = vsub.f32 %v91, %v4109
    %v4111 = vand.u32 %v4110, 4294901760
    %4112 = vmatpush1.msra.mxu0 %v4111
    %4113 = vmatprep.subr.mxu0 0.0
    %v4114 = vand.u32 %v90, 4294901760
    %v4115 = vsub.f32 %v90, %v4114
    %v4116 = vand.u32 %v4115, 4294901760
    %4117 = vmatpush1.msra.mxu0 %v4116
    %4118 = vmatprep.subr.mxu0 0.0
    %v4119 = vand.u32 %v89, 4294901760
    %v4120 = vsub.f32 %v89, %v4119
    %v4121 = vand.u32 %v4120, 4294901760
    %4122 = vmatpush1.msra.mxu0 %v4121
    %4123 = vmatprep.subr.mxu0 0.0
    %4124 = vmatpush2.msra.mxu0 0.0
    %4125 = vmatprep.subr.mxu0 0.0
    %4126 = vmatpush2.msra.mxu0 0.0
    %4127 = vmatprep.subr.mxu0 0.0
    %4128 = vmatpush2.msra.mxu0 0.0
    %4129 = vmatprep.subr.mxu0 0.0
    %4130 = vmatpush2.msra.mxu0 0.0
    %4131 = vmatprep.subr.mxu0 0.0
    %4132 = vmatpush2.msra.mxu0 0.0
    %4133 = vmatprep.subr.mxu0 0.0
    %4134 = vmatpush2.msra.mxu0 0.0
    %4135 = vmatprep.subr.mxu0 0.0
    %4136 = vmatpush2.msra.mxu0 0.0
    %4137 = vmatprep.subr.mxu0 0.0
    %4138 = vmatpush2.msra.mxu0 0.0
    %4139 = vmatprep.subr.mxu0 0.0
    %4140 = vmatpush2.msra.mxu0 0.0
    %4141 = vmatprep.subr.mxu0 0.0
    %4142 = vmatpush2.msra.mxu0 0.0
    %4143 = vmatprep.subr.mxu0 0.0
    %4144 = vmatpush2.msra.mxu0 0.0
    %4145 = vmatprep.subr.mxu0 0.0
    %4146 = vmatpush2.msra.mxu0 0.0
    %4147 = vmatprep.subr.mxu0 0.0
    %4148 = vmatpush2.msra.mxu0 0.0
    %4149 = vmatprep.subr.mxu0 0.0
    %4150 = vmatpush2.msra.mxu0 0.0
    %4151 = vmatprep.subr.mxu0 0.0
    %4152 = vmatpush2.msra.mxu0 0.0
    %4153 = vmatprep.subr.mxu0 0.0
    %4154 = vmatpush2.msra.mxu0 0.0
    %4155 = vmatprep.mubr.f32.mxu0 0.0
    %v4156 = vand.u32 %v3716, 4294901760
    %4157 = vmatmul.mubr.f32.gmra.mxu0 %v4156
    %v4158 = vpop.f32.mrf.mxu0
    %v4159 = vadd.f32 %v4068, %v4158
    %v4160 = vpop.f32.mrf.mxu0
    %4161 = vmatprep.mubr.f32.mxu0 0.0
    %v4162 = vand.u32 %v3719, 4294901760
    %4163 = vmatmul.mubr.f32.gmra.mxu0 %v4162
    %v4164 = vpop.f32.mrf.mxu0
    %v4165 = vadd.f32 %v4076, %v4164
    %v4166 = vpop.f32.mrf.mxu0
    %4167 = vdwg.mxu0
    %4168 = vmatprep.subr.mxu0 0.0
    %4169 = vmatpush1.msra.mxu0 0.0
    %4170 = vmatprep.subr.mxu0 0.0
    %4171 = vmatpush1.msra.mxu0 0.0
    %4172 = vmatprep.subr.mxu0 0.0
    %4173 = vmatpush1.msra.mxu0 0.0
    %4174 = vmatprep.subr.mxu0 0.0
    %4175 = vmatpush1.msra.mxu0 0.0
    %4176 = vmatprep.subr.mxu0 0.0
    %4177 = vmatpush1.msra.mxu0 0.0
    %4178 = vmatprep.subr.mxu0 0.0
    %4179 = vmatpush1.msra.mxu0 0.0
    %4180 = vmatprep.subr.mxu0 0.0
    %4181 = vmatpush1.msra.mxu0 0.0
    %4182 = vmatprep.subr.mxu0 0.0
    %4183 = vmatpush1.msra.mxu0 0.0
    %4184 = vmatprep.subr.mxu0 0.0
    %4185 = vmatpush1.msra.mxu0 0.0
    %4186 = vmatprep.subr.mxu0 0.0
    %4187 = vmatpush1.msra.mxu0 0.0
    %4188 = vmatprep.subr.mxu0 0.0
    %4189 = vmatpush1.msra.mxu0 0.0
    %4190 = vmatprep.subr.mxu0 0.0
    %4191 = vmatpush1.msra.mxu0 0.0
    %4192 = vmatprep.subr.mxu0 0.0
    %v4193 = vand.u32 %v92, 4294901760
    %4194 = vmatpush1.msra.mxu0 %v4193
    %4195 = vmatprep.subr.mxu0 0.0
    %v4196 = vand.u32 %v91, 4294901760
    %4197 = vmatpush1.msra.mxu0 %v4196
    %4198 = vmatprep.subr.mxu0 0.0
    %v4199 = vand.u32 %v90, 4294901760
    %4200 = vmatpush1.msra.mxu0 %v4199
    %4201 = vmatprep.subr.mxu0 0.0
    %v4202 = vand.u32 %v89, 4294901760
    %4203 = vmatpush1.msra.mxu0 %v4202
    %4204 = vmatprep.subr.mxu0 0.0
    %4205 = vmatpush2.msra.mxu0 0.0
    %4206 = vmatprep.subr.mxu0 0.0
    %4207 = vmatpush2.msra.mxu0 0.0
    %4208 = vmatprep.subr.mxu0 0.0
    %4209 = vmatpush2.msra.mxu0 0.0
    %4210 = vmatprep.subr.mxu0 0.0
    %4211 = vmatpush2.msra.mxu0 0.0
    %4212 = vmatprep.subr.mxu0 0.0
    %4213 = vmatpush2.msra.mxu0 0.0
    %4214 = vmatprep.subr.mxu0 0.0
    %4215 = vmatpush2.msra.mxu0 0.0
    %4216 = vmatprep.subr.mxu0 0.0
    %4217 = vmatpush2.msra.mxu0 0.0
    %4218 = vmatprep.subr.mxu0 0.0
    %4219 = vmatpush2.msra.mxu0 0.0
    %4220 = vmatprep.subr.mxu0 0.0
    %4221 = vmatpush2.msra.mxu0 0.0
    %4222 = vmatprep.subr.mxu0 0.0
    %4223 = vmatpush2.msra.mxu0 0.0
    %4224 = vmatprep.subr.mxu0 0.0
    %4225 = vmatpush2.msra.mxu0 0.0
    %4226 = vmatprep.subr.mxu0 0.0
    %4227 = vmatpush2.msra.mxu0 0.0
    %4228 = vmatprep.subr.mxu0 0.0
    %4229 = vmatpush2.msra.mxu0 0.0
    %4230 = vmatprep.subr.mxu0 0.0
    %4231 = vmatpush2.msra.mxu0 0.0
    %4232 = vmatprep.subr.mxu0 0.0
    %4233 = vmatpush2.msra.mxu0 0.0
    %4234 = vmatprep.subr.mxu0 0.0
    %4235 = vmatpush2.msra.mxu0 0.0
    %4236 = vmatprep.mubr.f32.mxu0 0.0
    %v4237 = vand.u32 %v3716, 4294901760
    %4238 = vmatmul.mubr.f32.gmra.mxu0 %v4237
    %v4239 = vpop.f32.mrf.mxu0
    %v4240 = vadd.f32 %v4159, %v4239
    %v4241 = vpop.f32.mrf.mxu0
    %4242 = vmatprep.mubr.f32.mxu0 0.0
    %v4243 = vand.u32 %v3719, 4294901760
    %4244 = vmatmul.mubr.f32.gmra.mxu0 %v4243
    %v4245 = vpop.f32.mrf.mxu0
    %v4246 = vadd.f32 %v4165, %v4245
    %v4247 = vpop.f32.mrf.mxu0
    %4248 = vdwg.mxu0
    %v4249 = vmax.f32 %v4240, 0.0
    %v4250 = vmax.f32 %v4246, 0.0
    %v4251 = vlaneseq
    %v4252 = vshrl.u32 %v4251, 7
    %v4253 = vsub.s32 3, %v4252
    %v4254 = vrot.slane %v101, %v4253
    %vm4255 = vcmask 523264
    %v4257 = vsel %vm4255, %v4249, 0
    %v4260 = vsel %vm4255, %v4250, 0
    %4262 = vmatprep.subr.mxu0 0.0
    %4263 = vmatpush1.msra.mxu0 0.0
    %4264 = vmatprep.subr.mxu0 0.0
    %4265 = vmatpush1.msra.mxu0 0.0
    %4266 = vmatprep.subr.mxu0 0.0
    %4267 = vmatpush1.msra.mxu0 0.0
    %4268 = vmatprep.subr.mxu0 0.0
    %4269 = vmatpush1.msra.mxu0 0.0
    %4270 = vmatprep.subr.mxu0 0.0
    %4271 = vmatpush1.msra.mxu0 0.0
    %4272 = vmatprep.subr.mxu0 0.0
    %4273 = vmatpush1.msra.mxu0 0.0
    %4274 = vmatprep.subr.mxu0 0.0
    %4275 = vmatpush1.msra.mxu0 0.0
    %4276 = vmatprep.subr.mxu0 0.0
    %4277 = vmatpush1.msra.mxu0 0.0
    %4278 = vmatprep.subr.mxu0 0.0
    %v4279 = vand.u32 %v100, 4294901760
    %4280 = vmatpush1.msra.mxu0 %v4279
    %4281 = vmatprep.subr.mxu0 0.0
    %v4282 = vand.u32 %v99, 4294901760
    %4283 = vmatpush1.msra.mxu0 %v4282
    %4284 = vmatprep.subr.mxu0 0.0
    %v4285 = vand.u32 %v98, 4294901760
    %4286 = vmatpush1.msra.mxu0 %v4285
    %4287 = vmatprep.subr.mxu0 0.0
    %v4288 = vand.u32 %v97, 4294901760
    %4289 = vmatpush1.msra.mxu0 %v4288
    %4290 = vmatprep.subr.mxu0 0.0
    %v4291 = vand.u32 %v96, 4294901760
    %4292 = vmatpush1.msra.mxu0 %v4291
    %4293 = vmatprep.subr.mxu0 0.0
    %v4294 = vand.u32 %v95, 4294901760
    %4295 = vmatpush1.msra.mxu0 %v4294
    %4296 = vmatprep.subr.mxu0 0.0
    %v4297 = vand.u32 %v94, 4294901760
    %4298 = vmatpush1.msra.mxu0 %v4297
    %4299 = vmatprep.subr.mxu0 0.0
    %v4300 = vand.u32 %v93, 4294901760
    %4301 = vmatpush1.msra.mxu0 %v4300
    %4302 = vmatprep.subr.mxu0 0.0
    %4303 = vmatpush2.msra.mxu0 0.0
    %4304 = vmatprep.subr.mxu0 0.0
    %4305 = vmatpush2.msra.mxu0 0.0
    %4306 = vmatprep.subr.mxu0 0.0
    %4307 = vmatpush2.msra.mxu0 0.0
    %4308 = vmatprep.subr.mxu0 0.0
    %4309 = vmatpush2.msra.mxu0 0.0
    %4310 = vmatprep.subr.mxu0 0.0
    %4311 = vmatpush2.msra.mxu0 0.0
    %4312 = vmatprep.subr.mxu0 0.0
    %4313 = vmatpush2.msra.mxu0 0.0
    %4314 = vmatprep.subr.mxu0 0.0
    %4315 = vmatpush2.msra.mxu0 0.0
    %4316 = vmatprep.subr.mxu0 0.0
    %4317 = vmatpush2.msra.mxu0 0.0
    %4318 = vmatprep.subr.mxu0 0.0
    %4319 = vmatpush2.msra.mxu0 0.0
    %4320 = vmatprep.subr.mxu0 0.0
    %4321 = vmatpush2.msra.mxu0 0.0
    %4322 = vmatprep.subr.mxu0 0.0
    %4323 = vmatpush2.msra.mxu0 0.0
    %4324 = vmatprep.subr.mxu0 0.0
    %4325 = vmatpush2.msra.mxu0 0.0
    %4326 = vmatprep.subr.mxu0 0.0
    %4327 = vmatpush2.msra.mxu0 0.0
    %4328 = vmatprep.subr.mxu0 0.0
    %4329 = vmatpush2.msra.mxu0 0.0
    %4330 = vmatprep.subr.mxu0 0.0
    %4331 = vmatpush2.msra.mxu0 0.0
    %4332 = vmatprep.subr.mxu0 0.0
    %4333 = vmatpush2.msra.mxu0 0.0
    %4334 = vmatprep.mubr.f32.mxu0 0.0
    %v4335 = vand.u32 %v4257, 4294901760
    %v4336 = vsub.f32 %v4257, %v4335
    %v4337 = vand.u32 %v4336, 4294901760
    %v4338 = vsub.f32 %v4336, %v4337
    %v4339 = vand.u32 %v4338, 4294901760
    %4340 = vmatmul.mubr.f32.gmra.mxu0 %v4339
    %v4341 = vpop.f32.mrf.mxu0
    %v4342 = vadd.f32 %v4254, %v4341
    %v4343 = vpop.f32.mrf.mxu0
    %4344 = vmatprep.mubr.f32.mxu0 0.0
    %v4345 = vand.u32 %v4260, 4294901760
    %v4346 = vsub.f32 %v4260, %v4345
    %v4347 = vand.u32 %v4346, 4294901760
    %v4348 = vsub.f32 %v4346, %v4347
    %v4349 = vand.u32 %v4348, 4294901760
    %4350 = vmatmul.mubr.f32.gmra.mxu0 %v4349
    %v4351 = vpop.f32.mrf.mxu0
    %v4352 = vadd.f32 %v4254, %v4351
    %v4353 = vpop.f32.mrf.mxu0
    %4354 = vdwg.mxu0
    %4355 = vmatprep.subr.mxu0 0.0
    %4356 = vmatpush1.msra.mxu0 0.0
    %4357 = vmatprep.subr.mxu0 0.0
    %4358 = vmatpush1.msra.mxu0 0.0
    %4359 = vmatprep.subr.mxu0 0.0
    %4360 = vmatpush1.msra.mxu0 0.0
    %4361 = vmatprep.subr.mxu0 0.0
    %4362 = vmatpush1.msra.mxu0 0.0
    %4363 = vmatprep.subr.mxu0 0.0
    %4364 = vmatpush1.msra.mxu0 0.0
    %4365 = vmatprep.subr.mxu0 0.0
    %4366 = vmatpush1.msra.mxu0 0.0
    %4367 = vmatprep.subr.mxu0 0.0
    %4368 = vmatpush1.msra.mxu0 0.0
    %4369 = vmatprep.subr.mxu0 0.0
    %4370 = vmatpush1.msra.mxu0 0.0
    %4371 = vmatprep.subr.mxu0 0.0
    %v4372 = vand.u32 %v100, 4294901760
    %v4373 = vsub.f32 %v100, %v4372
    %v4374 = vand.u32 %v4373, 4294901760
    %v4375 = vsub.f32 %v4373, %v4374
    %v4376 = vand.u32 %v4375, 4294901760
    %4377 = vmatpush1.msra.mxu0 %v4376
    %4378 = vmatprep.subr.mxu0 0.0
    %v4379 = vand.u32 %v99, 4294901760
    %v4380 = vsub.f32 %v99, %v4379
    %v4381 = vand.u32 %v4380, 4294901760
    %v4382 = vsub.f32 %v4380, %v4381
    %v4383 = vand.u32 %v4382, 4294901760
    %4384 = vmatpush1.msra.mxu0 %v4383
    %4385 = vmatprep.subr.mxu0 0.0
    %v4386 = vand.u32 %v98, 4294901760
    %v4387 = vsub.f32 %v98, %v4386
    %v4388 = vand.u32 %v4387, 4294901760
    %v4389 = vsub.f32 %v4387, %v4388
    %v4390 = vand.u32 %v4389, 4294901760
    %4391 = vmatpush1.msra.mxu0 %v4390
    %4392 = vmatprep.subr.mxu0 0.0
    %v4393 = vand.u32 %v97, 4294901760
    %v4394 = vsub.f32 %v97, %v4393
    %v4395 = vand.u32 %v4394, 4294901760
    %v4396 = vsub.f32 %v4394, %v4395
    %v4397 = vand.u32 %v4396, 4294901760
    %4398 = vmatpush1.msra.mxu0 %v4397
    %4399 = vmatprep.subr.mxu0 0.0
    %v4400 = vand.u32 %v96, 4294901760
    %v4401 = vsub.f32 %v96, %v4400
    %v4402 = vand.u32 %v4401, 4294901760
    %v4403 = vsub.f32 %v4401, %v4402
    %v4404 = vand.u32 %v4403, 4294901760
    %4405 = vmatpush1.msra.mxu0 %v4404
    %4406 = vmatprep.subr.mxu0 0.0
    %v4407 = vand.u32 %v95, 4294901760
    %v4408 = vsub.f32 %v95, %v4407
    %v4409 = vand.u32 %v4408, 4294901760
    %v4410 = vsub.f32 %v4408, %v4409
    %v4411 = vand.u32 %v4410, 4294901760
    %4412 = vmatpush1.msra.mxu0 %v4411
    %4413 = vmatprep.subr.mxu0 0.0
    %v4414 = vand.u32 %v94, 4294901760
    %v4415 = vsub.f32 %v94, %v4414
    %v4416 = vand.u32 %v4415, 4294901760
    %v4417 = vsub.f32 %v4415, %v4416
    %v4418 = vand.u32 %v4417, 4294901760
    %4419 = vmatpush1.msra.mxu0 %v4418
    %4420 = vmatprep.subr.mxu0 0.0
    %v4421 = vand.u32 %v93, 4294901760
    %v4422 = vsub.f32 %v93, %v4421
    %v4423 = vand.u32 %v4422, 4294901760
    %v4424 = vsub.f32 %v4422, %v4423
    %v4425 = vand.u32 %v4424, 4294901760
    %4426 = vmatpush1.msra.mxu0 %v4425
    %4427 = vmatprep.subr.mxu0 0.0
    %4428 = vmatpush2.msra.mxu0 0.0
    %4429 = vmatprep.subr.mxu0 0.0
    %4430 = vmatpush2.msra.mxu0 0.0
    %4431 = vmatprep.subr.mxu0 0.0
    %4432 = vmatpush2.msra.mxu0 0.0
    %4433 = vmatprep.subr.mxu0 0.0
    %4434 = vmatpush2.msra.mxu0 0.0
    %4435 = vmatprep.subr.mxu0 0.0
    %4436 = vmatpush2.msra.mxu0 0.0
    %4437 = vmatprep.subr.mxu0 0.0
    %4438 = vmatpush2.msra.mxu0 0.0
    %4439 = vmatprep.subr.mxu0 0.0
    %4440 = vmatpush2.msra.mxu0 0.0
    %4441 = vmatprep.subr.mxu0 0.0
    %4442 = vmatpush2.msra.mxu0 0.0
    %4443 = vmatprep.subr.mxu0 0.0
    %4444 = vmatpush2.msra.mxu0 0.0
    %4445 = vmatprep.subr.mxu0 0.0
    %4446 = vmatpush2.msra.mxu0 0.0
    %4447 = vmatprep.subr.mxu0 0.0
    %4448 = vmatpush2.msra.mxu0 0.0
    %4449 = vmatprep.subr.mxu0 0.0
    %4450 = vmatpush2.msra.mxu0 0.0
    %4451 = vmatprep.subr.mxu0 0.0
    %4452 = vmatpush2.msra.mxu0 0.0
    %4453 = vmatprep.subr.mxu0 0.0
    %4454 = vmatpush2.msra.mxu0 0.0
    %4455 = vmatprep.subr.mxu0 0.0
    %4456 = vmatpush2.msra.mxu0 0.0
    %4457 = vmatprep.subr.mxu0 0.0
    %4458 = vmatpush2.msra.mxu0 0.0
    %4459 = vmatprep.mubr.f32.mxu0 0.0
    %v4460 = vand.u32 %v4257, 4294901760
    %4461 = vmatmul.mubr.f32.gmra.mxu0 %v4460
    %v4462 = vpop.f32.mrf.mxu0
    %v4463 = vadd.f32 %v4342, %v4462
    %v4464 = vpop.f32.mrf.mxu0
    %4465 = vmatprep.mubr.f32.mxu0 0.0
    %v4466 = vand.u32 %v4260, 4294901760
    %4467 = vmatmul.mubr.f32.gmra.mxu0 %v4466
    %v4468 = vpop.f32.mrf.mxu0
    %v4469 = vadd.f32 %v4352, %v4468
    %v4470 = vpop.f32.mrf.mxu0
    %4471 = vdwg.mxu0
    %4472 = vmatprep.subr.mxu0 0.0
    %4473 = vmatpush1.msra.mxu0 0.0
    %4474 = vmatprep.subr.mxu0 0.0
    %4475 = vmatpush1.msra.mxu0 0.0
    %4476 = vmatprep.subr.mxu0 0.0
    %4477 = vmatpush1.msra.mxu0 0.0
    %4478 = vmatprep.subr.mxu0 0.0
    %4479 = vmatpush1.msra.mxu0 0.0
    %4480 = vmatprep.subr.mxu0 0.0
    %4481 = vmatpush1.msra.mxu0 0.0
    %4482 = vmatprep.subr.mxu0 0.0
    %4483 = vmatpush1.msra.mxu0 0.0
    %4484 = vmatprep.subr.mxu0 0.0
    %4485 = vmatpush1.msra.mxu0 0.0
    %4486 = vmatprep.subr.mxu0 0.0
    %4487 = vmatpush1.msra.mxu0 0.0
    %4488 = vmatprep.subr.mxu0 0.0
    %v4489 = vand.u32 %v100, 4294901760
    %v4490 = vsub.f32 %v100, %v4489
    %4491 = vmatpush1.msra.mxu0 %v4490
    %4492 = vmatprep.subr.mxu0 0.0
    %v4493 = vand.u32 %v99, 4294901760
    %v4494 = vsub.f32 %v99, %v4493
    %4495 = vmatpush1.msra.mxu0 %v4494
    %4496 = vmatprep.subr.mxu0 0.0
    %v4497 = vand.u32 %v98, 4294901760
    %v4498 = vsub.f32 %v98, %v4497
    %4499 = vmatpush1.msra.mxu0 %v4498
    %4500 = vmatprep.subr.mxu0 0.0
    %v4501 = vand.u32 %v97, 4294901760
    %v4502 = vsub.f32 %v97, %v4501
    %4503 = vmatpush1.msra.mxu0 %v4502
    %4504 = vmatprep.subr.mxu0 0.0
    %v4505 = vand.u32 %v96, 4294901760
    %v4506 = vsub.f32 %v96, %v4505
    %4507 = vmatpush1.msra.mxu0 %v4506
    %4508 = vmatprep.subr.mxu0 0.0
    %v4509 = vand.u32 %v95, 4294901760
    %v4510 = vsub.f32 %v95, %v4509
    %4511 = vmatpush1.msra.mxu0 %v4510
    %4512 = vmatprep.subr.mxu0 0.0
    %v4513 = vand.u32 %v94, 4294901760
    %v4514 = vsub.f32 %v94, %v4513
    %4515 = vmatpush1.msra.mxu0 %v4514
    %4516 = vmatprep.subr.mxu0 0.0
    %v4517 = vand.u32 %v93, 4294901760
    %v4518 = vsub.f32 %v93, %v4517
    %4519 = vmatpush1.msra.mxu0 %v4518
    %4520 = vmatprep.subr.mxu0 0.0
    %4521 = vmatpush2.msra.mxu0 0.0
    %4522 = vmatprep.subr.mxu0 0.0
    %4523 = vmatpush2.msra.mxu0 0.0
    %4524 = vmatprep.subr.mxu0 0.0
    %4525 = vmatpush2.msra.mxu0 0.0
    %4526 = vmatprep.subr.mxu0 0.0
    %4527 = vmatpush2.msra.mxu0 0.0
    %4528 = vmatprep.subr.mxu0 0.0
    %4529 = vmatpush2.msra.mxu0 0.0
    %4530 = vmatprep.subr.mxu0 0.0
    %4531 = vmatpush2.msra.mxu0 0.0
    %4532 = vmatprep.subr.mxu0 0.0
    %4533 = vmatpush2.msra.mxu0 0.0
    %4534 = vmatprep.subr.mxu0 0.0
    %4535 = vmatpush2.msra.mxu0 0.0
    %4536 = vmatprep.subr.mxu0 0.0
    %4537 = vmatpush2.msra.mxu0 0.0
    %4538 = vmatprep.subr.mxu0 0.0
    %4539 = vmatpush2.msra.mxu0 0.0
    %4540 = vmatprep.subr.mxu0 0.0
    %4541 = vmatpush2.msra.mxu0 0.0
    %4542 = vmatprep.subr.mxu0 0.0
    %4543 = vmatpush2.msra.mxu0 0.0
    %4544 = vmatprep.subr.mxu0 0.0
    %4545 = vmatpush2.msra.mxu0 0.0
    %4546 = vmatprep.subr.mxu0 0.0
    %4547 = vmatpush2.msra.mxu0 0.0
    %4548 = vmatprep.subr.mxu0 0.0
    %4549 = vmatpush2.msra.mxu0 0.0
    %4550 = vmatprep.subr.mxu0 0.0
    %4551 = vmatpush2.msra.mxu0 0.0
    %4552 = vmatprep.mubr.f32.mxu0 0.0
    %v4553 = vand.u32 %v4257, 4294901760
    %v4554 = vsub.f32 %v4257, %v4553
    %4555 = vmatmul.mubr.f32.gmra.mxu0 %v4554
    %v4556 = vpop.f32.mrf.mxu0
    %v4557 = vadd.f32 %v4463, %v4556
    %v4558 = vpop.f32.mrf.mxu0
    %4559 = vmatprep.mubr.f32.mxu0 0.0
    %v4560 = vand.u32 %v4260, 4294901760
    %v4561 = vsub.f32 %v4260, %v4560
    %4562 = vmatmul.mubr.f32.gmra.mxu0 %v4561
    %v4563 = vpop.f32.mrf.mxu0
    %v4564 = vadd.f32 %v4469, %v4563
    %v4565 = vpop.f32.mrf.mxu0
    %4566 = vdwg.mxu0
    %4567 = vmatprep.subr.mxu0 0.0
    %4568 = vmatpush1.msra.mxu0 0.0
    %4569 = vmatprep.subr.mxu0 0.0
    %4570 = vmatpush1.msra.mxu0 0.0
    %4571 = vmatprep.subr.mxu0 0.0
    %4572 = vmatpush1.msra.mxu0 0.0
    %4573 = vmatprep.subr.mxu0 0.0
    %4574 = vmatpush1.msra.mxu0 0.0
    %4575 = vmatprep.subr.mxu0 0.0
    %4576 = vmatpush1.msra.mxu0 0.0
    %4577 = vmatprep.subr.mxu0 0.0
    %4578 = vmatpush1.msra.mxu0 0.0
    %4579 = vmatprep.subr.mxu0 0.0
    %4580 = vmatpush1.msra.mxu0 0.0
    %4581 = vmatprep.subr.mxu0 0.0
    %4582 = vmatpush1.msra.mxu0 0.0
    %4583 = vmatprep.subr.mxu0 0.0
    %v4584 = vand.u32 %v100, 4294901760
    %4585 = vmatpush1.msra.mxu0 %v4584
    %4586 = vmatprep.subr.mxu0 0.0
    %v4587 = vand.u32 %v99, 4294901760
    %4588 = vmatpush1.msra.mxu0 %v4587
    %4589 = vmatprep.subr.mxu0 0.0
    %v4590 = vand.u32 %v98, 4294901760
    %4591 = vmatpush1.msra.mxu0 %v4590
    %4592 = vmatprep.subr.mxu0 0.0
    %v4593 = vand.u32 %v97, 4294901760
    %4594 = vmatpush1.msra.mxu0 %v4593
    %4595 = vmatprep.subr.mxu0 0.0
    %v4596 = vand.u32 %v96, 4294901760
    %4597 = vmatpush1.msra.mxu0 %v4596
    %4598 = vmatprep.subr.mxu0 0.0
    %v4599 = vand.u32 %v95, 4294901760
    %4600 = vmatpush1.msra.mxu0 %v4599
    %4601 = vmatprep.subr.mxu0 0.0
    %v4602 = vand.u32 %v94, 4294901760
    %4603 = vmatpush1.msra.mxu0 %v4602
    %4604 = vmatprep.subr.mxu0 0.0
    %v4605 = vand.u32 %v93, 4294901760
    %4606 = vmatpush1.msra.mxu0 %v4605
    %4607 = vmatprep.subr.mxu0 0.0
    %4608 = vmatpush2.msra.mxu0 0.0
    %4609 = vmatprep.subr.mxu0 0.0
    %4610 = vmatpush2.msra.mxu0 0.0
    %4611 = vmatprep.subr.mxu0 0.0
    %4612 = vmatpush2.msra.mxu0 0.0
    %4613 = vmatprep.subr.mxu0 0.0
    %4614 = vmatpush2.msra.mxu0 0.0
    %4615 = vmatprep.subr.mxu0 0.0
    %4616 = vmatpush2.msra.mxu0 0.0
    %4617 = vmatprep.subr.mxu0 0.0
    %4618 = vmatpush2.msra.mxu0 0.0
    %4619 = vmatprep.subr.mxu0 0.0
    %4620 = vmatpush2.msra.mxu0 0.0
    %4621 = vmatprep.subr.mxu0 0.0
    %4622 = vmatpush2.msra.mxu0 0.0
    %4623 = vmatprep.subr.mxu0 0.0
    %4624 = vmatpush2.msra.mxu0 0.0
    %4625 = vmatprep.subr.mxu0 0.0
    %4626 = vmatpush2.msra.mxu0 0.0
    %4627 = vmatprep.subr.mxu0 0.0
    %4628 = vmatpush2.msra.mxu0 0.0
    %4629 = vmatprep.subr.mxu0 0.0
    %4630 = vmatpush2.msra.mxu0 0.0
    %4631 = vmatprep.subr.mxu0 0.0
    %4632 = vmatpush2.msra.mxu0 0.0
    %4633 = vmatprep.subr.mxu0 0.0
    %4634 = vmatpush2.msra.mxu0 0.0
    %4635 = vmatprep.subr.mxu0 0.0
    %4636 = vmatpush2.msra.mxu0 0.0
    %4637 = vmatprep.subr.mxu0 0.0
    %4638 = vmatpush2.msra.mxu0 0.0
    %4639 = vmatprep.mubr.f32.mxu0 0.0
    %v4640 = vand.u32 %v4257, 4294901760
    %v4641 = vsub.f32 %v4257, %v4640
    %v4642 = vand.u32 %v4641, 4294901760
    %4643 = vmatmul.mubr.f32.gmra.mxu0 %v4642
    %v4644 = vpop.f32.mrf.mxu0
    %v4645 = vadd.f32 %v4557, %v4644
    %v4646 = vpop.f32.mrf.mxu0
    %4647 = vmatprep.mubr.f32.mxu0 0.0
    %v4648 = vand.u32 %v4260, 4294901760
    %v4649 = vsub.f32 %v4260, %v4648
    %v4650 = vand.u32 %v4649, 4294901760
    %4651 = vmatmul.mubr.f32.gmra.mxu0 %v4650
    %v4652 = vpop.f32.mrf.mxu0
    %v4653 = vadd.f32 %v4564, %v4652
    %v4654 = vpop.f32.mrf.mxu0
    %4655 = vdwg.mxu0
    %4656 = vmatprep.subr.mxu0 0.0
    %4657 = vmatpush1.msra.mxu0 0.0
    %4658 = vmatprep.subr.mxu0 0.0
    %4659 = vmatpush1.msra.mxu0 0.0
    %4660 = vmatprep.subr.mxu0 0.0
    %4661 = vmatpush1.msra.mxu0 0.0
    %4662 = vmatprep.subr.mxu0 0.0
    %4663 = vmatpush1.msra.mxu0 0.0
    %4664 = vmatprep.subr.mxu0 0.0
    %4665 = vmatpush1.msra.mxu0 0.0
    %4666 = vmatprep.subr.mxu0 0.0
    %4667 = vmatpush1.msra.mxu0 0.0
    %4668 = vmatprep.subr.mxu0 0.0
    %4669 = vmatpush1.msra.mxu0 0.0
    %4670 = vmatprep.subr.mxu0 0.0
    %4671 = vmatpush1.msra.mxu0 0.0
    %4672 = vmatprep.subr.mxu0 0.0
    %v4673 = vand.u32 %v100, 4294901760
    %v4674 = vsub.f32 %v100, %v4673
    %v4675 = vand.u32 %v4674, 4294901760
    %4676 = vmatpush1.msra.mxu0 %v4675
    %4677 = vmatprep.subr.mxu0 0.0
    %v4678 = vand.u32 %v99, 4294901760
    %v4679 = vsub.f32 %v99, %v4678
    %v4680 = vand.u32 %v4679, 4294901760
    %4681 = vmatpush1.msra.mxu0 %v4680
    %4682 = vmatprep.subr.mxu0 0.0
    %v4683 = vand.u32 %v98, 4294901760
    %v4684 = vsub.f32 %v98, %v4683
    %v4685 = vand.u32 %v4684, 4294901760
    %4686 = vmatpush1.msra.mxu0 %v4685
    %4687 = vmatprep.subr.mxu0 0.0
    %v4688 = vand.u32 %v97, 4294901760
    %v4689 = vsub.f32 %v97, %v4688
    %v4690 = vand.u32 %v4689, 4294901760
    %4691 = vmatpush1.msra.mxu0 %v4690
    %4692 = vmatprep.subr.mxu0 0.0
    %v4693 = vand.u32 %v96, 4294901760
    %v4694 = vsub.f32 %v96, %v4693
    %v4695 = vand.u32 %v4694, 4294901760
    %4696 = vmatpush1.msra.mxu0 %v4695
    %4697 = vmatprep.subr.mxu0 0.0
    %v4698 = vand.u32 %v95, 4294901760
    %v4699 = vsub.f32 %v95, %v4698
    %v4700 = vand.u32 %v4699, 4294901760
    %4701 = vmatpush1.msra.mxu0 %v4700
    %4702 = vmatprep.subr.mxu0 0.0
    %v4703 = vand.u32 %v94, 4294901760
    %v4704 = vsub.f32 %v94, %v4703
    %v4705 = vand.u32 %v4704, 4294901760
    %4706 = vmatpush1.msra.mxu0 %v4705
    %4707 = vmatprep.subr.mxu0 0.0
    %v4708 = vand.u32 %v93, 4294901760
    %v4709 = vsub.f32 %v93, %v4708
    %v4710 = vand.u32 %v4709, 4294901760
    %4711 = vmatpush1.msra.mxu0 %v4710
    %4712 = vmatprep.subr.mxu0 0.0
    %4713 = vmatpush2.msra.mxu0 0.0
    %4714 = vmatprep.subr.mxu0 0.0
    %4715 = vmatpush2.msra.mxu0 0.0
    %4716 = vmatprep.subr.mxu0 0.0
    %4717 = vmatpush2.msra.mxu0 0.0
    %4718 = vmatprep.subr.mxu0 0.0
    %4719 = vmatpush2.msra.mxu0 0.0
    %4720 = vmatprep.subr.mxu0 0.0
    %4721 = vmatpush2.msra.mxu0 0.0
    %4722 = vmatprep.subr.mxu0 0.0
    %4723 = vmatpush2.msra.mxu0 0.0
    %4724 = vmatprep.subr.mxu0 0.0
    %4725 = vmatpush2.msra.mxu0 0.0
    %4726 = vmatprep.subr.mxu0 0.0
    %4727 = vmatpush2.msra.mxu0 0.0
    %4728 = vmatprep.subr.mxu0 0.0
    %4729 = vmatpush2.msra.mxu0 0.0
    %4730 = vmatprep.subr.mxu0 0.0
    %4731 = vmatpush2.msra.mxu0 0.0
    %4732 = vmatprep.subr.mxu0 0.0
    %4733 = vmatpush2.msra.mxu0 0.0
    %4734 = vmatprep.subr.mxu0 0.0
    %4735 = vmatpush2.msra.mxu0 0.0
    %4736 = vmatprep.subr.mxu0 0.0
    %4737 = vmatpush2.msra.mxu0 0.0
    %4738 = vmatprep.subr.mxu0 0.0
    %4739 = vmatpush2.msra.mxu0 0.0
    %4740 = vmatprep.subr.mxu0 0.0
    %4741 = vmatpush2.msra.mxu0 0.0
    %4742 = vmatprep.subr.mxu0 0.0
    %4743 = vmatpush2.msra.mxu0 0.0
    %4744 = vmatprep.mubr.f32.mxu0 0.0
    %v4745 = vand.u32 %v4257, 4294901760
    %4746 = vmatmul.mubr.f32.gmra.mxu0 %v4745
    %v4747 = vpop.f32.mrf.mxu0
    %v4748 = vadd.f32 %v4645, %v4747
    %v4749 = vpop.f32.mrf.mxu0
    %4750 = vmatprep.mubr.f32.mxu0 0.0
    %v4751 = vand.u32 %v4260, 4294901760
    %4752 = vmatmul.mubr.f32.gmra.mxu0 %v4751
    %v4753 = vpop.f32.mrf.mxu0
    %v4754 = vadd.f32 %v4653, %v4753
    %v4755 = vpop.f32.mrf.mxu0
    %4756 = vdwg.mxu0
    %4757 = vmatprep.subr.mxu0 0.0
    %4758 = vmatpush1.msra.mxu0 0.0
    %4759 = vmatprep.subr.mxu0 0.0
    %4760 = vmatpush1.msra.mxu0 0.0
    %4761 = vmatprep.subr.mxu0 0.0
    %4762 = vmatpush1.msra.mxu0 0.0
    %4763 = vmatprep.subr.mxu0 0.0
    %4764 = vmatpush1.msra.mxu0 0.0
    %4765 = vmatprep.subr.mxu0 0.0
    %4766 = vmatpush1.msra.mxu0 0.0
    %4767 = vmatprep.subr.mxu0 0.0
    %4768 = vmatpush1.msra.mxu0 0.0
    %4769 = vmatprep.subr.mxu0 0.0
    %4770 = vmatpush1.msra.mxu0 0.0
    %4771 = vmatprep.subr.mxu0 0.0
    %4772 = vmatpush1.msra.mxu0 0.0
    %4773 = vmatprep.subr.mxu0 0.0
    %v4774 = vand.u32 %v100, 4294901760
    %4775 = vmatpush1.msra.mxu0 %v4774
    %4776 = vmatprep.subr.mxu0 0.0
    %v4777 = vand.u32 %v99, 4294901760
    %4778 = vmatpush1.msra.mxu0 %v4777
    %4779 = vmatprep.subr.mxu0 0.0
    %v4780 = vand.u32 %v98, 4294901760
    %4781 = vmatpush1.msra.mxu0 %v4780
    %4782 = vmatprep.subr.mxu0 0.0
    %v4783 = vand.u32 %v97, 4294901760
    %4784 = vmatpush1.msra.mxu0 %v4783
    %4785 = vmatprep.subr.mxu0 0.0
    %v4786 = vand.u32 %v96, 4294901760
    %4787 = vmatpush1.msra.mxu0 %v4786
    %4788 = vmatprep.subr.mxu0 0.0
    %v4789 = vand.u32 %v95, 4294901760
    %4790 = vmatpush1.msra.mxu0 %v4789
    %4791 = vmatprep.subr.mxu0 0.0
    %v4792 = vand.u32 %v94, 4294901760
    %4793 = vmatpush1.msra.mxu0 %v4792
    %4794 = vmatprep.subr.mxu0 0.0
    %v4795 = vand.u32 %v93, 4294901760
    %4796 = vmatpush1.msra.mxu0 %v4795
    %4797 = vmatprep.subr.mxu0 0.0
    %4798 = vmatpush2.msra.mxu0 0.0
    %4799 = vmatprep.subr.mxu0 0.0
    %4800 = vmatpush2.msra.mxu0 0.0
    %4801 = vmatprep.subr.mxu0 0.0
    %4802 = vmatpush2.msra.mxu0 0.0
    %4803 = vmatprep.subr.mxu0 0.0
    %4804 = vmatpush2.msra.mxu0 0.0
    %4805 = vmatprep.subr.mxu0 0.0
    %4806 = vmatpush2.msra.mxu0 0.0
    %4807 = vmatprep.subr.mxu0 0.0
    %4808 = vmatpush2.msra.mxu0 0.0
    %4809 = vmatprep.subr.mxu0 0.0
    %4810 = vmatpush2.msra.mxu0 0.0
    %4811 = vmatprep.subr.mxu0 0.0
    %4812 = vmatpush2.msra.mxu0 0.0
    %4813 = vmatprep.subr.mxu0 0.0
    %4814 = vmatpush2.msra.mxu0 0.0
    %4815 = vmatprep.subr.mxu0 0.0
    %4816 = vmatpush2.msra.mxu0 0.0
    %4817 = vmatprep.subr.mxu0 0.0
    %4818 = vmatpush2.msra.mxu0 0.0
    %4819 = vmatprep.subr.mxu0 0.0
    %4820 = vmatpush2.msra.mxu0 0.0
    %4821 = vmatprep.subr.mxu0 0.0
    %4822 = vmatpush2.msra.mxu0 0.0
    %4823 = vmatprep.subr.mxu0 0.0
    %4824 = vmatpush2.msra.mxu0 0.0
    %4825 = vmatprep.subr.mxu0 0.0
    %4826 = vmatpush2.msra.mxu0 0.0
    %4827 = vmatprep.subr.mxu0 0.0
    %4828 = vmatpush2.msra.mxu0 0.0
    %4829 = vmatprep.mubr.f32.mxu0 0.0
    %v4830 = vand.u32 %v4257, 4294901760
    %4831 = vmatmul.mubr.f32.gmra.mxu0 %v4830
    %v4832 = vpop.f32.mrf.mxu0
    %v4833 = vadd.f32 %v4748, %v4832
    %v4834 = vpop.f32.mrf.mxu0
    %4835 = vmatprep.mubr.f32.mxu0 0.0
    %v4836 = vand.u32 %v4260, 4294901760
    %4837 = vmatmul.mubr.f32.gmra.mxu0 %v4836
    %v4838 = vpop.f32.mrf.mxu0
    %v4839 = vadd.f32 %v4754, %v4838
    %v4840 = vpop.f32.mrf.mxu0
    %4841 = vdwg.mxu0
    %v4842 = vadd.f32 %v3709, %v4833
    %v4843 = vadd.f32 %v3710, %v4839
    %v4844 = vsel %vm106, %v4842, 0.0
    %4845 = vadd.xlane.f32.xlu0 %v4844
    %v4846 = vpop.xlane.xlu0 %4845
    %v4847 = vsel %vm106, %v4843, 0.0
    %4848 = vadd.xlane.f32.xlu0 %v4847
    %v4849 = vpop.xlane.xlu0 %4848
    %v4850 = vmul.f32 %v4846, %v3678
    %v4851 = vmul.f32 %v4849, %v3678
    %v4852 = vsub.f32 %v4842, %v4850
    %v4853 = vsub.f32 %v4843, %v4851
    %v4854 = vmul.f32 %v4852, %v4852
    %v4855 = vmul.f32 %v4853, %v4853
    %v4856 = vsel %vm106, %v4854, 0.0
    %4857 = vadd.xlane.f32.xlu0 %v4856
    %v4858 = vpop.xlane.xlu0 %4857
    %v4859 = vsel %vm106, %v4855, 0.0
    %4860 = vadd.xlane.f32.xlu0 %v4859
    %v4861 = vpop.xlane.xlu0 %4860
    %v4862 = vmul.f32 %v4858, %v3678
    %v4863 = vmul.f32 %v4861, %v3678
    %v4864 = vadd.f32 %v4862, 1e-05
    %v4865 = vadd.f32 %v4863, 1e-05
    %v4866 = vrsqrt.pop %v4864
    %v4867 = vrsqrt.pop %v4865
    %v4868 = vmul.f32 %v4852, %v4866
    %v4869 = vmul.f32 %v4853, %v4867
    %v4870 = vlaneseq
    %v4871 = vshrl.u32 %v4870, 7
    %v4872 = vsub.s32 6, %v4871
    %v4873 = vrot.slane %v101, %v4872
    %v4874 = vmul.f32 %v4868, %v4873
    %v4875 = vmul.f32 %v4869, %v4873
    %v4876 = vlaneseq
    %v4877 = vshrl.u32 %v4876, 7
    %v4878 = vsub.s32 7, %v4877
    %v4879 = vrot.slane %v101, %v4878
    %v4880 = vadd.f32 %v4874, %v4879
    %v4881 = vadd.f32 %v4875, %v4879
    %4882 = vst.msk [vmem:[#allocation8] sm:$0xff] %vm106, %v4880
    %4883 = vst.msk [vmem:[#allocation8 + $0x8] sm:$0xff] %vm106, %v4881
    // Predicated region
    $region46: #{transformer_encoder_forward.1} parent=1 // pred_check
      _
    $region47: #{transformer_encoder_forward.1} parent=1 // pred_check_branch
      %4885 = sbr.rel (0) target = $region49
    $region48: #{transformer_encoder_forward.1} parent=1 // pred_region
      %s4887 = ssub.s32 256, 256
      %4888 = vsyncadd [#allocation4], %s4887
      %s4889 = sshll.u32 [#allocation8], 4
      %s4890 = int_to_ptr.vmem [resolvable:$true] %s4889
      %4895 = dma.vmem_to_hbm [thread:$0]  %s4890, 256, %s7, [#allocation4], 128, 128, 8
    $region49: #{transformer_encoder_forward.1} parent=1 // pred_fallthru
      _
    // Predicated region
    $region50: #{transformer_encoder_forward.1} parent=1 // pred_check
      _
    $region51: #{transformer_encoder_forward.1} parent=1 // pred_check_branch
      %4897 = sbr.rel (0) target = $region53
    $region52: #{transformer_encoder_forward.1} parent=1 // pred_region
      %4898 = dma.done [#allocation4], 256
    $region53: #{transformer_encoder_forward.1} parent=1 // pred_fallthru
      _
    %4899 = vsyncpa [#allocation3], 1
    %4900 = vsyncpa [#allocation6], 1
    %4901 = vsyncpa [#allocation4], 1

</llo_original>
